<compile_context>
chip_gen: v7x
topology: tpu7x:2x2x1
jax: 0.10.0
libtpu: 0.0.40
codegen_flags: <defaults>
</compile_context>

<pallas_src>
import jax
import jax.numpy as jnp
from jax.experimental import pallas as pl
from jax.experimental.pallas import tpu as pltpu


def bottleneck_kernel(x_ref, w1_ref, dwk_ref, bnp_ref, w3_ref, bn3_ref,
                      out_ref, cat_ref):
    NB, H, W, Cin = x_ref.shape
    P = w1_ref.shape[1]                      # planes
    M = NB * H * W

    x = x_ref[...]                           # (NB, H, W, Cin) f32
    dwk = dwk_ref[...]                       # (12, P)  f32 depthwise taps
    bnp = bnp_ref[...]                       # (10, P)  f32 bn1 + 4x branch bn
    bn3 = bn3_ref[...]                       # (2, 4P)  f32 bn3

    # ---- conv1 (1x1) + bn1 + relu : bf16 MXU matmul, f32 accumulation -------
    x2d = x.reshape(M, Cin)
    t = jnp.dot(x2d.astype(jnp.bfloat16), w1_ref[...],
                preferred_element_type=jnp.float32)
    t = jnp.maximum(t * bnp[0] + bnp[1], 0.0)
    o = t.reshape(NB, H, W, P)               # (NB, H, W, P) f32

    # shifted copies (zero padded per image) for the 3-tap depthwise convs
    zW = jnp.zeros((NB, H, 1, P), jnp.float32)
    zH = jnp.zeros((NB, 1, W, P), jnp.float32)
    x_wm = jnp.concatenate([zW, o[:, :, :-1, :]], axis=2)   # o[., h, w-1, .]
    x_wp = jnp.concatenate([o[:, :, 1:, :], zW], axis=2)    # o[., h, w+1, .]
    x_hm = jnp.concatenate([zH, o[:, :-1, :, :]], axis=1)   # o[., h-1, w, .]
    x_hp = jnp.concatenate([o[:, 1:, :, :], zH], axis=1)    # o[., h+1, w, .]

    def branch(xm, xp, kbase, bnbase, col):
        # depthwise 3-tap + folded BN + relu (f32, VPU), written straight into
        # its lane-contiguous quarter of the bf16 concat scratch.
        y = xm * dwk[kbase] + o * dwk[kbase + 1] + xp * dwk[kbase + 2]
        y = jnp.maximum(y * bnp[bnbase] + bnp[bnbase + 1], 0.0)
        cat_ref[:, col * P:(col + 1) * P] = y.reshape(M, P).astype(jnp.bfloat16)

    branch(x_wm, x_wp, 0, 2, 0)              # conv2_h  + bn2_h  + relu
    branch(x_wm, x_wp, 3, 4, 1)              # conv2_hh + bn2_hh + relu
    branch(x_hm, x_hp, 6, 6, 2)              # conv2_v  + bn2_v  + relu
    branch(x_hm, x_hp, 9, 8, 3)              # conv2_vv + bn2_vv + relu

    # ---- relu(cat) + conv3 (1x1) + bn3 + residual + relu --------------------
    # relu(cat) == cat because every branch is already >= 0.  Single matmul with
    # contraction K = 4P keeps the MXU full (vs. four K=P dots).
    y = jnp.dot(cat_ref[...], w3_ref[...], preferred_element_type=jnp.float32)
    y = y * bn3[0] + bn3[1]
    y = y.reshape(NB, H, W, Cin) + x         # residual (Cin == 4*P, stride=1)
    out_ref[...] = jnp.maximum(y, 0.0)


def bottleneck_friendly4(x_nhwc, params, *, nb=None):
    w1, dwk, bnp, w3, bn3 = params
    N, H, W, Cin = x_nhwc.shape
    P = w1.shape[1]
    assert Cin == 4 * P, "residual path requires inplanes == planes * expansion"
    if nb is None:
        nb = N
    assert N % nb == 0, "batch must be divisible by the per-step batch block"

    def full_spec(arr):
        zeros = (0,) * arr.ndim
        return pl.BlockSpec(arr.shape, lambda n, _z=zeros: _z)

    in_specs = [pl.BlockSpec((nb, H, W, Cin), lambda n: (n, 0, 0, 0))]
    in_specs += [full_spec(a) for a in (w1, dwk, bnp, w3, bn3)]

    return pl.pallas_call(
        bottleneck_kernel,
        out_shape=jax.ShapeDtypeStruct((N, H, W, Cin), jnp.float32),
        grid=(N // nb,),
        in_specs=in_specs,
        out_specs=pl.BlockSpec((nb, H, W, Cin), lambda n: (n, 0, 0, 0)),
        scratch_shapes=[pltpu.VMEM((nb * H * W, 4 * P), jnp.bfloat16)],
        compiler_params=pltpu.CompilerParams(
            dimension_semantics=("parallel",),
            vmem_limit_bytes=32 * 1024 * 1024),
    )(x_nhwc, w1, dwk, bnp, w3, bn3)


# ---------------------------------------------------------------------------
# deterministic parameter construction (shapes follow the PyTorch __init__),
# packed into 5 arrays: w1 (Cin,P) bf16, dwk (12,P), bnp (10,P), w3 (4P,4P)
# bf16, bn3 (2,4P).
# ---------------------------------------------------------------------------
def make_params(key, inplanes, planes):
    P, Cin, Cout = planes, inplanes, 4 * planes
    ks = jax.random.split(key, 30)
    it = iter(range(30))

    def bn_fold(C):
        eps = 1e-5
        gamma = 1.0 + 0.1 * jax.random.normal(ks[next(it)], (C,), jnp.float32)
        beta = 0.1 * jax.random.normal(ks[next(it)], (C,), jnp.float32)
        mean = 0.1 * jax.random.normal(ks[next(it)], (C,), jnp.float32)
        var = jax.nn.softplus(jax.random.normal(ks[next(it)], (C,), jnp.float32)) + 0.5
        scale = gamma / jnp.sqrt(var + eps)
        shift = beta - mean * scale
        return scale, shift

    # conv1: torch (P, Cin, 1, 1) -> (Cin, P)
    w1 = jax.random.normal(ks[next(it)], (Cin, P), jnp.float32) / jnp.sqrt(Cin)
    s1, b1 = bn_fold(P)

    dwk, bns = [], [s1, b1]
    for _ in range(4):      # conv2_h, conv2_hh, conv2_v, conv2_vv (torch (P,1,1,3)/(P,1,3,1) -> (3,P))
        dwk.append(jax.random.normal(ks[next(it)], (3, P), jnp.float32) / jnp.sqrt(3.0))
        s, b = bn_fold(P)
        bns += [s, b]

    # conv3: torch (4P, 4P, 1, 1) -> (4P, 4P) as (in, out)
    w3 = jax.random.normal(ks[next(it)], (Cout, Cout), jnp.float32) / jnp.sqrt(Cout)
    s3, b3 = bn_fold(Cout)

    dwk = jnp.concatenate(dwk, axis=0)          # (12, P)
    bnp = jnp.stack(bns, axis=0)                # (10, P): s1,b1, sh,bh, shh,bhh, sv,bv, svv,bvv
    bn3 = jnp.stack([s3, b3], axis=0)           # (2, 4P)
    return (w1.astype(jnp.bfloat16), dwk, bnp, w3.astype(jnp.bfloat16), bn3)


# ---------------------------------------------------------------------------
# pure-JAX reference (NHWC).  mxu_bf16=True matches the kernel's MXU numerics
# (bf16 operands, f32 accumulation); mxu_bf16=False is a full-f32 reference.
# ---------------------------------------------------------------------------
def reference(x, params, *, mxu_bf16):
    w1, dwk, bnp, w3, bn3 = params
    w1f = w1.astype(jnp.float32)
    w3f = w3.astype(jnp.float32)
    hi = jax.lax.Precision.HIGHEST

    def mm(a, w):
        if mxu_bf16:
            return jnp.einsum('nhwc,co->nhwo', a.astype(jnp.bfloat16),
                              w.astype(jnp.bfloat16),
                              preferred_element_type=jnp.float32)
        return jnp.einsum('nhwc,co->nhwo', a, w, precision=hi)

    o = jnp.maximum(mm(x, w1f) * bnp[0] + bnp[1], 0.0)

    def branch(kbase, bnbase, axis):
        pad = [(0, 0)] * 4
        pad[axis] = (1, 1)
        xp = jnp.pad(o, pad)
        n = o.shape[axis]

        def take(off):
            idx = [slice(None)] * 4
            idx[axis] = slice(off, off + n)
            return xp[tuple(idx)]

        y = (take(0) * dwk[kbase] + take(1) * dwk[kbase + 1]
             + take(2) * dwk[kbase + 2])
        return jnp.maximum(y * bnp[bnbase] + bnp[bnbase + 1], 0.0)

    cat = jnp.concatenate([branch(0, 2, 2), branch(3, 4, 2),
                           branch(6, 6, 1), branch(9, 8, 1)], axis=-1)
    cat = jnp.maximum(cat, 0.0)
    y = mm(cat, w3f) * bn3[0] + bn3[1]
    return jnp.maximum(y + x, 0.0)


if __name__ == "__main__":
    key = jax.random.PRNGKey(0)
    k_x, k_p = jax.random.split(key)

    N, H, W = 4, 16, 16
    planes = 4
    inplanes = 4 * planes                    # 16, so the identity residual is valid

    # PyTorch-style NCHW input, transposed to NHWC for the kernel
    x_nchw = jax.random.normal(k_x, (N, inplanes, H, W), jnp.float32)
    x_nhwc = jnp.transpose(x_nchw, (0, 2, 3, 1))

    params = make_params(k_p, inplanes, planes)

    out = bottleneck_friendly4(x_nhwc, params, nb=2)   # 2 images per grid step
    out = jax.block_until_ready(out)
    assert out.shape == (N, H, W, inplanes)

    # matched-precision reference (bf16 matmul operands, f32 accumulation)
    ref_bf16 = jax.block_until_ready(reference(x_nhwc, params, mxu_bf16=True))
    assert jnp.allclose(out, ref_bf16, atol=1e-2, rtol=1e-2), (
        float(jnp.max(jnp.abs(out - ref_bf16))))

    # loose sanity check against a full-f32 HIGHEST-precision reference
    # (bf16 MXU operands trade a small amount of precision for ~2x MXU rate)
    ref_f32 = jax.block_until_ready(reference(x_nhwc, params, mxu_bf16=False))
    assert jnp.allclose(out, ref_f32, atol=0.25, rtol=0.25), (
        float(jnp.max(jnp.abs(out - ref_f32))))

    print("KERNEL_OK")
</pallas_src>

<mosaic_0001>
module attributes {stable_mosaic.version = 11 : i64} {
  func.func @bottleneck_kernel(%arg0: i32, %arg1: memref<2x16x16x16xf32, #tpu.memory_space<vmem>>, %arg2: memref<16x4xbf16, #tpu.memory_space<vmem>>, %arg3: memref<12x4xf32, #tpu.memory_space<vmem>>, %arg4: memref<10x4xf32, #tpu.memory_space<vmem>>, %arg5: memref<16x16xbf16, #tpu.memory_space<vmem>>, %arg6: memref<2x16xf32, #tpu.memory_space<vmem>>, %arg7: memref<2x16x16x16xf32, #tpu.memory_space<vmem>>, %arg8: memref<512x16xbf16, #tpu.memory_space<vmem>>) attributes {dimension_semantics = [#tpu.dimension_semantics<parallel>], iteration_bounds = array<i64: 2>, scalar_prefetch = 0 : i64, scratch_operands = 1 : i64, tpu.core_type = #tpu.core_type<tc>, window_params = [{transform_indices = @transform_0, window_bounds = array<i64: 2, 16, 16, 16>}, {pipeline_mode = #tpu.pipeline_mode<synchronous>, transform_indices = @transform_1, window_bounds = array<i64: 16, 4>}, {pipeline_mode = #tpu.pipeline_mode<synchronous>, transform_indices = @transform_2, window_bounds = array<i64: 12, 4>}, {pipeline_mode = #tpu.pipeline_mode<synchronous>, transform_indices = @transform_3, window_bounds = array<i64: 10, 4>}, {pipeline_mode = #tpu.pipeline_mode<synchronous>, transform_indices = @transform_4, window_bounds = array<i64: 16, 16>}, {pipeline_mode = #tpu.pipeline_mode<synchronous>, transform_indices = @transform_5, window_bounds = array<i64: 2, 16>}, {transform_indices = @transform_6, window_bounds = array<i64: 2, 16, 16, 16>}]} {
    %c0 = arith.constant 0 : index
    %c0_0 = arith.constant 0 : index
    %c0_1 = arith.constant 0 : index
    %c0_2 = arith.constant 0 : index
    %0 = vector.load %arg1[%c0, %c0_0, %c0_1, %c0_2] : memref<2x16x16x16xf32, #tpu.memory_space<vmem>>, vector<2x16x16x16xf32>
    %c0_3 = arith.constant 0 : index
    %c0_4 = arith.constant 0 : index
    %1 = vector.load %arg3[%c0_3, %c0_4] : memref<12x4xf32, #tpu.memory_space<vmem>>, vector<12x4xf32>
    %c0_5 = arith.constant 0 : index
    %c0_6 = arith.constant 0 : index
    %2 = vector.load %arg4[%c0_5, %c0_6] : memref<10x4xf32, #tpu.memory_space<vmem>>, vector<10x4xf32>
    %c0_7 = arith.constant 0 : index
    %c0_8 = arith.constant 0 : index
    %3 = vector.load %arg6[%c0_7, %c0_8] : memref<2x16xf32, #tpu.memory_space<vmem>>, vector<2x16xf32>
    %4 = vector.shape_cast %0 : vector<2x16x16x16xf32> to vector<512x16xf32>
    %5 = arith.truncf %4 : vector<512x16xf32> to vector<512x16xbf16>
    %c0_9 = arith.constant 0 : index
    %c0_10 = arith.constant 0 : index
    %6 = vector.load %arg2[%c0_9, %c0_10] : memref<16x4xbf16, #tpu.memory_space<vmem>>, vector<16x4xbf16>
    %cst = arith.constant dense<0.000000e+00> : vector<512x4xf32>
    %7 = tpu.matmul %5, %6, %cst {dimension_numbers = #tpu.dot_dimension_numbers<[1], [0], [0], [1], [0, 0, 1, 1], [], []>} : vector<512x16xbf16>, vector<16x4xbf16>, vector<512x4xf32> -> vector<512x4xf32>
    %8 = vector.extract_strided_slice %2 {offsets = [0, 0], sizes = [1, 4], strides = [1, 1]} : vector<10x4xf32> to vector<1x4xf32>
    %9 = vector.shape_cast %8 : vector<1x4xf32> to vector<4xf32>
    %10 = vector.shape_cast %9 : vector<4xf32> to vector<1x4xf32>
    %11 = vector.broadcast %10 : vector<1x4xf32> to vector<512x4xf32>
    %12 = arith.mulf %7, %11 : vector<512x4xf32>
    %13 = vector.extract_strided_slice %2 {offsets = [1, 0], sizes = [1, 4], strides = [1, 1]} : vector<10x4xf32> to vector<1x4xf32>
    %14 = vector.shape_cast %13 : vector<1x4xf32> to vector<4xf32>
    %15 = vector.shape_cast %14 : vector<4xf32> to vector<1x4xf32>
    %16 = vector.broadcast %15 : vector<1x4xf32> to vector<512x4xf32>
    %17 = arith.addf %12, %16 : vector<512x4xf32>
    %cst_11 = arith.constant 0.000000e+00 : f32
    %18 = vector.broadcast %cst_11 : f32 to vector<512x4xf32>
    %19 = arith.maximumf %17, %18 : vector<512x4xf32>
    %20 = vector.shape_cast %19 : vector<512x4xf32> to vector<2x16x16x4xf32>
    %cst_12 = arith.constant 0.000000e+00 : f32
    %21 = vector.broadcast %cst_12 : f32 to vector<2x16x1x4xf32>
    %cst_13 = arith.constant 0.000000e+00 : f32
    %22 = vector.broadcast %cst_13 : f32 to vector<2x1x16x4xf32>
    %23 = vector.extract_strided_slice %20 {offsets = [0, 0, 0, 0], sizes = [2, 16, 15, 4], strides = [1, 1, 1, 1]} : vector<2x16x16x4xf32> to vector<2x16x15x4xf32>
    %24 = tpu.concatenate %21, %23 in 2 : vector<2x16x1x4xf32>, vector<2x16x15x4xf32> -> vector<2x16x16x4xf32>
    %25 = vector.extract_strided_slice %20 {offsets = [0, 0, 1, 0], sizes = [2, 16, 15, 4], strides = [1, 1, 1, 1]} : vector<2x16x16x4xf32> to vector<2x16x15x4xf32>
    %26 = tpu.concatenate %25, %21 in 2 : vector<2x16x15x4xf32>, vector<2x16x1x4xf32> -> vector<2x16x16x4xf32>
    %27 = vector.extract_strided_slice %20 {offsets = [0, 0, 0, 0], sizes = [2, 15, 16, 4], strides = [1, 1, 1, 1]} : vector<2x16x16x4xf32> to vector<2x15x16x4xf32>
    %28 = tpu.concatenate %22, %27 in 1 : vector<2x1x16x4xf32>, vector<2x15x16x4xf32> -> vector<2x16x16x4xf32>
    %29 = vector.extract_strided_slice %20 {offsets = [0, 1, 0, 0], sizes = [2, 15, 16, 4], strides = [1, 1, 1, 1]} : vector<2x16x16x4xf32> to vector<2x15x16x4xf32>
    %30 = tpu.concatenate %29, %22 in 1 : vector<2x15x16x4xf32>, vector<2x1x16x4xf32> -> vector<2x16x16x4xf32>
    %31 = vector.extract_strided_slice %1 {offsets = [0, 0], sizes = [1, 4], strides = [1, 1]} : vector<12x4xf32> to vector<1x4xf32>
    %32 = vector.shape_cast %31 : vector<1x4xf32> to vector<4xf32>
    %33 = vector.shape_cast %32 : vector<4xf32> to vector<1x1x1x4xf32>
    %34 = vector.broadcast %33 : vector<1x1x1x4xf32> to vector<2x16x16x4xf32>
    %35 = arith.mulf %24, %34 : vector<2x16x16x4xf32>
    %36 = vector.extract_strided_slice %1 {offsets = [1, 0], sizes = [1, 4], strides = [1, 1]} : vector<12x4xf32> to vector<1x4xf32>
    %37 = vector.shape_cast %36 : vector<1x4xf32> to vector<4xf32>
    %38 = vector.shape_cast %37 : vector<4xf32> to vector<1x1x1x4xf32>
    %39 = vector.broadcast %38 : vector<1x1x1x4xf32> to vector<2x16x16x4xf32>
    %40 = arith.mulf %20, %39 : vector<2x16x16x4xf32>
    %41 = arith.addf %35, %40 : vector<2x16x16x4xf32>
    %42 = vector.extract_strided_slice %1 {offsets = [2, 0], sizes = [1, 4], strides = [1, 1]} : vector<12x4xf32> to vector<1x4xf32>
    %43 = vector.shape_cast %42 : vector<1x4xf32> to vector<4xf32>
    %44 = vector.shape_cast %43 : vector<4xf32> to vector<1x1x1x4xf32>
    %45 = vector.broadcast %44 : vector<1x1x1x4xf32> to vector<2x16x16x4xf32>
    %46 = arith.mulf %26, %45 : vector<2x16x16x4xf32>
    %47 = arith.addf %41, %46 : vector<2x16x16x4xf32>
    %48 = vector.extract_strided_slice %2 {offsets = [2, 0], sizes = [1, 4], strides = [1, 1]} : vector<10x4xf32> to vector<1x4xf32>
    %49 = vector.shape_cast %48 : vector<1x4xf32> to vector<4xf32>
    %50 = vector.shape_cast %49 : vector<4xf32> to vector<1x1x1x4xf32>
    %51 = vector.broadcast %50 : vector<1x1x1x4xf32> to vector<2x16x16x4xf32>
    %52 = arith.mulf %47, %51 : vector<2x16x16x4xf32>
    %53 = vector.extract_strided_slice %2 {offsets = [3, 0], sizes = [1, 4], strides = [1, 1]} : vector<10x4xf32> to vector<1x4xf32>
    %54 = vector.shape_cast %53 : vector<1x4xf32> to vector<4xf32>
    %55 = vector.shape_cast %54 : vector<4xf32> to vector<1x1x1x4xf32>
    %56 = vector.broadcast %55 : vector<1x1x1x4xf32> to vector<2x16x16x4xf32>
    %57 = arith.addf %52, %56 : vector<2x16x16x4xf32>
    %cst_14 = arith.constant 0.000000e+00 : f32
    %58 = vector.broadcast %cst_14 : f32 to vector<2x16x16x4xf32>
    %59 = arith.maximumf %57, %58 : vector<2x16x16x4xf32>
    %60 = vector.shape_cast %59 : vector<2x16x16x4xf32> to vector<512x4xf32>
    %61 = arith.truncf %60 : vector<512x4xf32> to vector<512x4xbf16>
    %c0_15 = arith.constant 0 : index
    %c0_16 = arith.constant 0 : index
    %62 = vector.load %arg8[%c0_15, %c0_16] : memref<512x16xbf16, #tpu.memory_space<vmem>>, vector<512x4xbf16>
    tpu.vector_store %arg8[%c0_15, %c0_16], %61 {strides = array<i32>} : memref<512x16xbf16, #tpu.memory_space<vmem>>, vector<512x4xbf16>,
    %63 = vector.extract_strided_slice %1 {offsets = [3, 0], sizes = [1, 4], strides = [1, 1]} : vector<12x4xf32> to vector<1x4xf32>
    %64 = vector.shape_cast %63 : vector<1x4xf32> to vector<4xf32>
    %65 = vector.shape_cast %64 : vector<4xf32> to vector<1x1x1x4xf32>
    %66 = vector.broadcast %65 : vector<1x1x1x4xf32> to vector<2x16x16x4xf32>
    %67 = arith.mulf %24, %66 : vector<2x16x16x4xf32>
    %68 = vector.extract_strided_slice %1 {offsets = [4, 0], sizes = [1, 4], strides = [1, 1]} : vector<12x4xf32> to vector<1x4xf32>
    %69 = vector.shape_cast %68 : vector<1x4xf32> to vector<4xf32>
    %70 = vector.shape_cast %69 : vector<4xf32> to vector<1x1x1x4xf32>
    %71 = vector.broadcast %70 : vector<1x1x1x4xf32> to vector<2x16x16x4xf32>
    %72 = arith.mulf %20, %71 : vector<2x16x16x4xf32>
    %73 = arith.addf %67, %72 : vector<2x16x16x4xf32>
    %74 = vector.extract_strided_slice %1 {offsets = [5, 0], sizes = [1, 4], strides = [1, 1]} : vector<12x4xf32> to vector<1x4xf32>
    %75 = vector.shape_cast %74 : vector<1x4xf32> to vector<4xf32>
    %76 = vector.shape_cast %75 : vector<4xf32> to vector<1x1x1x4xf32>
    %77 = vector.broadcast %76 : vector<1x1x1x4xf32> to vector<2x16x16x4xf32>
    %78 = arith.mulf %26, %77 : vector<2x16x16x4xf32>
    %79 = arith.addf %73, %78 : vector<2x16x16x4xf32>
    %80 = vector.extract_strided_slice %2 {offsets = [4, 0], sizes = [1, 4], strides = [1, 1]} : vector<10x4xf32> to vector<1x4xf32>
    %81 = vector.shape_cast %80 : vector<1x4xf32> to vector<4xf32>
    %82 = vector.shape_cast %81 : vector<4xf32> to vector<1x1x1x4xf32>
    %83 = vector.broadcast %82 : vector<1x1x1x4xf32> to vector<2x16x16x4xf32>
    %84 = arith.mulf %79, %83 : vector<2x16x16x4xf32>
    %85 = vector.extract_strided_slice %2 {offsets = [5, 0], sizes = [1, 4], strides = [1, 1]} : vector<10x4xf32> to vector<1x4xf32>
    %86 = vector.shape_cast %85 : vector<1x4xf32> to vector<4xf32>
    %87 = vector.shape_cast %86 : vector<4xf32> to vector<1x1x1x4xf32>
    %88 = vector.broadcast %87 : vector<1x1x1x4xf32> to vector<2x16x16x4xf32>
    %89 = arith.addf %84, %88 : vector<2x16x16x4xf32>
    %cst_17 = arith.constant 0.000000e+00 : f32
    %90 = vector.broadcast %cst_17 : f32 to vector<2x16x16x4xf32>
    %91 = arith.maximumf %89, %90 : vector<2x16x16x4xf32>
    %92 = vector.shape_cast %91 : vector<2x16x16x4xf32> to vector<512x4xf32>
    %93 = arith.truncf %92 : vector<512x4xf32> to vector<512x4xbf16>
    %c0_18 = arith.constant 0 : index
    %c4 = arith.constant 4 : index
    %94 = vector.load %arg8[%c0_18, %c4] : memref<512x16xbf16, #tpu.memory_space<vmem>>, vector<512x4xbf16>
    tpu.vector_store %arg8[%c0_18, %c4], %93 {strides = array<i32>} : memref<512x16xbf16, #tpu.memory_space<vmem>>, vector<512x4xbf16>,
    %95 = vector.extract_strided_slice %1 {offsets = [6, 0], sizes = [1, 4], strides = [1, 1]} : vector<12x4xf32> to vector<1x4xf32>
    %96 = vector.shape_cast %95 : vector<1x4xf32> to vector<4xf32>
    %97 = vector.shape_cast %96 : vector<4xf32> to vector<1x1x1x4xf32>
    %98 = vector.broadcast %97 : vector<1x1x1x4xf32> to vector<2x16x16x4xf32>
    %99 = arith.mulf %28, %98 : vector<2x16x16x4xf32>
    %100 = vector.extract_strided_slice %1 {offsets = [7, 0], sizes = [1, 4], strides = [1, 1]} : vector<12x4xf32> to vector<1x4xf32>
    %101 = vector.shape_cast %100 : vector<1x4xf32> to vector<4xf32>
    %102 = vector.shape_cast %101 : vector<4xf32> to vector<1x1x1x4xf32>
    %103 = vector.broadcast %102 : vector<1x1x1x4xf32> to vector<2x16x16x4xf32>
    %104 = arith.mulf %20, %103 : vector<2x16x16x4xf32>
    %105 = arith.addf %99, %104 : vector<2x16x16x4xf32>
    %106 = vector.extract_strided_slice %1 {offsets = [8, 0], sizes = [1, 4], strides = [1, 1]} : vector<12x4xf32> to vector<1x4xf32>
    %107 = vector.shape_cast %106 : vector<1x4xf32> to vector<4xf32>
    %108 = vector.shape_cast %107 : vector<4xf32> to vector<1x1x1x4xf32>
    %109 = vector.broadcast %108 : vector<1x1x1x4xf32> to vector<2x16x16x4xf32>
    %110 = arith.mulf %30, %109 : vector<2x16x16x4xf32>
    %111 = arith.addf %105, %110 : vector<2x16x16x4xf32>
    %112 = vector.extract_strided_slice %2 {offsets = [6, 0], sizes = [1, 4], strides = [1, 1]} : vector<10x4xf32> to vector<1x4xf32>
    %113 = vector.shape_cast %112 : vector<1x4xf32> to vector<4xf32>
    %114 = vector.shape_cast %113 : vector<4xf32> to vector<1x1x1x4xf32>
    %115 = vector.broadcast %114 : vector<1x1x1x4xf32> to vector<2x16x16x4xf32>
    %116 = arith.mulf %111, %115 : vector<2x16x16x4xf32>
    %117 = vector.extract_strided_slice %2 {offsets = [7, 0], sizes = [1, 4], strides = [1, 1]} : vector<10x4xf32> to vector<1x4xf32>
    %118 = vector.shape_cast %117 : vector<1x4xf32> to vector<4xf32>
    %119 = vector.shape_cast %118 : vector<4xf32> to vector<1x1x1x4xf32>
    %120 = vector.broadcast %119 : vector<1x1x1x4xf32> to vector<2x16x16x4xf32>
    %121 = arith.addf %116, %120 : vector<2x16x16x4xf32>
    %cst_19 = arith.constant 0.000000e+00 : f32
    %122 = vector.broadcast %cst_19 : f32 to vector<2x16x16x4xf32>
    %123 = arith.maximumf %121, %122 : vector<2x16x16x4xf32>
    %124 = vector.shape_cast %123 : vector<2x16x16x4xf32> to vector<512x4xf32>
    %125 = arith.truncf %124 : vector<512x4xf32> to vector<512x4xbf16>
    %c0_20 = arith.constant 0 : index
    %c8 = arith.constant 8 : index
    %126 = vector.load %arg8[%c0_20, %c8] : memref<512x16xbf16, #tpu.memory_space<vmem>>, vector<512x4xbf16>
    tpu.vector_store %arg8[%c0_20, %c8], %125 {strides = array<i32>} : memref<512x16xbf16, #tpu.memory_space<vmem>>, vector<512x4xbf16>,
    %127 = vector.extract_strided_slice %1 {offsets = [9, 0], sizes = [1, 4], strides = [1, 1]} : vector<12x4xf32> to vector<1x4xf32>
    %128 = vector.shape_cast %127 : vector<1x4xf32> to vector<4xf32>
    %129 = vector.shape_cast %128 : vector<4xf32> to vector<1x1x1x4xf32>
    %130 = vector.broadcast %129 : vector<1x1x1x4xf32> to vector<2x16x16x4xf32>
    %131 = arith.mulf %28, %130 : vector<2x16x16x4xf32>
    %132 = vector.extract_strided_slice %1 {offsets = [10, 0], sizes = [1, 4], strides = [1, 1]} : vector<12x4xf32> to vector<1x4xf32>
    %133 = vector.shape_cast %132 : vector<1x4xf32> to vector<4xf32>
    %134 = vector.shape_cast %133 : vector<4xf32> to vector<1x1x1x4xf32>
    %135 = vector.broadcast %134 : vector<1x1x1x4xf32> to vector<2x16x16x4xf32>
    %136 = arith.mulf %20, %135 : vector<2x16x16x4xf32>
    %137 = arith.addf %131, %136 : vector<2x16x16x4xf32>
    %138 = vector.extract_strided_slice %1 {offsets = [11, 0], sizes = [1, 4], strides = [1, 1]} : vector<12x4xf32> to vector<1x4xf32>
    %139 = vector.shape_cast %138 : vector<1x4xf32> to vector<4xf32>
    %140 = vector.shape_cast %139 : vector<4xf32> to vector<1x1x1x4xf32>
    %141 = vector.broadcast %140 : vector<1x1x1x4xf32> to vector<2x16x16x4xf32>
    %142 = arith.mulf %30, %141 : vector<2x16x16x4xf32>
    %143 = arith.addf %137, %142 : vector<2x16x16x4xf32>
    %144 = vector.extract_strided_slice %2 {offsets = [8, 0], sizes = [1, 4], strides = [1, 1]} : vector<10x4xf32> to vector<1x4xf32>
    %145 = vector.shape_cast %144 : vector<1x4xf32> to vector<4xf32>
    %146 = vector.shape_cast %145 : vector<4xf32> to vector<1x1x1x4xf32>
    %147 = vector.broadcast %146 : vector<1x1x1x4xf32> to vector<2x16x16x4xf32>
    %148 = arith.mulf %143, %147 : vector<2x16x16x4xf32>
    %149 = vector.extract_strided_slice %2 {offsets = [9, 0], sizes = [1, 4], strides = [1, 1]} : vector<10x4xf32> to vector<1x4xf32>
    %150 = vector.shape_cast %149 : vector<1x4xf32> to vector<4xf32>
    %151 = vector.shape_cast %150 : vector<4xf32> to vector<1x1x1x4xf32>
    %152 = vector.broadcast %151 : vector<1x1x1x4xf32> to vector<2x16x16x4xf32>
    %153 = arith.addf %148, %152 : vector<2x16x16x4xf32>
    %cst_21 = arith.constant 0.000000e+00 : f32
    %154 = vector.broadcast %cst_21 : f32 to vector<2x16x16x4xf32>
    %155 = arith.maximumf %153, %154 : vector<2x16x16x4xf32>
    %156 = vector.shape_cast %155 : vector<2x16x16x4xf32> to vector<512x4xf32>
    %157 = arith.truncf %156 : vector<512x4xf32> to vector<512x4xbf16>
    %c0_22 = arith.constant 0 : index
    %c12 = arith.constant 12 : index
    %158 = vector.load %arg8[%c0_22, %c12] : memref<512x16xbf16, #tpu.memory_space<vmem>>, vector<512x4xbf16>
    tpu.vector_store %arg8[%c0_22, %c12], %157 {strides = array<i32>} : memref<512x16xbf16, #tpu.memory_space<vmem>>, vector<512x4xbf16>,
    %c0_23 = arith.constant 0 : index
    %c0_24 = arith.constant 0 : index
    %159 = vector.load %arg8[%c0_23, %c0_24] : memref<512x16xbf16, #tpu.memory_space<vmem>>, vector<512x16xbf16>
    %c0_25 = arith.constant 0 : index
    %c0_26 = arith.constant 0 : index
    %160 = vector.load %arg5[%c0_25, %c0_26] : memref<16x16xbf16, #tpu.memory_space<vmem>>, vector<16x16xbf16>
    %cst_27 = arith.constant dense<0.000000e+00> : vector<512x16xf32>
    %161 = tpu.matmul %159, %160, %cst_27 {dimension_numbers = #tpu.dot_dimension_numbers<[1], [0], [0], [1], [0, 0, 1, 1], [], []>} : vector<512x16xbf16>, vector<16x16xbf16>, vector<512x16xf32> -> vector<512x16xf32>
    %162 = vector.extract_strided_slice %3 {offsets = [0, 0], sizes = [1, 16], strides = [1, 1]} : vector<2x16xf32> to vector<1x16xf32>
    %163 = vector.shape_cast %162 : vector<1x16xf32> to vector<16xf32>
    %164 = vector.shape_cast %163 : vector<16xf32> to vector<1x16xf32>
    %165 = vector.broadcast %164 : vector<1x16xf32> to vector<512x16xf32>
    %166 = arith.mulf %161, %165 : vector<512x16xf32>
    %167 = vector.extract_strided_slice %3 {offsets = [1, 0], sizes = [1, 16], strides = [1, 1]} : vector<2x16xf32> to vector<1x16xf32>
    %168 = vector.shape_cast %167 : vector<1x16xf32> to vector<16xf32>
    %169 = vector.shape_cast %168 : vector<16xf32> to vector<1x16xf32>
    %170 = vector.broadcast %169 : vector<1x16xf32> to vector<512x16xf32>
    %171 = arith.addf %166, %170 : vector<512x16xf32>
    %172 = vector.shape_cast %171 : vector<512x16xf32> to vector<2x16x16x16xf32>
    %173 = arith.addf %172, %0 : vector<2x16x16x16xf32>
    %cst_28 = arith.constant 0.000000e+00 : f32
    %174 = vector.broadcast %cst_28 : f32 to vector<2x16x16x16xf32>
    %175 = arith.maximumf %173, %174 : vector<2x16x16x16xf32>
    %c0_29 = arith.constant 0 : index
    %c0_30 = arith.constant 0 : index
    %c0_31 = arith.constant 0 : index
    %c0_32 = arith.constant 0 : index
    %176 = vector.load %arg7[%c0_29, %c0_30, %c0_31, %c0_32] : memref<2x16x16x16xf32, #tpu.memory_space<vmem>>, vector<2x16x16x16xf32>
    tpu.vector_store %arg7[%c0_29, %c0_30, %c0_31, %c0_32], %175 {strides = array<i32>} : memref<2x16x16x16xf32, #tpu.memory_space<vmem>>, vector<2x16x16x16xf32>,
    return
  }
  func.func @transform_0(%arg0: i32) -> (i32, i32, i32, i32) {
    %c0_i32 = arith.constant 0 : i32
    %c0_i32_0 = arith.constant 0 : i32
    %c0_i32_1 = arith.constant 0 : i32
    %c0_i32_2 = arith.constant 0 : i32
    return %arg0, %c0_i32, %c0_i32_0, %c0_i32_1 : i32, i32, i32, i32
  }
  func.func @transform_1(%arg0: i32) -> (i32, i32) {
    %c0_i32 = arith.constant 0 : i32
    %c0_i32_0 = arith.constant 0 : i32
    %c0_i32_1 = arith.constant 0 : i32
    return %c0_i32, %c0_i32_0 : i32, i32
  }
  func.func @transform_2(%arg0: i32) -> (i32, i32) {
    %c0_i32 = arith.constant 0 : i32
    %c0_i32_0 = arith.constant 0 : i32
    %c0_i32_1 = arith.constant 0 : i32
    return %c0_i32, %c0_i32_0 : i32, i32
  }
  func.func @transform_3(%arg0: i32) -> (i32, i32) {
    %c0_i32 = arith.constant 0 : i32
    %c0_i32_0 = arith.constant 0 : i32
    %c0_i32_1 = arith.constant 0 : i32
    return %c0_i32, %c0_i32_0 : i32, i32
  }
  func.func @transform_4(%arg0: i32) -> (i32, i32) {
    %c0_i32 = arith.constant 0 : i32
    %c0_i32_0 = arith.constant 0 : i32
    %c0_i32_1 = arith.constant 0 : i32
    return %c0_i32, %c0_i32_0 : i32, i32
  }
  func.func @transform_5(%arg0: i32) -> (i32, i32) {
    %c0_i32 = arith.constant 0 : i32
    %c0_i32_0 = arith.constant 0 : i32
    %c0_i32_1 = arith.constant 0 : i32
    return %c0_i32, %c0_i32_0 : i32, i32
  }
  func.func @transform_6(%arg0: i32) -> (i32, i32, i32, i32) {
    %c0_i32 = arith.constant 0 : i32
    %c0_i32_0 = arith.constant 0 : i32
    %c0_i32_1 = arith.constant 0 : i32
    %c0_i32_2 = arith.constant 0 : i32
    return %arg0, %c0_i32, %c0_i32_0, %c0_i32_1 : i32, i32, i32, i32
  }
}

</mosaic_0001>

<llo_original>
// kernel: tpu_custom_call.1
$region0: #{tpu_custom_call.1}
  #allocation0 [shape = 'u32[]', space=smem, size = 0x4, offset = 0x4, fixed_abs, tag = 'smem constant byte address 0x4 - core index']
  #allocation1 [shape = 'u32[144,128]{1,0:T(1,128)}', space=vmem, size = 0x12000, scoped, tag = 'internal scratch']
  #allocation2 [shape = 'bf16[512,16]{1,0:T(16,128)(2,1)}', space=vmem, size = 0x20000, scoped, tag = 'scratch operand']
  %s0 = inlined_call_operand.hbm [shape: f32[4,16,16,16], index: 0, kind: input, shape index: {}]
  %s1 = inlined_call_operand.vmem [shape: bf16[16,4], index: 1, kind: input, shape index: {}]
  %s2 = inlined_call_operand.vmem [shape: f32[12,4], index: 2, kind: input, shape index: {}]
  %s3 = inlined_call_operand.vmem [shape: f32[10,4], index: 3, kind: input, shape index: {}]
  %s4 = inlined_call_operand.vmem [shape: bf16[16,16], index: 4, kind: input, shape index: {}]
  %s5 = inlined_call_operand.vmem [shape: f32[2,16], index: 5, kind: input, shape index: {}]
  %s6 = inlined_call_operand.hbm [shape: f32[4,16,16,16], index: 6, kind: output, shape index: {}]
  %s7 = sld [smem:[#allocation0]]
  $region61: #{tpu_custom_call.1} parent=0
    _
  %s9 = ssub.s32 1, %s7
  %s10 = scalar_select 0, %s9, %s7
  $region1: #{tpu_custom_call.1} parent=0
    #allocation3 [shape = 'u8[524288]{0}', space=vmem, size = 0x80000, scoped, tag = 'input window, operand 0']
    #allocation4 [shape = 's32[2]{0}', space=sflag, size = 0x8, scoped, tag = 'scoped memory for tpu_custom_call.1']
    #allocation5 [shape = 's32[2]{0}', space=sflag, size = 0x8, scoped, tag = 'scoped memory for tpu_custom_call.1']
    #allocation6 [shape = 'u8[524288]{0}', space=vmem, size = 0x80000, scoped, tag = 'output window, operand 0']
    %11 = vsyncpa [#allocation4], 0
    %s12 = scalar_lea.sflag [#allocation4], 1
    %13 = vsyncpa %s12, 0
    %14 = vsyncpa [#allocation5], 0
    %s15 = scalar_lea.sflag [#allocation5], 1
    %16 = vsyncpa %s15, 0
    loop: start=0, step=1, limit=4
    $region2: #{tpu_custom_call.1} parent=1 // loop_pre_header
      _
    $region3: #{tpu_custom_call.1} parent=1 // loop_header
      %s18 = sphi 0, %s22
      %p19 = scmp.ge.s32.totalorder %s18, 4
      %s28 = sphi 0, %s30
      %s31 = sphi 0, %s28
      %s32 = sphi 0, %s31
      %s48 = sphi 0, %s32
      %s52 = sphi 0, %s52
      %s54 = sphi 0, %s52
      %s55 = sphi 0, %s54
      %s69 = sphi 0, %s55
      %s73 = sphi 0, %s73
      %s75 = sphi 0, %s73
      %s76 = sphi 0, %s75
      %s90 = sphi 0, %s76
      %s94 = sphi 0, %s94
      %s96 = sphi 0, %s94
      %s97 = sphi 0, %s96
      %s111 = sphi 0, %s97
      %s115 = sphi 0, %s115
      %s117 = sphi 0, %s115
      %s118 = sphi 0, %s117
      %s132 = sphi 0, %s118
      %s136 = sphi 0, %s136
      %s138 = sphi 0, %s136
      %s139 = sphi 0, %s138
      %s153 = sphi 0, %s139
      %s159 = sphi 0, %s161
      %s162 = sphi 0, %s159
      %s163 = sphi 0, %s162
      %s179 = sphi 0, %s163
    $region4: #{tpu_custom_call.1} parent=1 // loop_header_branch
      %21 = sbr.rel (%p19) target = $region8
    $region5: #{tpu_custom_call.1} parent=1 // loop_body
      %s23 = ssub.s32 %s18, 1
      %s24 = ssub.s32 %s18, 2
      %s25 = sadd.s32 %s18, 1
      %s26 = ssub.s32 %s18, %s25
      %p27 = scmp.eq.s32.totalorder %s26, 0
      %s29 = sadd.s32 %s28, 1
      %s30 = scalar_select %p27, %s28, %s29
      %p33 = pneg %p27
      %p34 = scmp.eq.s32.totalorder %s18, 1
      %p35 = por %p33, %p34
      %p36 = scmp.ne.s32.totalorder %s28, %s31
      %p37 = scmp.eq.s32.totalorder %s18, 0
      %p38 = por %p36, %p37
      %p39 = scmp.ne.s32.totalorder %s28, %s31
      %p40 = scmp.eq.s32.totalorder %s23, 1
      %p41 = por %p39, %p40
      %p42 = scmp.ne.s32.totalorder %s31, %s32
      %p43 = scmp.eq.s32.totalorder %s23, 0
      %p44 = por %p42, %p43
      %p45 = scmp.ne.s32.totalorder %s31, %s32
      %p46 = scmp.eq.s32.totalorder %s24, 1
      %p47 = por %p45, %p46
      %p49 = scmp.ne.s32.totalorder %s32, %s48
      %p50 = scmp.eq.s32.totalorder %s24, 0
      %p51 = por %p49, %p50
      %s53 = sadd.s32 %s52, 1
      %p56 = scmp.eq.s32.totalorder %s18, 1
      %p57 = scmp.ne.s32.totalorder %s52, %s54
      %p58 = scmp.eq.s32.totalorder %s18, 0
      %p59 = por %p57, %p58
      %p60 = scmp.ne.s32.totalorder %s52, %s54
      %p61 = scmp.eq.s32.totalorder %s23, 1
      %p62 = por %p60, %p61
      %p63 = scmp.ne.s32.totalorder %s54, %s55
      %p64 = scmp.eq.s32.totalorder %s23, 0
      %p65 = por %p63, %p64
      %p66 = scmp.ne.s32.totalorder %s54, %s55
      %p67 = scmp.eq.s32.totalorder %s24, 1
      %p68 = por %p66, %p67
      %p70 = scmp.ne.s32.totalorder %s55, %s69
      %p71 = scmp.eq.s32.totalorder %s24, 0
      %p72 = por %p70, %p71
      %s74 = sadd.s32 %s73, 1
      %p77 = scmp.eq.s32.totalorder %s18, 1
      %p78 = scmp.ne.s32.totalorder %s73, %s75
      %p79 = scmp.eq.s32.totalorder %s18, 0
      %p80 = por %p78, %p79
      %p81 = scmp.ne.s32.totalorder %s73, %s75
      %p82 = scmp.eq.s32.totalorder %s23, 1
      %p83 = por %p81, %p82
      %p84 = scmp.ne.s32.totalorder %s75, %s76
      %p85 = scmp.eq.s32.totalorder %s23, 0
      %p86 = por %p84, %p85
      %p87 = scmp.ne.s32.totalorder %s75, %s76
      %p88 = scmp.eq.s32.totalorder %s24, 1
      %p89 = por %p87, %p88
      %p91 = scmp.ne.s32.totalorder %s76, %s90
      %p92 = scmp.eq.s32.totalorder %s24, 0
      %p93 = por %p91, %p92
      %s95 = sadd.s32 %s94, 1
      %p98 = scmp.eq.s32.totalorder %s18, 1
      %p99 = scmp.ne.s32.totalorder %s94, %s96
      %p100 = scmp.eq.s32.totalorder %s18, 0
      %p101 = por %p99, %p100
      %p102 = scmp.ne.s32.totalorder %s94, %s96
      %p103 = scmp.eq.s32.totalorder %s23, 1
      %p104 = por %p102, %p103
      %p105 = scmp.ne.s32.totalorder %s96, %s97
      %p106 = scmp.eq.s32.totalorder %s23, 0
      %p107 = por %p105, %p106
      %p108 = scmp.ne.s32.totalorder %s96, %s97
      %p109 = scmp.eq.s32.totalorder %s24, 1
      %p110 = por %p108, %p109
      %p112 = scmp.ne.s32.totalorder %s97, %s111
      %p113 = scmp.eq.s32.totalorder %s24, 0
      %p114 = por %p112, %p113
      %s116 = sadd.s32 %s115, 1
      %p119 = scmp.eq.s32.totalorder %s18, 1
      %p120 = scmp.ne.s32.totalorder %s115, %s117
      %p121 = scmp.eq.s32.totalorder %s18, 0
      %p122 = por %p120, %p121
      %p123 = scmp.ne.s32.totalorder %s115, %s117
      %p124 = scmp.eq.s32.totalorder %s23, 1
      %p125 = por %p123, %p124
      %p126 = scmp.ne.s32.totalorder %s117, %s118
      %p127 = scmp.eq.s32.totalorder %s23, 0
      %p128 = por %p126, %p127
      %p129 = scmp.ne.s32.totalorder %s117, %s118
      %p130 = scmp.eq.s32.totalorder %s24, 1
      %p131 = por %p129, %p130
      %p133 = scmp.ne.s32.totalorder %s118, %s132
      %p134 = scmp.eq.s32.totalorder %s24, 0
      %p135 = por %p133, %p134
      %s137 = sadd.s32 %s136, 1
      %p140 = scmp.eq.s32.totalorder %s18, 1
      %p141 = scmp.ne.s32.totalorder %s136, %s138
      %p142 = scmp.eq.s32.totalorder %s18, 0
      %p143 = por %p141, %p142
      %p144 = scmp.ne.s32.totalorder %s136, %s138
      %p145 = scmp.eq.s32.totalorder %s23, 1
      %p146 = por %p144, %p145
      %p147 = scmp.ne.s32.totalorder %s138, %s139
      %p148 = scmp.eq.s32.totalorder %s23, 0
      %p149 = por %p147, %p148
      %p150 = scmp.ne.s32.totalorder %s138, %s139
      %p151 = scmp.eq.s32.totalorder %s24, 1
      %p152 = por %p150, %p151
      %p154 = scmp.ne.s32.totalorder %s139, %s153
      %p155 = scmp.eq.s32.totalorder %s24, 0
      %p156 = por %p154, %p155
      %s157 = ssub.s32 %s18, %s25
      %p158 = scmp.eq.s32.totalorder %s157, 0
      %s160 = sadd.s32 %s159, 1
      %s161 = scalar_select %p158, %s159, %s160
      %p164 = pneg %p158
      %p165 = scmp.eq.s32.totalorder %s18, 1
      %p166 = por %p164, %p165
      %p167 = scmp.ne.s32.totalorder %s159, %s162
      %p168 = scmp.eq.s32.totalorder %s18, 0
      %p169 = por %p167, %p168
      %p170 = scmp.ne.s32.totalorder %s159, %s162
      %p171 = scmp.eq.s32.totalorder %s23, 1
      %p172 = por %p170, %p171
      %p173 = scmp.ne.s32.totalorder %s162, %s163
      %p174 = scmp.eq.s32.totalorder %s23, 0
      %p175 = por %p173, %p174
      %p176 = scmp.ne.s32.totalorder %s162, %s163
      %p177 = scmp.eq.s32.totalorder %s24, 1
      %p178 = por %p176, %p177
      %p180 = scmp.ne.s32.totalorder %s163, %s179
      %p181 = scmp.eq.s32.totalorder %s24, 0
      %p182 = por %p180, %p181
      %p183 = scmp.le.s32.totalorder 1, %s18
      %p184 = scmp.lt.s32.totalorder %s18, 3
      %p185 = pnand %p183, %p184
      %p186 = pneg %p185
      // Predicated region
      $region9: #{tpu_custom_call.1} parent=5 // pred_check
        _
      $region10: #{tpu_custom_call.1} parent=5 // pred_check_branch
        %188 = sbr.rel (%p185) target = $region12
      $region11: #{tpu_custom_call.1} parent=5 // pred_region
        %s189 = ssub.s32 %s18, 1
        // Predicated region
        $region13: #{tpu_custom_call.1} parent=11 // pred_check
          %p190 = pneg %p65
        $region14: #{tpu_custom_call.1} parent=11 // pred_check_branch
          %192 = sbr.rel (%p190) target = $region16
        $region15: #{tpu_custom_call.1} parent=11 // pred_region
          _
        $region16: #{tpu_custom_call.1} parent=11 // pred_fallthru
          _
        // Predicated region
        $region17: #{tpu_custom_call.1} parent=11 // pred_check
          %p193 = pneg %p86
        $region18: #{tpu_custom_call.1} parent=11 // pred_check_branch
          %195 = sbr.rel (%p193) target = $region20
        $region19: #{tpu_custom_call.1} parent=11 // pred_region
          _
        $region20: #{tpu_custom_call.1} parent=11 // pred_fallthru
          _
        // Predicated region
        $region21: #{tpu_custom_call.1} parent=11 // pred_check
          %p196 = pneg %p107
        $region22: #{tpu_custom_call.1} parent=11 // pred_check_branch
          %198 = sbr.rel (%p196) target = $region24
        $region23: #{tpu_custom_call.1} parent=11 // pred_region
          _
        $region24: #{tpu_custom_call.1} parent=11 // pred_fallthru
          _
        // Predicated region
        $region25: #{tpu_custom_call.1} parent=11 // pred_check
          %p199 = pneg %p128
        $region26: #{tpu_custom_call.1} parent=11 // pred_check_branch
          %201 = sbr.rel (%p199) target = $region28
        $region27: #{tpu_custom_call.1} parent=11 // pred_region
          _
        $region28: #{tpu_custom_call.1} parent=11 // pred_fallthru
          _
        // Predicated region
        $region29: #{tpu_custom_call.1} parent=11 // pred_check
          %p202 = pneg %p149
        $region30: #{tpu_custom_call.1} parent=11 // pred_check_branch
          %204 = sbr.rel (%p202) target = $region32
        $region31: #{tpu_custom_call.1} parent=11 // pred_region
          _
        $region32: #{tpu_custom_call.1} parent=11 // pred_fallthru
          _
      $region12: #{tpu_custom_call.1} parent=5 // pred_fallthru
        _
      %p205 = scmp.lt.s32.totalorder %s18, 2
      // Predicated region
      $region33: #{tpu_custom_call.1} parent=5 // pred_check
        %p206 = pneg %p205
      $region34: #{tpu_custom_call.1} parent=5 // pred_check_branch
        %208 = sbr.rel (%p206) target = $region36
      $region35: #{tpu_custom_call.1} parent=5 // pred_region
        // Predicated region
        $region37: #{tpu_custom_call.1} parent=35 // pred_check
          %p209 = pneg %p38
        $region38: #{tpu_custom_call.1} parent=35 // pred_check_branch
          %211 = sbr.rel (%p209) target = $region40
        $region39: #{tpu_custom_call.1} parent=35 // pred_region
          %s212 = sand.u32 %s28, 1
          %s213 = scalar_lea.sflag [#allocation4], %s212
          %s214 = sand.u32 %s28, 1
          %s215 = smul.addr %s214, 512
          %s216 = scalar_lea.vmem [#allocation3], %s215
          %s217 = smul.u32 2, %s18
          %s219 = ssub.s32 8192, 8192
          %220 = vsyncadd %s213, %s219
          %s221 = smul.addr %s217, 32
          %s222 = smul.addr %s221, 128
          %s223 = scalar_lea.hbm %s0, %s222
          %s224 = sshll.u32 %s216, 4
          %s225 = int_to_ptr.vmem [resolvable:$true] %s224
          %230 = dma.hbm_to_vmem [thread:$0]  %s223, 8192, %s225, %s213, 128, 128, 8
        $region40: #{tpu_custom_call.1} parent=35 // pred_fallthru
          _
      $region36: #{tpu_custom_call.1} parent=5 // pred_fallthru
        _
      %p231 = scmp.le.s32.totalorder 1, %s18
      %p232 = scmp.lt.s32.totalorder %s18, 3
      %p233 = pnand %p231, %p232
      %p234 = pneg %p233
      // Predicated region
      $region41: #{tpu_custom_call.1} parent=5 // pred_check
        _
      $region42: #{tpu_custom_call.1} parent=5 // pred_check_branch
        %236 = sbr.rel (%p233) target = $region44
      $region43: #{tpu_custom_call.1} parent=5 // pred_region
        %s237 = ssub.s32 %s18, 1
        %s238 = sand.u32 %s31, 1
        %s239 = scalar_lea.sflag [#allocation4], %s238
        %s240 = sand.u32 %s31, 1
        %s241 = smul.addr %s240, 512
        %s242 = scalar_lea.vmem [#allocation3], %s241
        // Predicated region
        $region45: #{tpu_custom_call.1} parent=43 // pred_check
          %p243 = pneg %p44
        $region46: #{tpu_custom_call.1} parent=43 // pred_check_branch
          %245 = sbr.rel (%p243) target = $region48
        $region47: #{tpu_custom_call.1} parent=43 // pred_region
          %246 = dma.done %s239, 8192
        $region48: #{tpu_custom_call.1} parent=43 // pred_fallthru
          _
        %s247 = sand.u32 %s31, 1
        %s248 = scalar_lea.sflag [#allocation4], %s247
        %s249 = sand.u32 %s31, 1
        %s250 = smul.addr %s249, 512
        %s251 = scalar_lea.vmem [#allocation3], %s250
        %p252 = pneg %p44
        %p253 = pneg %p41
        %p254 = pneg %p65
        %p255 = pneg %p62
        %p256 = pneg %p86
        %p257 = pneg %p83
        %p258 = pneg %p107
        %p259 = pneg %p104
        %p260 = pneg %p128
        %p261 = pneg %p125
        %p262 = pneg %p149
        %p263 = pneg %p146
        %p264 = pneg %p175
        %p265 = pneg %p172
        %s266 = sand.u32 %s162, 1
        %s267 = scalar_lea.sflag [#allocation5], %s266
        %s268 = sand.u32 %s162, 1
        %s269 = smul.addr %s268, 512
        %s270 = scalar_lea.vmem [#allocation6], %s269
        %s271 = smul.u32 2, %s23
        %s272 = smul.u32 2, %s23
        %v274 = vld [vmem:[%s242] sm:$0xff]
        %v275 = vld [vmem:[%s242 + $0x8] sm:$0xff]
        %v276 = vld [vmem:[%s242 + $0x10] sm:$0xff]
        %v277 = vld [vmem:[%s242 + $0x18] sm:$0xff]
        %v278 = vld [vmem:[%s242 + $0x20] sm:$0xff]
        %v279 = vld [vmem:[%s242 + $0x28] sm:$0xff]
        %v280 = vld [vmem:[%s242 + $0x30] sm:$0xff]
        %v281 = vld [vmem:[%s242 + $0x38] sm:$0xff]
        %v282 = vld [vmem:[%s242 + $0x40] sm:$0xff]
        %v283 = vld [vmem:[%s242 + $0x48] sm:$0xff]
        %v284 = vld [vmem:[%s242 + $0x50] sm:$0xff]
        %v285 = vld [vmem:[%s242 + $0x58] sm:$0xff]
        %v286 = vld [vmem:[%s242 + $0x60] sm:$0xff]
        %v287 = vld [vmem:[%s242 + $0x68] sm:$0xff]
        %v288 = vld [vmem:[%s242 + $0x70] sm:$0xff]
        %v289 = vld [vmem:[%s242 + $0x78] sm:$0xff]
        %v290 = vld [vmem:[%s242 + $0x80] sm:$0xff]
        %v291 = vld [vmem:[%s242 + $0x88] sm:$0xff]
        %v292 = vld [vmem:[%s242 + $0x90] sm:$0xff]
        %v293 = vld [vmem:[%s242 + $0x98] sm:$0xff]
        %v294 = vld [vmem:[%s242 + $0xa0] sm:$0xff]
        %v295 = vld [vmem:[%s242 + $0xa8] sm:$0xff]
        %v296 = vld [vmem:[%s242 + $0xb0] sm:$0xff]
        %v297 = vld [vmem:[%s242 + $0xb8] sm:$0xff]
        %v298 = vld [vmem:[%s242 + $0xc0] sm:$0xff]
        %v299 = vld [vmem:[%s242 + $0xc8] sm:$0xff]
        %v300 = vld [vmem:[%s242 + $0xd0] sm:$0xff]
        %v301 = vld [vmem:[%s242 + $0xd8] sm:$0xff]
        %v302 = vld [vmem:[%s242 + $0xe0] sm:$0xff]
        %v303 = vld [vmem:[%s242 + $0xe8] sm:$0xff]
        %v304 = vld [vmem:[%s242 + $0xf0] sm:$0xff]
        %v305 = vld [vmem:[%s242 + $0xf8] sm:$0xff]
        %v306 = vld [vmem:[%s242 + $0x100] sm:$0xff]
        %v307 = vld [vmem:[%s242 + $0x108] sm:$0xff]
        %v308 = vld [vmem:[%s242 + $0x110] sm:$0xff]
        %v309 = vld [vmem:[%s242 + $0x118] sm:$0xff]
        %v310 = vld [vmem:[%s242 + $0x120] sm:$0xff]
        %v311 = vld [vmem:[%s242 + $0x128] sm:$0xff]
        %v312 = vld [vmem:[%s242 + $0x130] sm:$0xff]
        %v313 = vld [vmem:[%s242 + $0x138] sm:$0xff]
        %v314 = vld [vmem:[%s242 + $0x140] sm:$0xff]
        %v315 = vld [vmem:[%s242 + $0x148] sm:$0xff]
        %v316 = vld [vmem:[%s242 + $0x150] sm:$0xff]
        %v317 = vld [vmem:[%s242 + $0x158] sm:$0xff]
        %v318 = vld [vmem:[%s242 + $0x160] sm:$0xff]
        %v319 = vld [vmem:[%s242 + $0x168] sm:$0xff]
        %v320 = vld [vmem:[%s242 + $0x170] sm:$0xff]
        %v321 = vld [vmem:[%s242 + $0x178] sm:$0xff]
        %v322 = vld [vmem:[%s242 + $0x180] sm:$0xff]
        %v323 = vld [vmem:[%s242 + $0x188] sm:$0xff]
        %v324 = vld [vmem:[%s242 + $0x190] sm:$0xff]
        %v325 = vld [vmem:[%s242 + $0x198] sm:$0xff]
        %v326 = vld [vmem:[%s242 + $0x1a0] sm:$0xff]
        %v327 = vld [vmem:[%s242 + $0x1a8] sm:$0xff]
        %v328 = vld [vmem:[%s242 + $0x1b0] sm:$0xff]
        %v329 = vld [vmem:[%s242 + $0x1b8] sm:$0xff]
        %v330 = vld [vmem:[%s242 + $0x1c0] sm:$0xff]
        %v331 = vld [vmem:[%s242 + $0x1c8] sm:$0xff]
        %v332 = vld [vmem:[%s242 + $0x1d0] sm:$0xff]
        %v333 = vld [vmem:[%s242 + $0x1d8] sm:$0xff]
        %v334 = vld [vmem:[%s242 + $0x1e0] sm:$0xff]
        %v335 = vld [vmem:[%s242 + $0x1e8] sm:$0xff]
        %v336 = vld [vmem:[%s242 + $0x1f0] sm:$0xff]
        %v337 = vld [vmem:[%s242 + $0x1f8] sm:$0xff]
        %v338 = vld [vmem:[%s2] sm:$0xff]
        %v339 = vld [vmem:[%s2 + $0x8] sm:$0xf]
        %v340 = vld [vmem:[%s3] sm:$0xff]
        %v341 = vld [vmem:[%s3 + $0x8] sm:$0x3]
        %v342 = vld [vmem:[%s5] sm:$0x3]
        %v343 = vpack.c.bf16 %v275, %v274
        %v344 = vpack.c.bf16 %v277, %v276
        %v345 = vpack.c.bf16 %v279, %v278
        %v346 = vpack.c.bf16 %v281, %v280
        %v347 = vpack.c.bf16 %v283, %v282
        %v348 = vpack.c.bf16 %v285, %v284
        %v349 = vpack.c.bf16 %v287, %v286
        %v350 = vpack.c.bf16 %v289, %v288
        %v351 = vpack.c.bf16 %v291, %v290
        %v352 = vpack.c.bf16 %v293, %v292
        %v353 = vpack.c.bf16 %v295, %v294
        %v354 = vpack.c.bf16 %v297, %v296
        %v355 = vpack.c.bf16 %v299, %v298
        %v356 = vpack.c.bf16 %v301, %v300
        %v357 = vpack.c.bf16 %v303, %v302
        %v358 = vpack.c.bf16 %v305, %v304
        %v359 = vpack.c.bf16 %v307, %v306
        %v360 = vpack.c.bf16 %v309, %v308
        %v361 = vpack.c.bf16 %v311, %v310
        %v362 = vpack.c.bf16 %v313, %v312
        %v363 = vpack.c.bf16 %v315, %v314
        %v364 = vpack.c.bf16 %v317, %v316
        %v365 = vpack.c.bf16 %v319, %v318
        %v366 = vpack.c.bf16 %v321, %v320
        %v367 = vpack.c.bf16 %v323, %v322
        %v368 = vpack.c.bf16 %v325, %v324
        %v369 = vpack.c.bf16 %v327, %v326
        %v370 = vpack.c.bf16 %v329, %v328
        %v371 = vpack.c.bf16 %v331, %v330
        %v372 = vpack.c.bf16 %v333, %v332
        %v373 = vpack.c.bf16 %v335, %v334
        %v374 = vpack.c.bf16 %v337, %v336
        %v375 = vld [vmem:[%s1] sm:$0xf]
        %v376 = vld [vmem:[%s1 + $0x4] sm:$0xf]
        %v379 = vunpack.c.l.b16 %v375
        %v380 = vunpack.c.l.b16 %v376
        %v381 = vpack.c.b16 %v380, %v379
        %vm383 = vcmask 130048
        %v385 = vsel %vm383, %v343, 0
        %v388 = vsel %vm383, %v344, 0
        %v391 = vsel %vm383, %v345, 0
        %v394 = vsel %vm383, %v346, 0
        %v397 = vsel %vm383, %v347, 0
        %v400 = vsel %vm383, %v348, 0
        %v403 = vsel %vm383, %v349, 0
        %v406 = vsel %vm383, %v350, 0
        %v409 = vsel %vm383, %v351, 0
        %v412 = vsel %vm383, %v352, 0
        %v415 = vsel %vm383, %v353, 0
        %v418 = vsel %vm383, %v354, 0
        %v421 = vsel %vm383, %v355, 0
        %v424 = vsel %vm383, %v356, 0
        %v427 = vsel %vm383, %v357, 0
        %v430 = vsel %vm383, %v358, 0
        %v433 = vsel %vm383, %v359, 0
        %v436 = vsel %vm383, %v360, 0
        %v439 = vsel %vm383, %v361, 0
        %v442 = vsel %vm383, %v362, 0
        %v445 = vsel %vm383, %v363, 0
        %v448 = vsel %vm383, %v364, 0
        %v451 = vsel %vm383, %v365, 0
        %v454 = vsel %vm383, %v366, 0
        %v457 = vsel %vm383, %v367, 0
        %v460 = vsel %vm383, %v368, 0
        %v463 = vsel %vm383, %v369, 0
        %v466 = vsel %vm383, %v370, 0
        %v469 = vsel %vm383, %v371, 0
        %v472 = vsel %vm383, %v372, 0
        %v475 = vsel %vm383, %v373, 0
        %v478 = vsel %vm383, %v374, 0
        %480 = vmatprep.subr.bf16.mxu0 0
        %481 = vmatpush1.bf16.msra.mxu0 %v381
        %482 = vmatprep.subr.bf16.mxu0 0
        %483 = vmatpush1.bf16.msra.mxu0 0
        %484 = vmatprep.subr.bf16.mxu0 0
        %485 = vmatpush1.bf16.msra.mxu0 0
        %486 = vmatprep.subr.bf16.mxu0 0
        %487 = vmatpush1.bf16.msra.mxu0 0
        %488 = vmatprep.subr.bf16.mxu0 0
        %489 = vmatpush1.bf16.msra.mxu0 0
        %490 = vmatprep.subr.bf16.mxu0 0
        %491 = vmatpush1.bf16.msra.mxu0 0
        %492 = vmatprep.subr.bf16.mxu0 0
        %493 = vmatpush1.bf16.msra.mxu0 0
        %494 = vmatprep.subr.bf16.mxu0 0
        %495 = vmatpush1.bf16.msra.mxu0 0
        %496 = vmatprep.subr.bf16.mxu0 0
        %497 = vmatpush1.bf16.msra.mxu0 0
        %498 = vmatprep.subr.bf16.mxu0 0
        %499 = vmatpush1.bf16.msra.mxu0 0
        %500 = vmatprep.subr.bf16.mxu0 0
        %501 = vmatpush1.bf16.msra.mxu0 0
        %502 = vmatprep.subr.bf16.mxu0 0
        %503 = vmatpush1.bf16.msra.mxu0 0
        %504 = vmatprep.subr.bf16.mxu0 0
        %505 = vmatpush1.bf16.msra.mxu0 0
        %506 = vmatprep.subr.bf16.mxu0 0
        %507 = vmatpush1.bf16.msra.mxu0 0
        %508 = vmatprep.subr.bf16.mxu0 0
        %509 = vmatpush1.bf16.msra.mxu0 0
        %510 = vmatprep.subr.bf16.mxu0 0
        %511 = vmatpush1.bf16.msra.mxu0 0
        %512 = vmatprep.mubr.bf16.mxu0 0
        %513 = vmatmul.mubr.bf16.gmra.mrb[0].mxu0 %v385
        %v514 = vpop.f32.mrb[0].mxu0
        %v515 = vadd.f32 0.0, %v514
        %v516 = vpop.f32.mrb[0].mxu0
        %v517 = vpop.f32.mrb[0].mxu0
        %v518 = vadd.f32 0.0, %v517
        %v519 = vpop.f32.mrb[0].mxu0
        %520 = vmatprep.mubr.bf16.mxu0 0
        %521 = vmatmul.mubr.bf16.gmra.mrb[0].mxu0 %v388
        %v522 = vpop.f32.mrb[0].mxu0
        %v523 = vadd.f32 0.0, %v522
        %v524 = vpop.f32.mrb[0].mxu0
        %v525 = vpop.f32.mrb[0].mxu0
        %v526 = vadd.f32 0.0, %v525
        %v527 = vpop.f32.mrb[0].mxu0
        %528 = vmatprep.mubr.bf16.mxu0 0
        %529 = vmatmul.mubr.bf16.gmra.mrb[0].mxu0 %v391
        %v530 = vpop.f32.mrb[0].mxu0
        %v531 = vadd.f32 0.0, %v530
        %v532 = vpop.f32.mrb[0].mxu0
        %v533 = vpop.f32.mrb[0].mxu0
        %v534 = vadd.f32 0.0, %v533
        %v535 = vpop.f32.mrb[0].mxu0
        %536 = vmatprep.mubr.bf16.mxu0 0
        %537 = vmatmul.mubr.bf16.gmra.mrb[0].mxu0 %v394
        %v538 = vpop.f32.mrb[0].mxu0
        %v539 = vadd.f32 0.0, %v538
        %v540 = vpop.f32.mrb[0].mxu0
        %v541 = vpop.f32.mrb[0].mxu0
        %v542 = vadd.f32 0.0, %v541
        %v543 = vpop.f32.mrb[0].mxu0
        %544 = vmatprep.mubr.bf16.mxu0 0
        %545 = vmatmul.mubr.bf16.gmra.mrb[0].mxu0 %v397
        %v546 = vpop.f32.mrb[0].mxu0
        %v547 = vadd.f32 0.0, %v546
        %v548 = vpop.f32.mrb[0].mxu0
        %v549 = vpop.f32.mrb[0].mxu0
        %v550 = vadd.f32 0.0, %v549
        %v551 = vpop.f32.mrb[0].mxu0
        %552 = vmatprep.mubr.bf16.mxu0 0
        %553 = vmatmul.mubr.bf16.gmra.mrb[0].mxu0 %v400
        %v554 = vpop.f32.mrb[0].mxu0
        %v555 = vadd.f32 0.0, %v554
        %v556 = vpop.f32.mrb[0].mxu0
        %v557 = vpop.f32.mrb[0].mxu0
        %v558 = vadd.f32 0.0, %v557
        %v559 = vpop.f32.mrb[0].mxu0
        %560 = vmatprep.mubr.bf16.mxu0 0
        %561 = vmatmul.mubr.bf16.gmra.mrb[0].mxu0 %v403
        %v562 = vpop.f32.mrb[0].mxu0
        %v563 = vadd.f32 0.0, %v562
        %v564 = vpop.f32.mrb[0].mxu0
        %v565 = vpop.f32.mrb[0].mxu0
        %v566 = vadd.f32 0.0, %v565
        %v567 = vpop.f32.mrb[0].mxu0
        %568 = vmatprep.mubr.bf16.mxu0 0
        %569 = vmatmul.mubr.bf16.gmra.mrb[0].mxu0 %v406
        %v570 = vpop.f32.mrb[0].mxu0
        %v571 = vadd.f32 0.0, %v570
        %v572 = vpop.f32.mrb[0].mxu0
        %v573 = vpop.f32.mrb[0].mxu0
        %v574 = vadd.f32 0.0, %v573
        %v575 = vpop.f32.mrb[0].mxu0
        %576 = vmatprep.mubr.bf16.mxu0 0
        %577 = vmatmul.mubr.bf16.gmra.mrb[0].mxu0 %v409
        %v578 = vpop.f32.mrb[0].mxu0
        %v579 = vadd.f32 0.0, %v578
        %v580 = vpop.f32.mrb[0].mxu0
        %v581 = vpop.f32.mrb[0].mxu0
        %v582 = vadd.f32 0.0, %v581
        %v583 = vpop.f32.mrb[0].mxu0
        %584 = vmatprep.mubr.bf16.mxu0 0
        %585 = vmatmul.mubr.bf16.gmra.mrb[0].mxu0 %v412
        %v586 = vpop.f32.mrb[0].mxu0
        %v587 = vadd.f32 0.0, %v586
        %v588 = vpop.f32.mrb[0].mxu0
        %v589 = vpop.f32.mrb[0].mxu0
        %v590 = vadd.f32 0.0, %v589
        %v591 = vpop.f32.mrb[0].mxu0
        %592 = vmatprep.mubr.bf16.mxu0 0
        %593 = vmatmul.mubr.bf16.gmra.mrb[0].mxu0 %v415
        %v594 = vpop.f32.mrb[0].mxu0
        %v595 = vadd.f32 0.0, %v594
        %v596 = vpop.f32.mrb[0].mxu0
        %v597 = vpop.f32.mrb[0].mxu0
        %v598 = vadd.f32 0.0, %v597
        %v599 = vpop.f32.mrb[0].mxu0
        %600 = vmatprep.mubr.bf16.mxu0 0
        %601 = vmatmul.mubr.bf16.gmra.mrb[0].mxu0 %v418
        %v602 = vpop.f32.mrb[0].mxu0
        %v603 = vadd.f32 0.0, %v602
        %v604 = vpop.f32.mrb[0].mxu0
        %v605 = vpop.f32.mrb[0].mxu0
        %v606 = vadd.f32 0.0, %v605
        %v607 = vpop.f32.mrb[0].mxu0
        %608 = vmatprep.mubr.bf16.mxu0 0
        %609 = vmatmul.mubr.bf16.gmra.mrb[0].mxu0 %v421
        %v610 = vpop.f32.mrb[0].mxu0
        %v611 = vadd.f32 0.0, %v610
        %v612 = vpop.f32.mrb[0].mxu0
        %v613 = vpop.f32.mrb[0].mxu0
        %v614 = vadd.f32 0.0, %v613
        %v615 = vpop.f32.mrb[0].mxu0
        %616 = vmatprep.mubr.bf16.mxu0 0
        %617 = vmatmul.mubr.bf16.gmra.mrb[0].mxu0 %v424
        %v618 = vpop.f32.mrb[0].mxu0
        %v619 = vadd.f32 0.0, %v618
        %v620 = vpop.f32.mrb[0].mxu0
        %v621 = vpop.f32.mrb[0].mxu0
        %v622 = vadd.f32 0.0, %v621
        %v623 = vpop.f32.mrb[0].mxu0
        %624 = vmatprep.mubr.bf16.mxu0 0
        %625 = vmatmul.mubr.bf16.gmra.mrb[0].mxu0 %v427
        %v626 = vpop.f32.mrb[0].mxu0
        %v627 = vadd.f32 0.0, %v626
        %v628 = vpop.f32.mrb[0].mxu0
        %v629 = vpop.f32.mrb[0].mxu0
        %v630 = vadd.f32 0.0, %v629
        %v631 = vpop.f32.mrb[0].mxu0
        %632 = vmatprep.mubr.bf16.mxu0 0
        %633 = vmatmul.mubr.bf16.gmra.mrb[0].mxu0 %v430
        %v634 = vpop.f32.mrb[0].mxu0
        %v635 = vadd.f32 0.0, %v634
        %v636 = vpop.f32.mrb[0].mxu0
        %v637 = vpop.f32.mrb[0].mxu0
        %v638 = vadd.f32 0.0, %v637
        %v639 = vpop.f32.mrb[0].mxu0
        %640 = vmatprep.mubr.bf16.mxu0 0
        %641 = vmatmul.mubr.bf16.gmra.mrb[0].mxu0 %v433
        %v642 = vpop.f32.mrb[0].mxu0
        %v643 = vadd.f32 0.0, %v642
        %v644 = vpop.f32.mrb[0].mxu0
        %v645 = vpop.f32.mrb[0].mxu0
        %v646 = vadd.f32 0.0, %v645
        %v647 = vpop.f32.mrb[0].mxu0
        %648 = vmatprep.mubr.bf16.mxu0 0
        %649 = vmatmul.mubr.bf16.gmra.mrb[0].mxu0 %v436
        %v650 = vpop.f32.mrb[0].mxu0
        %v651 = vadd.f32 0.0, %v650
        %v652 = vpop.f32.mrb[0].mxu0
        %v653 = vpop.f32.mrb[0].mxu0
        %v654 = vadd.f32 0.0, %v653
        %v655 = vpop.f32.mrb[0].mxu0
        %656 = vmatprep.mubr.bf16.mxu0 0
        %657 = vmatmul.mubr.bf16.gmra.mrb[0].mxu0 %v439
        %v658 = vpop.f32.mrb[0].mxu0
        %v659 = vadd.f32 0.0, %v658
        %v660 = vpop.f32.mrb[0].mxu0
        %v661 = vpop.f32.mrb[0].mxu0
        %v662 = vadd.f32 0.0, %v661
        %v663 = vpop.f32.mrb[0].mxu0
        %664 = vmatprep.mubr.bf16.mxu0 0
        %665 = vmatmul.mubr.bf16.gmra.mrb[0].mxu0 %v442
        %v666 = vpop.f32.mrb[0].mxu0
        %v667 = vadd.f32 0.0, %v666
        %v668 = vpop.f32.mrb[0].mxu0
        %v669 = vpop.f32.mrb[0].mxu0
        %v670 = vadd.f32 0.0, %v669
        %v671 = vpop.f32.mrb[0].mxu0
        %672 = vmatprep.mubr.bf16.mxu0 0
        %673 = vmatmul.mubr.bf16.gmra.mrb[0].mxu0 %v445
        %v674 = vpop.f32.mrb[0].mxu0
        %v675 = vadd.f32 0.0, %v674
        %v676 = vpop.f32.mrb[0].mxu0
        %v677 = vpop.f32.mrb[0].mxu0
        %v678 = vadd.f32 0.0, %v677
        %v679 = vpop.f32.mrb[0].mxu0
        %680 = vmatprep.mubr.bf16.mxu0 0
        %681 = vmatmul.mubr.bf16.gmra.mrb[0].mxu0 %v448
        %v682 = vpop.f32.mrb[0].mxu0
        %v683 = vadd.f32 0.0, %v682
        %v684 = vpop.f32.mrb[0].mxu0
        %v685 = vpop.f32.mrb[0].mxu0
        %v686 = vadd.f32 0.0, %v685
        %v687 = vpop.f32.mrb[0].mxu0
        %688 = vmatprep.mubr.bf16.mxu0 0
        %689 = vmatmul.mubr.bf16.gmra.mrb[0].mxu0 %v451
        %v690 = vpop.f32.mrb[0].mxu0
        %v691 = vadd.f32 0.0, %v690
        %v692 = vpop.f32.mrb[0].mxu0
        %v693 = vpop.f32.mrb[0].mxu0
        %v694 = vadd.f32 0.0, %v693
        %v695 = vpop.f32.mrb[0].mxu0
        %696 = vmatprep.mubr.bf16.mxu0 0
        %697 = vmatmul.mubr.bf16.gmra.mrb[0].mxu0 %v454
        %v698 = vpop.f32.mrb[0].mxu0
        %v699 = vadd.f32 0.0, %v698
        %v700 = vpop.f32.mrb[0].mxu0
        %v701 = vpop.f32.mrb[0].mxu0
        %v702 = vadd.f32 0.0, %v701
        %v703 = vpop.f32.mrb[0].mxu0
        %704 = vmatprep.mubr.bf16.mxu0 0
        %705 = vmatmul.mubr.bf16.gmra.mrb[0].mxu0 %v457
        %v706 = vpop.f32.mrb[0].mxu0
        %v707 = vadd.f32 0.0, %v706
        %v708 = vpop.f32.mrb[0].mxu0
        %v709 = vpop.f32.mrb[0].mxu0
        %v710 = vadd.f32 0.0, %v709
        %v711 = vpop.f32.mrb[0].mxu0
        %712 = vmatprep.mubr.bf16.mxu0 0
        %713 = vmatmul.mubr.bf16.gmra.mrb[0].mxu0 %v460
        %v714 = vpop.f32.mrb[0].mxu0
        %v715 = vadd.f32 0.0, %v714
        %v716 = vpop.f32.mrb[0].mxu0
        %v717 = vpop.f32.mrb[0].mxu0
        %v718 = vadd.f32 0.0, %v717
        %v719 = vpop.f32.mrb[0].mxu0
        %720 = vmatprep.mubr.bf16.mxu0 0
        %721 = vmatmul.mubr.bf16.gmra.mrb[0].mxu0 %v463
        %v722 = vpop.f32.mrb[0].mxu0
        %v723 = vadd.f32 0.0, %v722
        %v724 = vpop.f32.mrb[0].mxu0
        %v725 = vpop.f32.mrb[0].mxu0
        %v726 = vadd.f32 0.0, %v725
        %v727 = vpop.f32.mrb[0].mxu0
        %728 = vmatprep.mubr.bf16.mxu0 0
        %729 = vmatmul.mubr.bf16.gmra.mrb[0].mxu0 %v466
        %v730 = vpop.f32.mrb[0].mxu0
        %v731 = vadd.f32 0.0, %v730
        %v732 = vpop.f32.mrb[0].mxu0
        %v733 = vpop.f32.mrb[0].mxu0
        %v734 = vadd.f32 0.0, %v733
        %v735 = vpop.f32.mrb[0].mxu0
        %736 = vmatprep.mubr.bf16.mxu0 0
        %737 = vmatmul.mubr.bf16.gmra.mrb[0].mxu0 %v469
        %v738 = vpop.f32.mrb[0].mxu0
        %v739 = vadd.f32 0.0, %v738
        %v740 = vpop.f32.mrb[0].mxu0
        %v741 = vpop.f32.mrb[0].mxu0
        %v742 = vadd.f32 0.0, %v741
        %v743 = vpop.f32.mrb[0].mxu0
        %744 = vmatprep.mubr.bf16.mxu0 0
        %745 = vmatmul.mubr.bf16.gmra.mrb[0].mxu0 %v472
        %v746 = vpop.f32.mrb[0].mxu0
        %v747 = vadd.f32 0.0, %v746
        %v748 = vpop.f32.mrb[0].mxu0
        %v749 = vpop.f32.mrb[0].mxu0
        %v750 = vadd.f32 0.0, %v749
        %v751 = vpop.f32.mrb[0].mxu0
        %752 = vmatprep.mubr.bf16.mxu0 0
        %753 = vmatmul.mubr.bf16.gmra.mrb[0].mxu0 %v475
        %v754 = vpop.f32.mrb[0].mxu0
        %v755 = vadd.f32 0.0, %v754
        %v756 = vpop.f32.mrb[0].mxu0
        %v757 = vpop.f32.mrb[0].mxu0
        %v758 = vadd.f32 0.0, %v757
        %v759 = vpop.f32.mrb[0].mxu0
        %760 = vmatprep.mubr.bf16.mxu0 0
        %761 = vmatmul.mubr.bf16.gmra.mrb[0].mxu0 %v478
        %v762 = vpop.f32.mrb[0].mxu0
        %v763 = vadd.f32 0.0, %v762
        %v764 = vpop.f32.mrb[0].mxu0
        %v765 = vpop.f32.mrb[0].mxu0
        %v766 = vadd.f32 0.0, %v765
        %v767 = vpop.f32.mrb[0].mxu0
        %768 = vdwg.mxu0
        %v769 = vlaneseq
        %v770 = vshrl.u32 %v769, 7
        %v771 = vsub.s32 0, %v770
        %v772 = vrot.slane %v340, %v771
        %v773 = vmul.f32 %v515, %v772
        %v774 = vmul.f32 %v518, %v772
        %v775 = vmul.f32 %v523, %v772
        %v776 = vmul.f32 %v526, %v772
        %v777 = vmul.f32 %v531, %v772
        %v778 = vmul.f32 %v534, %v772
        %v779 = vmul.f32 %v539, %v772
        %v780 = vmul.f32 %v542, %v772
        %v781 = vmul.f32 %v547, %v772
        %v782 = vmul.f32 %v550, %v772
        %v783 = vmul.f32 %v555, %v772
        %v784 = vmul.f32 %v558, %v772
        %v785 = vmul.f32 %v563, %v772
        %v786 = vmul.f32 %v566, %v772
        %v787 = vmul.f32 %v571, %v772
        %v788 = vmul.f32 %v574, %v772
        %v789 = vmul.f32 %v579, %v772
        %v790 = vmul.f32 %v582, %v772
        %v791 = vmul.f32 %v587, %v772
        %v792 = vmul.f32 %v590, %v772
        %v793 = vmul.f32 %v595, %v772
        %v794 = vmul.f32 %v598, %v772
        %v795 = vmul.f32 %v603, %v772
        %v796 = vmul.f32 %v606, %v772
        %v797 = vmul.f32 %v611, %v772
        %v798 = vmul.f32 %v614, %v772
        %v799 = vmul.f32 %v619, %v772
        %v800 = vmul.f32 %v622, %v772
        %v801 = vmul.f32 %v627, %v772
        %v802 = vmul.f32 %v630, %v772
        %v803 = vmul.f32 %v635, %v772
        %v804 = vmul.f32 %v638, %v772
        %v805 = vmul.f32 %v643, %v772
        %v806 = vmul.f32 %v646, %v772
        %v807 = vmul.f32 %v651, %v772
        %v808 = vmul.f32 %v654, %v772
        %v809 = vmul.f32 %v659, %v772
        %v810 = vmul.f32 %v662, %v772
        %v811 = vmul.f32 %v667, %v772
        %v812 = vmul.f32 %v670, %v772
        %v813 = vmul.f32 %v675, %v772
        %v814 = vmul.f32 %v678, %v772
        %v815 = vmul.f32 %v683, %v772
        %v816 = vmul.f32 %v686, %v772
        %v817 = vmul.f32 %v691, %v772
        %v818 = vmul.f32 %v694, %v772
        %v819 = vmul.f32 %v699, %v772
        %v820 = vmul.f32 %v702, %v772
        %v821 = vmul.f32 %v707, %v772
        %v822 = vmul.f32 %v710, %v772
        %v823 = vmul.f32 %v715, %v772
        %v824 = vmul.f32 %v718, %v772
        %v825 = vmul.f32 %v723, %v772
        %v826 = vmul.f32 %v726, %v772
        %v827 = vmul.f32 %v731, %v772
        %v828 = vmul.f32 %v734, %v772
        %v829 = vmul.f32 %v739, %v772
        %v830 = vmul.f32 %v742, %v772
        %v831 = vmul.f32 %v747, %v772
        %v832 = vmul.f32 %v750, %v772
        %v833 = vmul.f32 %v755, %v772
        %v834 = vmul.f32 %v758, %v772
        %v835 = vmul.f32 %v763, %v772
        %v836 = vmul.f32 %v766, %v772
        %v837 = vlaneseq
        %v838 = vshrl.u32 %v837, 7
        %v839 = vsub.s32 1, %v838
        %v840 = vrot.slane %v340, %v839
        %v841 = vadd.f32 %v773, %v840
        %v842 = vadd.f32 %v774, %v840
        %v843 = vadd.f32 %v775, %v840
        %v844 = vadd.f32 %v776, %v840
        %v845 = vadd.f32 %v777, %v840
        %v846 = vadd.f32 %v778, %v840
        %v847 = vadd.f32 %v779, %v840
        %v848 = vadd.f32 %v780, %v840
        %v849 = vadd.f32 %v781, %v840
        %v850 = vadd.f32 %v782, %v840
        %v851 = vadd.f32 %v783, %v840
        %v852 = vadd.f32 %v784, %v840
        %v853 = vadd.f32 %v785, %v840
        %v854 = vadd.f32 %v786, %v840
        %v855 = vadd.f32 %v787, %v840
        %v856 = vadd.f32 %v788, %v840
        %v857 = vadd.f32 %v789, %v840
        %v858 = vadd.f32 %v790, %v840
        %v859 = vadd.f32 %v791, %v840
        %v860 = vadd.f32 %v792, %v840
        %v861 = vadd.f32 %v793, %v840
        %v862 = vadd.f32 %v794, %v840
        %v863 = vadd.f32 %v795, %v840
        %v864 = vadd.f32 %v796, %v840
        %v865 = vadd.f32 %v797, %v840
        %v866 = vadd.f32 %v798, %v840
        %v867 = vadd.f32 %v799, %v840
        %v868 = vadd.f32 %v800, %v840
        %v869 = vadd.f32 %v801, %v840
        %v870 = vadd.f32 %v802, %v840
        %v871 = vadd.f32 %v803, %v840
        %v872 = vadd.f32 %v804, %v840
        %v873 = vadd.f32 %v805, %v840
        %v874 = vadd.f32 %v806, %v840
        %v875 = vadd.f32 %v807, %v840
        %v876 = vadd.f32 %v808, %v840
        %v877 = vadd.f32 %v809, %v840
        %v878 = vadd.f32 %v810, %v840
        %v879 = vadd.f32 %v811, %v840
        %v880 = vadd.f32 %v812, %v840
        %v881 = vadd.f32 %v813, %v840
        %v882 = vadd.f32 %v814, %v840
        %v883 = vadd.f32 %v815, %v840
        %v884 = vadd.f32 %v816, %v840
        %v885 = vadd.f32 %v817, %v840
        %v886 = vadd.f32 %v818, %v840
        %v887 = vadd.f32 %v819, %v840
        %v888 = vadd.f32 %v820, %v840
        %v889 = vadd.f32 %v821, %v840
        %v890 = vadd.f32 %v822, %v840
        %v891 = vadd.f32 %v823, %v840
        %v892 = vadd.f32 %v824, %v840
        %v893 = vadd.f32 %v825, %v840
        %v894 = vadd.f32 %v826, %v840
        %v895 = vadd.f32 %v827, %v840
        %v896 = vadd.f32 %v828, %v840
        %v897 = vadd.f32 %v829, %v840
        %v898 = vadd.f32 %v830, %v840
        %v899 = vadd.f32 %v831, %v840
        %v900 = vadd.f32 %v832, %v840
        %v901 = vadd.f32 %v833, %v840
        %v902 = vadd.f32 %v834, %v840
        %v903 = vadd.f32 %v835, %v840
        %v904 = vadd.f32 %v836, %v840
        %v905 = vmax.f32 %v841, 0.0
        %v906 = vmax.f32 %v842, 0.0
        %v907 = vmax.f32 %v843, 0.0
        %v908 = vmax.f32 %v844, 0.0
        %v909 = vmax.f32 %v845, 0.0
        %v910 = vmax.f32 %v846, 0.0
        %v911 = vmax.f32 %v847, 0.0
        %v912 = vmax.f32 %v848, 0.0
        %v913 = vmax.f32 %v849, 0.0
        %v914 = vmax.f32 %v850, 0.0
        %v915 = vmax.f32 %v851, 0.0
        %v916 = vmax.f32 %v852, 0.0
        %v917 = vmax.f32 %v853, 0.0
        %v918 = vmax.f32 %v854, 0.0
        %v919 = vmax.f32 %v855, 0.0
        %v920 = vmax.f32 %v856, 0.0
        %v921 = vmax.f32 %v857, 0.0
        %v922 = vmax.f32 %v858, 0.0
        %v923 = vmax.f32 %v859, 0.0
        %v924 = vmax.f32 %v860, 0.0
        %v925 = vmax.f32 %v861, 0.0
        %v926 = vmax.f32 %v862, 0.0
        %v927 = vmax.f32 %v863, 0.0
        %v928 = vmax.f32 %v864, 0.0
        %v929 = vmax.f32 %v865, 0.0
        %v930 = vmax.f32 %v866, 0.0
        %v931 = vmax.f32 %v867, 0.0
        %v932 = vmax.f32 %v868, 0.0
        %v933 = vmax.f32 %v869, 0.0
        %v934 = vmax.f32 %v870, 0.0
        %v935 = vmax.f32 %v871, 0.0
        %v936 = vmax.f32 %v872, 0.0
        %v937 = vmax.f32 %v873, 0.0
        %v938 = vmax.f32 %v874, 0.0
        %v939 = vmax.f32 %v875, 0.0
        %v940 = vmax.f32 %v876, 0.0
        %v941 = vmax.f32 %v877, 0.0
        %v942 = vmax.f32 %v878, 0.0
        %v943 = vmax.f32 %v879, 0.0
        %v944 = vmax.f32 %v880, 0.0
        %v945 = vmax.f32 %v881, 0.0
        %v946 = vmax.f32 %v882, 0.0
        %v947 = vmax.f32 %v883, 0.0
        %v948 = vmax.f32 %v884, 0.0
        %v949 = vmax.f32 %v885, 0.0
        %v950 = vmax.f32 %v886, 0.0
        %v951 = vmax.f32 %v887, 0.0
        %v952 = vmax.f32 %v888, 0.0
        %v953 = vmax.f32 %v889, 0.0
        %v954 = vmax.f32 %v890, 0.0
        %v955 = vmax.f32 %v891, 0.0
        %v956 = vmax.f32 %v892, 0.0
        %v957 = vmax.f32 %v893, 0.0
        %v958 = vmax.f32 %v894, 0.0
        %v959 = vmax.f32 %v895, 0.0
        %v960 = vmax.f32 %v896, 0.0
        %v961 = vmax.f32 %v897, 0.0
        %v962 = vmax.f32 %v898, 0.0
        %v963 = vmax.f32 %v899, 0.0
        %v964 = vmax.f32 %v900, 0.0
        %v965 = vmax.f32 %v901, 0.0
        %v966 = vmax.f32 %v902, 0.0
        %v967 = vmax.f32 %v903, 0.0
        %v968 = vmax.f32 %v904, 0.0
        %vm1033 = vcmask 1040384
        %v1034 = vrot.slane %v905, 7
        %v1035 = vrot.slane %v906, 7
        %v1036 = vsel %vm1033, %v1034, %v1035
        %v1037 = vrot.slane %v907, 7
        %v1038 = vrot.slane %v908, 7
        %v1039 = vsel %vm1033, %v1037, %v1038
        %v1040 = vrot.slane %v909, 7
        %v1041 = vrot.slane %v910, 7
        %v1042 = vsel %vm1033, %v1040, %v1041
        %v1043 = vrot.slane %v911, 7
        %v1044 = vrot.slane %v912, 7
        %v1045 = vsel %vm1033, %v1043, %v1044
        %v1046 = vrot.slane %v913, 7
        %v1047 = vrot.slane %v914, 7
        %v1048 = vsel %vm1033, %v1046, %v1047
        %v1049 = vrot.slane %v915, 7
        %v1050 = vrot.slane %v916, 7
        %v1051 = vsel %vm1033, %v1049, %v1050
        %v1052 = vrot.slane %v917, 7
        %v1053 = vrot.slane %v918, 7
        %v1054 = vsel %vm1033, %v1052, %v1053
        %v1055 = vrot.slane %v919, 7
        %v1056 = vrot.slane %v920, 7
        %v1057 = vsel %vm1033, %v1055, %v1056
        %v1058 = vrot.slane %v921, 7
        %v1059 = vrot.slane %v922, 7
        %v1060 = vsel %vm1033, %v1058, %v1059
        %v1061 = vrot.slane %v923, 7
        %v1062 = vrot.slane %v924, 7
        %v1063 = vsel %vm1033, %v1061, %v1062
        %v1064 = vrot.slane %v925, 7
        %v1065 = vrot.slane %v926, 7
        %v1066 = vsel %vm1033, %v1064, %v1065
        %v1067 = vrot.slane %v927, 7
        %v1068 = vrot.slane %v928, 7
        %v1069 = vsel %vm1033, %v1067, %v1068
        %v1070 = vrot.slane %v929, 7
        %v1071 = vrot.slane %v930, 7
        %v1072 = vsel %vm1033, %v1070, %v1071
        %v1073 = vrot.slane %v931, 7
        %v1074 = vrot.slane %v932, 7
        %v1075 = vsel %vm1033, %v1073, %v1074
        %v1076 = vrot.slane %v933, 7
        %v1077 = vrot.slane %v934, 7
        %v1078 = vsel %vm1033, %v1076, %v1077
        %v1079 = vrot.slane %v935, 7
        %v1080 = vrot.slane %v936, 7
        %v1081 = vsel %vm1033, %v1079, %v1080
        %v1082 = vrot.slane %v937, 7
        %v1083 = vrot.slane %v938, 7
        %v1084 = vsel %vm1033, %v1082, %v1083
        %v1085 = vrot.slane %v939, 7
        %v1086 = vrot.slane %v940, 7
        %v1087 = vsel %vm1033, %v1085, %v1086
        %v1088 = vrot.slane %v941, 7
        %v1089 = vrot.slane %v942, 7
        %v1090 = vsel %vm1033, %v1088, %v1089
        %v1091 = vrot.slane %v943, 7
        %v1092 = vrot.slane %v944, 7
        %v1093 = vsel %vm1033, %v1091, %v1092
        %v1094 = vrot.slane %v945, 7
        %v1095 = vrot.slane %v946, 7
        %v1096 = vsel %vm1033, %v1094, %v1095
        %v1097 = vrot.slane %v947, 7
        %v1098 = vrot.slane %v948, 7
        %v1099 = vsel %vm1033, %v1097, %v1098
        %v1100 = vrot.slane %v949, 7
        %v1101 = vrot.slane %v950, 7
        %v1102 = vsel %vm1033, %v1100, %v1101
        %v1103 = vrot.slane %v951, 7
        %v1104 = vrot.slane %v952, 7
        %v1105 = vsel %vm1033, %v1103, %v1104
        %v1106 = vrot.slane %v953, 7
        %v1107 = vrot.slane %v954, 7
        %v1108 = vsel %vm1033, %v1106, %v1107
        %v1109 = vrot.slane %v955, 7
        %v1110 = vrot.slane %v956, 7
        %v1111 = vsel %vm1033, %v1109, %v1110
        %v1112 = vrot.slane %v957, 7
        %v1113 = vrot.slane %v958, 7
        %v1114 = vsel %vm1033, %v1112, %v1113
        %v1115 = vrot.slane %v959, 7
        %v1116 = vrot.slane %v960, 7
        %v1117 = vsel %vm1033, %v1115, %v1116
        %v1118 = vrot.slane %v961, 7
        %v1119 = vrot.slane %v962, 7
        %v1120 = vsel %vm1033, %v1118, %v1119
        %v1121 = vrot.slane %v963, 7
        %v1122 = vrot.slane %v964, 7
        %v1123 = vsel %vm1033, %v1121, %v1122
        %v1124 = vrot.slane %v965, 7
        %v1125 = vrot.slane %v966, 7
        %v1126 = vsel %vm1033, %v1124, %v1125
        %v1127 = vrot.slane %v967, 7
        %v1128 = vrot.slane %v968, 7
        %v1129 = vsel %vm1033, %v1127, %v1128
        %v1194 = vsel %vm1033, 0.0, %v1034
        %v1195 = vsel %vm1033, 0.0, %v1037
        %v1196 = vsel %vm1033, 0.0, %v1040
        %v1197 = vsel %vm1033, 0.0, %v1043
        %v1198 = vsel %vm1033, 0.0, %v1046
        %v1199 = vsel %vm1033, 0.0, %v1049
        %v1200 = vsel %vm1033, 0.0, %v1052
        %v1201 = vsel %vm1033, 0.0, %v1055
        %v1202 = vsel %vm1033, 0.0, %v1058
        %v1203 = vsel %vm1033, 0.0, %v1061
        %v1204 = vsel %vm1033, 0.0, %v1064
        %v1205 = vsel %vm1033, 0.0, %v1067
        %v1206 = vsel %vm1033, 0.0, %v1070
        %v1207 = vsel %vm1033, 0.0, %v1073
        %v1208 = vsel %vm1033, 0.0, %v1076
        %v1209 = vsel %vm1033, 0.0, %v1079
        %v1210 = vsel %vm1033, 0.0, %v1082
        %v1211 = vsel %vm1033, 0.0, %v1085
        %v1212 = vsel %vm1033, 0.0, %v1088
        %v1213 = vsel %vm1033, 0.0, %v1091
        %v1214 = vsel %vm1033, 0.0, %v1094
        %v1215 = vsel %vm1033, 0.0, %v1097
        %v1216 = vsel %vm1033, 0.0, %v1100
        %v1217 = vsel %vm1033, 0.0, %v1103
        %v1218 = vsel %vm1033, 0.0, %v1106
        %v1219 = vsel %vm1033, 0.0, %v1109
        %v1220 = vsel %vm1033, 0.0, %v1112
        %v1221 = vsel %vm1033, 0.0, %v1115
        %v1222 = vsel %vm1033, 0.0, %v1118
        %v1223 = vsel %vm1033, 0.0, %v1121
        %v1224 = vsel %vm1033, 0.0, %v1124
        %v1225 = vsel %vm1033, 0.0, %v1127
        %vm1226 = vcmask 1046528
        %v1227 = vrot.slane %v905, 1
        %v1228 = vrot.slane %v906, 1
        %v1229 = vsel %vm1226, %v1227, %v1228
        %v1230 = vrot.slane %v907, 1
        %v1231 = vrot.slane %v908, 1
        %v1232 = vsel %vm1226, %v1230, %v1231
        %v1233 = vrot.slane %v909, 1
        %v1234 = vrot.slane %v910, 1
        %v1235 = vsel %vm1226, %v1233, %v1234
        %v1236 = vrot.slane %v911, 1
        %v1237 = vrot.slane %v912, 1
        %v1238 = vsel %vm1226, %v1236, %v1237
        %v1239 = vrot.slane %v913, 1
        %v1240 = vrot.slane %v914, 1
        %v1241 = vsel %vm1226, %v1239, %v1240
        %v1242 = vrot.slane %v915, 1
        %v1243 = vrot.slane %v916, 1
        %v1244 = vsel %vm1226, %v1242, %v1243
        %v1245 = vrot.slane %v917, 1
        %v1246 = vrot.slane %v918, 1
        %v1247 = vsel %vm1226, %v1245, %v1246
        %v1248 = vrot.slane %v919, 1
        %v1249 = vrot.slane %v920, 1
        %v1250 = vsel %vm1226, %v1248, %v1249
        %v1251 = vrot.slane %v921, 1
        %v1252 = vrot.slane %v922, 1
        %v1253 = vsel %vm1226, %v1251, %v1252
        %v1254 = vrot.slane %v923, 1
        %v1255 = vrot.slane %v924, 1
        %v1256 = vsel %vm1226, %v1254, %v1255
        %v1257 = vrot.slane %v925, 1
        %v1258 = vrot.slane %v926, 1
        %v1259 = vsel %vm1226, %v1257, %v1258
        %v1260 = vrot.slane %v927, 1
        %v1261 = vrot.slane %v928, 1
        %v1262 = vsel %vm1226, %v1260, %v1261
        %v1263 = vrot.slane %v929, 1
        %v1264 = vrot.slane %v930, 1
        %v1265 = vsel %vm1226, %v1263, %v1264
        %v1266 = vrot.slane %v931, 1
        %v1267 = vrot.slane %v932, 1
        %v1268 = vsel %vm1226, %v1266, %v1267
        %v1269 = vrot.slane %v933, 1
        %v1270 = vrot.slane %v934, 1
        %v1271 = vsel %vm1226, %v1269, %v1270
        %v1272 = vrot.slane %v935, 1
        %v1273 = vrot.slane %v936, 1
        %v1274 = vsel %vm1226, %v1272, %v1273
        %v1275 = vrot.slane %v937, 1
        %v1276 = vrot.slane %v938, 1
        %v1277 = vsel %vm1226, %v1275, %v1276
        %v1278 = vrot.slane %v939, 1
        %v1279 = vrot.slane %v940, 1
        %v1280 = vsel %vm1226, %v1278, %v1279
        %v1281 = vrot.slane %v941, 1
        %v1282 = vrot.slane %v942, 1
        %v1283 = vsel %vm1226, %v1281, %v1282
        %v1284 = vrot.slane %v943, 1
        %v1285 = vrot.slane %v944, 1
        %v1286 = vsel %vm1226, %v1284, %v1285
        %v1287 = vrot.slane %v945, 1
        %v1288 = vrot.slane %v946, 1
        %v1289 = vsel %vm1226, %v1287, %v1288
        %v1290 = vrot.slane %v947, 1
        %v1291 = vrot.slane %v948, 1
        %v1292 = vsel %vm1226, %v1290, %v1291
        %v1293 = vrot.slane %v949, 1
        %v1294 = vrot.slane %v950, 1
        %v1295 = vsel %vm1226, %v1293, %v1294
        %v1296 = vrot.slane %v951, 1
        %v1297 = vrot.slane %v952, 1
        %v1298 = vsel %vm1226, %v1296, %v1297
        %v1299 = vrot.slane %v953, 1
        %v1300 = vrot.slane %v954, 1
        %v1301 = vsel %vm1226, %v1299, %v1300
        %v1302 = vrot.slane %v955, 1
        %v1303 = vrot.slane %v956, 1
        %v1304 = vsel %vm1226, %v1302, %v1303
        %v1305 = vrot.slane %v957, 1
        %v1306 = vrot.slane %v958, 1
        %v1307 = vsel %vm1226, %v1305, %v1306
        %v1308 = vrot.slane %v959, 1
        %v1309 = vrot.slane %v960, 1
        %v1310 = vsel %vm1226, %v1308, %v1309
        %v1311 = vrot.slane %v961, 1
        %v1312 = vrot.slane %v962, 1
        %v1313 = vsel %vm1226, %v1311, %v1312
        %v1314 = vrot.slane %v963, 1
        %v1315 = vrot.slane %v964, 1
        %v1316 = vsel %vm1226, %v1314, %v1315
        %v1317 = vrot.slane %v965, 1
        %v1318 = vrot.slane %v966, 1
        %v1319 = vsel %vm1226, %v1317, %v1318
        %v1320 = vrot.slane %v967, 1
        %v1321 = vrot.slane %v968, 1
        %v1322 = vsel %vm1226, %v1320, %v1321
        %v1387 = vsel %vm1226, %v1228, 0.0
        %v1388 = vsel %vm1226, %v1231, 0.0
        %v1389 = vsel %vm1226, %v1234, 0.0
        %v1390 = vsel %vm1226, %v1237, 0.0
        %v1391 = vsel %vm1226, %v1240, 0.0
        %v1392 = vsel %vm1226, %v1243, 0.0
        %v1393 = vsel %vm1226, %v1246, 0.0
        %v1394 = vsel %vm1226, %v1249, 0.0
        %v1395 = vsel %vm1226, %v1252, 0.0
        %v1396 = vsel %vm1226, %v1255, 0.0
        %v1397 = vsel %vm1226, %v1258, 0.0
        %v1398 = vsel %vm1226, %v1261, 0.0
        %v1399 = vsel %vm1226, %v1264, 0.0
        %v1400 = vsel %vm1226, %v1267, 0.0
        %v1401 = vsel %vm1226, %v1270, 0.0
        %v1402 = vsel %vm1226, %v1273, 0.0
        %v1403 = vsel %vm1226, %v1276, 0.0
        %v1404 = vsel %vm1226, %v1279, 0.0
        %v1405 = vsel %vm1226, %v1282, 0.0
        %v1406 = vsel %vm1226, %v1285, 0.0
        %v1407 = vsel %vm1226, %v1288, 0.0
        %v1408 = vsel %vm1226, %v1291, 0.0
        %v1409 = vsel %vm1226, %v1294, 0.0
        %v1410 = vsel %vm1226, %v1297, 0.0
        %v1411 = vsel %vm1226, %v1300, 0.0
        %v1412 = vsel %vm1226, %v1303, 0.0
        %v1413 = vsel %vm1226, %v1306, 0.0
        %v1414 = vsel %vm1226, %v1309, 0.0
        %v1415 = vsel %vm1226, %v1312, 0.0
        %v1416 = vsel %vm1226, %v1315, 0.0
        %v1417 = vsel %vm1226, %v1318, 0.0
        %v1418 = vsel %vm1226, %v1321, 0.0
        %v1419 = vlaneseq
        %v1420 = vshrl.u32 %v1419, 7
        %v1421 = vsub.s32 0, %v1420
        %v1422 = vrot.slane %v338, %v1421
        %v1423 = vmul.f32 %v1194, %v1422
        %v1424 = vmul.f32 %v1036, %v1422
        %v1425 = vmul.f32 %v1195, %v1422
        %v1426 = vmul.f32 %v1039, %v1422
        %v1427 = vmul.f32 %v1196, %v1422
        %v1428 = vmul.f32 %v1042, %v1422
        %v1429 = vmul.f32 %v1197, %v1422
        %v1430 = vmul.f32 %v1045, %v1422
        %v1431 = vmul.f32 %v1198, %v1422
        %v1432 = vmul.f32 %v1048, %v1422
        %v1433 = vmul.f32 %v1199, %v1422
        %v1434 = vmul.f32 %v1051, %v1422
        %v1435 = vmul.f32 %v1200, %v1422
        %v1436 = vmul.f32 %v1054, %v1422
        %v1437 = vmul.f32 %v1201, %v1422
        %v1438 = vmul.f32 %v1057, %v1422
        %v1439 = vmul.f32 %v1202, %v1422
        %v1440 = vmul.f32 %v1060, %v1422
        %v1441 = vmul.f32 %v1203, %v1422
        %v1442 = vmul.f32 %v1063, %v1422
        %v1443 = vmul.f32 %v1204, %v1422
        %v1444 = vmul.f32 %v1066, %v1422
        %v1445 = vmul.f32 %v1205, %v1422
        %v1446 = vmul.f32 %v1069, %v1422
        %v1447 = vmul.f32 %v1206, %v1422
        %v1448 = vmul.f32 %v1072, %v1422
        %v1449 = vmul.f32 %v1207, %v1422
        %v1450 = vmul.f32 %v1075, %v1422
        %v1451 = vmul.f32 %v1208, %v1422
        %v1452 = vmul.f32 %v1078, %v1422
        %v1453 = vmul.f32 %v1209, %v1422
        %v1454 = vmul.f32 %v1081, %v1422
        %v1455 = vmul.f32 %v1210, %v1422
        %v1456 = vmul.f32 %v1084, %v1422
        %v1457 = vmul.f32 %v1211, %v1422
        %v1458 = vmul.f32 %v1087, %v1422
        %v1459 = vmul.f32 %v1212, %v1422
        %v1460 = vmul.f32 %v1090, %v1422
        %v1461 = vmul.f32 %v1213, %v1422
        %v1462 = vmul.f32 %v1093, %v1422
        %v1463 = vmul.f32 %v1214, %v1422
        %v1464 = vmul.f32 %v1096, %v1422
        %v1465 = vmul.f32 %v1215, %v1422
        %v1466 = vmul.f32 %v1099, %v1422
        %v1467 = vmul.f32 %v1216, %v1422
        %v1468 = vmul.f32 %v1102, %v1422
        %v1469 = vmul.f32 %v1217, %v1422
        %v1470 = vmul.f32 %v1105, %v1422
        %v1471 = vmul.f32 %v1218, %v1422
        %v1472 = vmul.f32 %v1108, %v1422
        %v1473 = vmul.f32 %v1219, %v1422
        %v1474 = vmul.f32 %v1111, %v1422
        %v1475 = vmul.f32 %v1220, %v1422
        %v1476 = vmul.f32 %v1114, %v1422
        %v1477 = vmul.f32 %v1221, %v1422
        %v1478 = vmul.f32 %v1117, %v1422
        %v1479 = vmul.f32 %v1222, %v1422
        %v1480 = vmul.f32 %v1120, %v1422
        %v1481 = vmul.f32 %v1223, %v1422
        %v1482 = vmul.f32 %v1123, %v1422
        %v1483 = vmul.f32 %v1224, %v1422
        %v1484 = vmul.f32 %v1126, %v1422
        %v1485 = vmul.f32 %v1225, %v1422
        %v1486 = vmul.f32 %v1129, %v1422
        %v1487 = vlaneseq
        %v1488 = vshrl.u32 %v1487, 7
        %v1489 = vsub.s32 1, %v1488
        %v1490 = vrot.slane %v338, %v1489
        %v1491 = vmul.f32 %v905, %v1490
        %v1492 = vmul.f32 %v906, %v1490
        %v1493 = vmul.f32 %v907, %v1490
        %v1494 = vmul.f32 %v908, %v1490
        %v1495 = vmul.f32 %v909, %v1490
        %v1496 = vmul.f32 %v910, %v1490
        %v1497 = vmul.f32 %v911, %v1490
        %v1498 = vmul.f32 %v912, %v1490
        %v1499 = vmul.f32 %v913, %v1490
        %v1500 = vmul.f32 %v914, %v1490
        %v1501 = vmul.f32 %v915, %v1490
        %v1502 = vmul.f32 %v916, %v1490
        %v1503 = vmul.f32 %v917, %v1490
        %v1504 = vmul.f32 %v918, %v1490
        %v1505 = vmul.f32 %v919, %v1490
        %v1506 = vmul.f32 %v920, %v1490
        %v1507 = vmul.f32 %v921, %v1490
        %v1508 = vmul.f32 %v922, %v1490
        %v1509 = vmul.f32 %v923, %v1490
        %v1510 = vmul.f32 %v924, %v1490
        %v1511 = vmul.f32 %v925, %v1490
        %v1512 = vmul.f32 %v926, %v1490
        %v1513 = vmul.f32 %v927, %v1490
        %v1514 = vmul.f32 %v928, %v1490
        %v1515 = vmul.f32 %v929, %v1490
        %v1516 = vmul.f32 %v930, %v1490
        %v1517 = vmul.f32 %v931, %v1490
        %v1518 = vmul.f32 %v932, %v1490
        %v1519 = vmul.f32 %v933, %v1490
        %v1520 = vmul.f32 %v934, %v1490
        %v1521 = vmul.f32 %v935, %v1490
        %v1522 = vmul.f32 %v936, %v1490
        %v1523 = vmul.f32 %v937, %v1490
        %v1524 = vmul.f32 %v938, %v1490
        %v1525 = vmul.f32 %v939, %v1490
        %v1526 = vmul.f32 %v940, %v1490
        %v1527 = vmul.f32 %v941, %v1490
        %v1528 = vmul.f32 %v942, %v1490
        %v1529 = vmul.f32 %v943, %v1490
        %v1530 = vmul.f32 %v944, %v1490
        %v1531 = vmul.f32 %v945, %v1490
        %v1532 = vmul.f32 %v946, %v1490
        %v1533 = vmul.f32 %v947, %v1490
        %v1534 = vmul.f32 %v948, %v1490
        %v1535 = vmul.f32 %v949, %v1490
        %v1536 = vmul.f32 %v950, %v1490
        %v1537 = vmul.f32 %v951, %v1490
        %v1538 = vmul.f32 %v952, %v1490
        %v1539 = vmul.f32 %v953, %v1490
        %v1540 = vmul.f32 %v954, %v1490
        %v1541 = vmul.f32 %v955, %v1490
        %v1542 = vmul.f32 %v956, %v1490
        %v1543 = vmul.f32 %v957, %v1490
        %v1544 = vmul.f32 %v958, %v1490
        %v1545 = vmul.f32 %v959, %v1490
        %v1546 = vmul.f32 %v960, %v1490
        %v1547 = vmul.f32 %v961, %v1490
        %v1548 = vmul.f32 %v962, %v1490
        %v1549 = vmul.f32 %v963, %v1490
        %v1550 = vmul.f32 %v964, %v1490
        %v1551 = vmul.f32 %v965, %v1490
        %v1552 = vmul.f32 %v966, %v1490
        %v1553 = vmul.f32 %v967, %v1490
        %v1554 = vmul.f32 %v968, %v1490
        %v1555 = vadd.f32 %v1423, %v1491
        %v1556 = vadd.f32 %v1424, %v1492
        %v1557 = vadd.f32 %v1425, %v1493
        %v1558 = vadd.f32 %v1426, %v1494
        %v1559 = vadd.f32 %v1427, %v1495
        %v1560 = vadd.f32 %v1428, %v1496
        %v1561 = vadd.f32 %v1429, %v1497
        %v1562 = vadd.f32 %v1430, %v1498
        %v1563 = vadd.f32 %v1431, %v1499
        %v1564 = vadd.f32 %v1432, %v1500
        %v1565 = vadd.f32 %v1433, %v1501
        %v1566 = vadd.f32 %v1434, %v1502
        %v1567 = vadd.f32 %v1435, %v1503
        %v1568 = vadd.f32 %v1436, %v1504
        %v1569 = vadd.f32 %v1437, %v1505
        %v1570 = vadd.f32 %v1438, %v1506
        %v1571 = vadd.f32 %v1439, %v1507
        %v1572 = vadd.f32 %v1440, %v1508
        %v1573 = vadd.f32 %v1441, %v1509
        %v1574 = vadd.f32 %v1442, %v1510
        %v1575 = vadd.f32 %v1443, %v1511
        %v1576 = vadd.f32 %v1444, %v1512
        %v1577 = vadd.f32 %v1445, %v1513
        %v1578 = vadd.f32 %v1446, %v1514
        %v1579 = vadd.f32 %v1447, %v1515
        %v1580 = vadd.f32 %v1448, %v1516
        %v1581 = vadd.f32 %v1449, %v1517
        %v1582 = vadd.f32 %v1450, %v1518
        %v1583 = vadd.f32 %v1451, %v1519
        %v1584 = vadd.f32 %v1452, %v1520
        %v1585 = vadd.f32 %v1453, %v1521
        %v1586 = vadd.f32 %v1454, %v1522
        %v1587 = vadd.f32 %v1455, %v1523
        %v1588 = vadd.f32 %v1456, %v1524
        %v1589 = vadd.f32 %v1457, %v1525
        %v1590 = vadd.f32 %v1458, %v1526
        %v1591 = vadd.f32 %v1459, %v1527
        %v1592 = vadd.f32 %v1460, %v1528
        %v1593 = vadd.f32 %v1461, %v1529
        %v1594 = vadd.f32 %v1462, %v1530
        %v1595 = vadd.f32 %v1463, %v1531
        %v1596 = vadd.f32 %v1464, %v1532
        %v1597 = vadd.f32 %v1465, %v1533
        %v1598 = vadd.f32 %v1466, %v1534
        %v1599 = vadd.f32 %v1467, %v1535
        %v1600 = vadd.f32 %v1468, %v1536
        %v1601 = vadd.f32 %v1469, %v1537
        %v1602 = vadd.f32 %v1470, %v1538
        %v1603 = vadd.f32 %v1471, %v1539
        %v1604 = vadd.f32 %v1472, %v1540
        %v1605 = vadd.f32 %v1473, %v1541
        %v1606 = vadd.f32 %v1474, %v1542
        %v1607 = vadd.f32 %v1475, %v1543
        %v1608 = vadd.f32 %v1476, %v1544
        %v1609 = vadd.f32 %v1477, %v1545
        %v1610 = vadd.f32 %v1478, %v1546
        %v1611 = vadd.f32 %v1479, %v1547
        %v1612 = vadd.f32 %v1480, %v1548
        %v1613 = vadd.f32 %v1481, %v1549
        %v1614 = vadd.f32 %v1482, %v1550
        %v1615 = vadd.f32 %v1483, %v1551
        %v1616 = vadd.f32 %v1484, %v1552
        %v1617 = vadd.f32 %v1485, %v1553
        %v1618 = vadd.f32 %v1486, %v1554
        %v1619 = vlaneseq
        %v1620 = vshrl.u32 %v1619, 7
        %v1621 = vsub.s32 2, %v1620
        %v1622 = vrot.slane %v338, %v1621
        %v1623 = vmul.f32 %v1229, %v1622
        %v1624 = vmul.f32 %v1387, %v1622
        %v1625 = vmul.f32 %v1232, %v1622
        %v1626 = vmul.f32 %v1388, %v1622
        %v1627 = vmul.f32 %v1235, %v1622
        %v1628 = vmul.f32 %v1389, %v1622
        %v1629 = vmul.f32 %v1238, %v1622
        %v1630 = vmul.f32 %v1390, %v1622
        %v1631 = vmul.f32 %v1241, %v1622
        %v1632 = vmul.f32 %v1391, %v1622
        %v1633 = vmul.f32 %v1244, %v1622
        %v1634 = vmul.f32 %v1392, %v1622
        %v1635 = vmul.f32 %v1247, %v1622
        %v1636 = vmul.f32 %v1393, %v1622
        %v1637 = vmul.f32 %v1250, %v1622
        %v1638 = vmul.f32 %v1394, %v1622
        %v1639 = vmul.f32 %v1253, %v1622
        %v1640 = vmul.f32 %v1395, %v1622
        %v1641 = vmul.f32 %v1256, %v1622
        %v1642 = vmul.f32 %v1396, %v1622
        %v1643 = vmul.f32 %v1259, %v1622
        %v1644 = vmul.f32 %v1397, %v1622
        %v1645 = vmul.f32 %v1262, %v1622
        %v1646 = vmul.f32 %v1398, %v1622
        %v1647 = vmul.f32 %v1265, %v1622
        %v1648 = vmul.f32 %v1399, %v1622
        %v1649 = vmul.f32 %v1268, %v1622
        %v1650 = vmul.f32 %v1400, %v1622
        %v1651 = vmul.f32 %v1271, %v1622
        %v1652 = vmul.f32 %v1401, %v1622
        %v1653 = vmul.f32 %v1274, %v1622
        %v1654 = vmul.f32 %v1402, %v1622
        %v1655 = vmul.f32 %v1277, %v1622
        %v1656 = vmul.f32 %v1403, %v1622
        %v1657 = vmul.f32 %v1280, %v1622
        %v1658 = vmul.f32 %v1404, %v1622
        %v1659 = vmul.f32 %v1283, %v1622
        %v1660 = vmul.f32 %v1405, %v1622
        %v1661 = vmul.f32 %v1286, %v1622
        %v1662 = vmul.f32 %v1406, %v1622
        %v1663 = vmul.f32 %v1289, %v1622
        %v1664 = vmul.f32 %v1407, %v1622
        %v1665 = vmul.f32 %v1292, %v1622
        %v1666 = vmul.f32 %v1408, %v1622
        %v1667 = vmul.f32 %v1295, %v1622
        %v1668 = vmul.f32 %v1409, %v1622
        %v1669 = vmul.f32 %v1298, %v1622
        %v1670 = vmul.f32 %v1410, %v1622
        %v1671 = vmul.f32 %v1301, %v1622
        %v1672 = vmul.f32 %v1411, %v1622
        %v1673 = vmul.f32 %v1304, %v1622
        %v1674 = vmul.f32 %v1412, %v1622
        %v1675 = vmul.f32 %v1307, %v1622
        %v1676 = vmul.f32 %v1413, %v1622
        %v1677 = vmul.f32 %v1310, %v1622
        %v1678 = vmul.f32 %v1414, %v1622
        %v1679 = vmul.f32 %v1313, %v1622
        %v1680 = vmul.f32 %v1415, %v1622
        %v1681 = vmul.f32 %v1316, %v1622
        %v1682 = vmul.f32 %v1416, %v1622
        %v1683 = vmul.f32 %v1319, %v1622
        %v1684 = vmul.f32 %v1417, %v1622
        %v1685 = vmul.f32 %v1322, %v1622
        %v1686 = vmul.f32 %v1418, %v1622
        %v1687 = vadd.f32 %v1555, %v1623
        %v1688 = vadd.f32 %v1556, %v1624
        %v1689 = vadd.f32 %v1557, %v1625
        %v1690 = vadd.f32 %v1558, %v1626
        %v1691 = vadd.f32 %v1559, %v1627
        %v1692 = vadd.f32 %v1560, %v1628
        %v1693 = vadd.f32 %v1561, %v1629
        %v1694 = vadd.f32 %v1562, %v1630
        %v1695 = vadd.f32 %v1563, %v1631
        %v1696 = vadd.f32 %v1564, %v1632
        %v1697 = vadd.f32 %v1565, %v1633
        %v1698 = vadd.f32 %v1566, %v1634
        %v1699 = vadd.f32 %v1567, %v1635
        %v1700 = vadd.f32 %v1568, %v1636
        %v1701 = vadd.f32 %v1569, %v1637
        %v1702 = vadd.f32 %v1570, %v1638
        %v1703 = vadd.f32 %v1571, %v1639
        %v1704 = vadd.f32 %v1572, %v1640
        %v1705 = vadd.f32 %v1573, %v1641
        %v1706 = vadd.f32 %v1574, %v1642
        %v1707 = vadd.f32 %v1575, %v1643
        %v1708 = vadd.f32 %v1576, %v1644
        %v1709 = vadd.f32 %v1577, %v1645
        %v1710 = vadd.f32 %v1578, %v1646
        %v1711 = vadd.f32 %v1579, %v1647
        %v1712 = vadd.f32 %v1580, %v1648
        %v1713 = vadd.f32 %v1581, %v1649
        %v1714 = vadd.f32 %v1582, %v1650
        %v1715 = vadd.f32 %v1583, %v1651
        %v1716 = vadd.f32 %v1584, %v1652
        %v1717 = vadd.f32 %v1585, %v1653
        %v1718 = vadd.f32 %v1586, %v1654
        %v1719 = vadd.f32 %v1587, %v1655
        %v1720 = vadd.f32 %v1588, %v1656
        %v1721 = vadd.f32 %v1589, %v1657
        %v1722 = vadd.f32 %v1590, %v1658
        %v1723 = vadd.f32 %v1591, %v1659
        %v1724 = vadd.f32 %v1592, %v1660
        %v1725 = vadd.f32 %v1593, %v1661
        %v1726 = vadd.f32 %v1594, %v1662
        %v1727 = vadd.f32 %v1595, %v1663
        %v1728 = vadd.f32 %v1596, %v1664
        %v1729 = vadd.f32 %v1597, %v1665
        %v1730 = vadd.f32 %v1598, %v1666
        %v1731 = vadd.f32 %v1599, %v1667
        %v1732 = vadd.f32 %v1600, %v1668
        %v1733 = vadd.f32 %v1601, %v1669
        %v1734 = vadd.f32 %v1602, %v1670
        %v1735 = vadd.f32 %v1603, %v1671
        %v1736 = vadd.f32 %v1604, %v1672
        %v1737 = vadd.f32 %v1605, %v1673
        %v1738 = vadd.f32 %v1606, %v1674
        %v1739 = vadd.f32 %v1607, %v1675
        %v1740 = vadd.f32 %v1608, %v1676
        %v1741 = vadd.f32 %v1609, %v1677
        %v1742 = vadd.f32 %v1610, %v1678
        %v1743 = vadd.f32 %v1611, %v1679
        %v1744 = vadd.f32 %v1612, %v1680
        %v1745 = vadd.f32 %v1613, %v1681
        %v1746 = vadd.f32 %v1614, %v1682
        %v1747 = vadd.f32 %v1615, %v1683
        %v1748 = vadd.f32 %v1616, %v1684
        %v1749 = vadd.f32 %v1617, %v1685
        %v1750 = vadd.f32 %v1618, %v1686
        %v1751 = vlaneseq
        %v1752 = vshrl.u32 %v1751, 7
        %v1753 = vsub.s32 2, %v1752
        %v1754 = vrot.slane %v340, %v1753
        %v1755 = vmul.f32 %v1687, %v1754
        %v1756 = vmul.f32 %v1688, %v1754
        %v1757 = vmul.f32 %v1689, %v1754
        %v1758 = vmul.f32 %v1690, %v1754
        %v1759 = vmul.f32 %v1691, %v1754
        %v1760 = vmul.f32 %v1692, %v1754
        %v1761 = vmul.f32 %v1693, %v1754
        %v1762 = vmul.f32 %v1694, %v1754
        %v1763 = vmul.f32 %v1695, %v1754
        %v1764 = vmul.f32 %v1696, %v1754
        %v1765 = vmul.f32 %v1697, %v1754
        %v1766 = vmul.f32 %v1698, %v1754
        %v1767 = vmul.f32 %v1699, %v1754
        %v1768 = vmul.f32 %v1700, %v1754
        %v1769 = vmul.f32 %v1701, %v1754
        %v1770 = vmul.f32 %v1702, %v1754
        %v1771 = vmul.f32 %v1703, %v1754
        %v1772 = vmul.f32 %v1704, %v1754
        %v1773 = vmul.f32 %v1705, %v1754
        %v1774 = vmul.f32 %v1706, %v1754
        %v1775 = vmul.f32 %v1707, %v1754
        %v1776 = vmul.f32 %v1708, %v1754
        %v1777 = vmul.f32 %v1709, %v1754
        %v1778 = vmul.f32 %v1710, %v1754
        %v1779 = vmul.f32 %v1711, %v1754
        %v1780 = vmul.f32 %v1712, %v1754
        %v1781 = vmul.f32 %v1713, %v1754
        %v1782 = vmul.f32 %v1714, %v1754
        %v1783 = vmul.f32 %v1715, %v1754
        %v1784 = vmul.f32 %v1716, %v1754
        %v1785 = vmul.f32 %v1717, %v1754
        %v1786 = vmul.f32 %v1718, %v1754
        %v1787 = vmul.f32 %v1719, %v1754
        %v1788 = vmul.f32 %v1720, %v1754
        %v1789 = vmul.f32 %v1721, %v1754
        %v1790 = vmul.f32 %v1722, %v1754
        %v1791 = vmul.f32 %v1723, %v1754
        %v1792 = vmul.f32 %v1724, %v1754
        %v1793 = vmul.f32 %v1725, %v1754
        %v1794 = vmul.f32 %v1726, %v1754
        %v1795 = vmul.f32 %v1727, %v1754
        %v1796 = vmul.f32 %v1728, %v1754
        %v1797 = vmul.f32 %v1729, %v1754
        %v1798 = vmul.f32 %v1730, %v1754
        %v1799 = vmul.f32 %v1731, %v1754
        %v1800 = vmul.f32 %v1732, %v1754
        %v1801 = vmul.f32 %v1733, %v1754
        %v1802 = vmul.f32 %v1734, %v1754
        %v1803 = vmul.f32 %v1735, %v1754
        %v1804 = vmul.f32 %v1736, %v1754
        %v1805 = vmul.f32 %v1737, %v1754
        %v1806 = vmul.f32 %v1738, %v1754
        %v1807 = vmul.f32 %v1739, %v1754
        %v1808 = vmul.f32 %v1740, %v1754
        %v1809 = vmul.f32 %v1741, %v1754
        %v1810 = vmul.f32 %v1742, %v1754
        %v1811 = vmul.f32 %v1743, %v1754
        %v1812 = vmul.f32 %v1744, %v1754
        %v1813 = vmul.f32 %v1745, %v1754
        %v1814 = vmul.f32 %v1746, %v1754
        %v1815 = vmul.f32 %v1747, %v1754
        %v1816 = vmul.f32 %v1748, %v1754
        %v1817 = vmul.f32 %v1749, %v1754
        %v1818 = vmul.f32 %v1750, %v1754
        %v1819 = vlaneseq
        %v1820 = vshrl.u32 %v1819, 7
        %v1821 = vsub.s32 3, %v1820
        %v1822 = vrot.slane %v340, %v1821
        %v1823 = vadd.f32 %v1755, %v1822
        %v1824 = vadd.f32 %v1756, %v1822
        %v1825 = vadd.f32 %v1757, %v1822
        %v1826 = vadd.f32 %v1758, %v1822
        %v1827 = vadd.f32 %v1759, %v1822
        %v1828 = vadd.f32 %v1760, %v1822
        %v1829 = vadd.f32 %v1761, %v1822
        %v1830 = vadd.f32 %v1762, %v1822
        %v1831 = vadd.f32 %v1763, %v1822
        %v1832 = vadd.f32 %v1764, %v1822
        %v1833 = vadd.f32 %v1765, %v1822
        %v1834 = vadd.f32 %v1766, %v1822
        %v1835 = vadd.f32 %v1767, %v1822
        %v1836 = vadd.f32 %v1768, %v1822
        %v1837 = vadd.f32 %v1769, %v1822
        %v1838 = vadd.f32 %v1770, %v1822
        %v1839 = vadd.f32 %v1771, %v1822
        %v1840 = vadd.f32 %v1772, %v1822
        %v1841 = vadd.f32 %v1773, %v1822
        %v1842 = vadd.f32 %v1774, %v1822
        %v1843 = vadd.f32 %v1775, %v1822
        %v1844 = vadd.f32 %v1776, %v1822
        %v1845 = vadd.f32 %v1777, %v1822
        %v1846 = vadd.f32 %v1778, %v1822
        %v1847 = vadd.f32 %v1779, %v1822
        %v1848 = vadd.f32 %v1780, %v1822
        %v1849 = vadd.f32 %v1781, %v1822
        %v1850 = vadd.f32 %v1782, %v1822
        %v1851 = vadd.f32 %v1783, %v1822
        %v1852 = vadd.f32 %v1784, %v1822
        %v1853 = vadd.f32 %v1785, %v1822
        %v1854 = vadd.f32 %v1786, %v1822
        %v1855 = vadd.f32 %v1787, %v1822
        %v1856 = vadd.f32 %v1788, %v1822
        %v1857 = vadd.f32 %v1789, %v1822
        %v1858 = vadd.f32 %v1790, %v1822
        %v1859 = vadd.f32 %v1791, %v1822
        %v1860 = vadd.f32 %v1792, %v1822
        %v1861 = vadd.f32 %v1793, %v1822
        %v1862 = vadd.f32 %v1794, %v1822
        %v1863 = vadd.f32 %v1795, %v1822
        %v1864 = vadd.f32 %v1796, %v1822
        %v1865 = vadd.f32 %v1797, %v1822
        %v1866 = vadd.f32 %v1798, %v1822
        %v1867 = vadd.f32 %v1799, %v1822
        %v1868 = vadd.f32 %v1800, %v1822
        %v1869 = vadd.f32 %v1801, %v1822
        %v1870 = vadd.f32 %v1802, %v1822
        %v1871 = vadd.f32 %v1803, %v1822
        %v1872 = vadd.f32 %v1804, %v1822
        %v1873 = vadd.f32 %v1805, %v1822
        %v1874 = vadd.f32 %v1806, %v1822
        %v1875 = vadd.f32 %v1807, %v1822
        %v1876 = vadd.f32 %v1808, %v1822
        %v1877 = vadd.f32 %v1809, %v1822
        %v1878 = vadd.f32 %v1810, %v1822
        %v1879 = vadd.f32 %v1811, %v1822
        %v1880 = vadd.f32 %v1812, %v1822
        %v1881 = vadd.f32 %v1813, %v1822
        %v1882 = vadd.f32 %v1814, %v1822
        %v1883 = vadd.f32 %v1815, %v1822
        %v1884 = vadd.f32 %v1816, %v1822
        %v1885 = vadd.f32 %v1817, %v1822
        %v1886 = vadd.f32 %v1818, %v1822
        %v1887 = vmax.f32 %v1823, 0.0
        %v1888 = vmax.f32 %v1824, 0.0
        %v1889 = vmax.f32 %v1825, 0.0
        %v1890 = vmax.f32 %v1826, 0.0
        %v1891 = vmax.f32 %v1827, 0.0
        %v1892 = vmax.f32 %v1828, 0.0
        %v1893 = vmax.f32 %v1829, 0.0
        %v1894 = vmax.f32 %v1830, 0.0
        %v1895 = vmax.f32 %v1831, 0.0
        %v1896 = vmax.f32 %v1832, 0.0
        %v1897 = vmax.f32 %v1833, 0.0
        %v1898 = vmax.f32 %v1834, 0.0
        %v1899 = vmax.f32 %v1835, 0.0
        %v1900 = vmax.f32 %v1836, 0.0
        %v1901 = vmax.f32 %v1837, 0.0
        %v1902 = vmax.f32 %v1838, 0.0
        %v1903 = vmax.f32 %v1839, 0.0
        %v1904 = vmax.f32 %v1840, 0.0
        %v1905 = vmax.f32 %v1841, 0.0
        %v1906 = vmax.f32 %v1842, 0.0
        %v1907 = vmax.f32 %v1843, 0.0
        %v1908 = vmax.f32 %v1844, 0.0
        %v1909 = vmax.f32 %v1845, 0.0
        %v1910 = vmax.f32 %v1846, 0.0
        %v1911 = vmax.f32 %v1847, 0.0
        %v1912 = vmax.f32 %v1848, 0.0
        %v1913 = vmax.f32 %v1849, 0.0
        %v1914 = vmax.f32 %v1850, 0.0
        %v1915 = vmax.f32 %v1851, 0.0
        %v1916 = vmax.f32 %v1852, 0.0
        %v1917 = vmax.f32 %v1853, 0.0
        %v1918 = vmax.f32 %v1854, 0.0
        %v1919 = vmax.f32 %v1855, 0.0
        %v1920 = vmax.f32 %v1856, 0.0
        %v1921 = vmax.f32 %v1857, 0.0
        %v1922 = vmax.f32 %v1858, 0.0
        %v1923 = vmax.f32 %v1859, 0.0
        %v1924 = vmax.f32 %v1860, 0.0
        %v1925 = vmax.f32 %v1861, 0.0
        %v1926 = vmax.f32 %v1862, 0.0
        %v1927 = vmax.f32 %v1863, 0.0
        %v1928 = vmax.f32 %v1864, 0.0
        %v1929 = vmax.f32 %v1865, 0.0
        %v1930 = vmax.f32 %v1866, 0.0
        %v1931 = vmax.f32 %v1867, 0.0
        %v1932 = vmax.f32 %v1868, 0.0
        %v1933 = vmax.f32 %v1869, 0.0
        %v1934 = vmax.f32 %v1870, 0.0
        %v1935 = vmax.f32 %v1871, 0.0
        %v1936 = vmax.f32 %v1872, 0.0
        %v1937 = vmax.f32 %v1873, 0.0
        %v1938 = vmax.f32 %v1874, 0.0
        %v1939 = vmax.f32 %v1875, 0.0
        %v1940 = vmax.f32 %v1876, 0.0
        %v1941 = vmax.f32 %v1877, 0.0
        %v1942 = vmax.f32 %v1878, 0.0
        %v1943 = vmax.f32 %v1879, 0.0
        %v1944 = vmax.f32 %v1880, 0.0
        %v1945 = vmax.f32 %v1881, 0.0
        %v1946 = vmax.f32 %v1882, 0.0
        %v1947 = vmax.f32 %v1883, 0.0
        %v1948 = vmax.f32 %v1884, 0.0
        %v1949 = vmax.f32 %v1885, 0.0
        %v1950 = vmax.f32 %v1886, 0.0
        %v1951 = vpack.c.bf16 %v1888, %v1887
        %v1952 = vpack.c.bf16 %v1890, %v1889
        %v1953 = vpack.c.bf16 %v1892, %v1891
        %v1954 = vpack.c.bf16 %v1894, %v1893
        %v1955 = vpack.c.bf16 %v1896, %v1895
        %v1956 = vpack.c.bf16 %v1898, %v1897
        %v1957 = vpack.c.bf16 %v1900, %v1899
        %v1958 = vpack.c.bf16 %v1902, %v1901
        %v1959 = vpack.c.bf16 %v1904, %v1903
        %v1960 = vpack.c.bf16 %v1906, %v1905
        %v1961 = vpack.c.bf16 %v1908, %v1907
        %v1962 = vpack.c.bf16 %v1910, %v1909
        %v1963 = vpack.c.bf16 %v1912, %v1911
        %v1964 = vpack.c.bf16 %v1914, %v1913
        %v1965 = vpack.c.bf16 %v1916, %v1915
        %v1966 = vpack.c.bf16 %v1918, %v1917
        %v1967 = vpack.c.bf16 %v1920, %v1919
        %v1968 = vpack.c.bf16 %v1922, %v1921
        %v1969 = vpack.c.bf16 %v1924, %v1923
        %v1970 = vpack.c.bf16 %v1926, %v1925
        %v1971 = vpack.c.bf16 %v1928, %v1927
        %v1972 = vpack.c.bf16 %v1930, %v1929
        %v1973 = vpack.c.bf16 %v1932, %v1931
        %v1974 = vpack.c.bf16 %v1934, %v1933
        %v1975 = vpack.c.bf16 %v1936, %v1935
        %v1976 = vpack.c.bf16 %v1938, %v1937
        %v1977 = vpack.c.bf16 %v1940, %v1939
        %v1978 = vpack.c.bf16 %v1942, %v1941
        %v1979 = vpack.c.bf16 %v1944, %v1943
        %v1980 = vpack.c.bf16 %v1946, %v1945
        %v1981 = vpack.c.bf16 %v1948, %v1947
        %v1982 = vpack.c.bf16 %v1950, %v1949
        %vm1983 = vcmask 31744
        %1984 = vst.msk [vmem:[#allocation2] sm:$0xff] %vm1983, %v1951
        %1985 = vst.msk [vmem:[#allocation2 + $0x8] sm:$0xff] %vm1983, %v1952
        %1986 = vst.msk [vmem:[#allocation2 + $0x10] sm:$0xff] %vm1983, %v1953
        %1987 = vst.msk [vmem:[#allocation2 + $0x18] sm:$0xff] %vm1983, %v1954
        %1988 = vst.msk [vmem:[#allocation2 + $0x20] sm:$0xff] %vm1983, %v1955
        %1989 = vst.msk [vmem:[#allocation2 + $0x28] sm:$0xff] %vm1983, %v1956
        %1990 = vst.msk [vmem:[#allocation2 + $0x30] sm:$0xff] %vm1983, %v1957
        %1991 = vst.msk [vmem:[#allocation2 + $0x38] sm:$0xff] %vm1983, %v1958
        %1992 = vst.msk [vmem:[#allocation2 + $0x40] sm:$0xff] %vm1983, %v1959
        %1993 = vst.msk [vmem:[#allocation2 + $0x48] sm:$0xff] %vm1983, %v1960
        %1994 = vst.msk [vmem:[#allocation2 + $0x50] sm:$0xff] %vm1983, %v1961
        %1995 = vst.msk [vmem:[#allocation2 + $0x58] sm:$0xff] %vm1983, %v1962
        %1996 = vst.msk [vmem:[#allocation2 + $0x60] sm:$0xff] %vm1983, %v1963
        %1997 = vst.msk [vmem:[#allocation2 + $0x68] sm:$0xff] %vm1983, %v1964
        %1998 = vst.msk [vmem:[#allocation2 + $0x70] sm:$0xff] %vm1983, %v1965
        %1999 = vst.msk [vmem:[#allocation2 + $0x78] sm:$0xff] %vm1983, %v1966
        %2000 = vst.msk [vmem:[#allocation2 + $0x80] sm:$0xff] %vm1983, %v1967
        %2001 = vst.msk [vmem:[#allocation2 + $0x88] sm:$0xff] %vm1983, %v1968
        %2002 = vst.msk [vmem:[#allocation2 + $0x90] sm:$0xff] %vm1983, %v1969
        %2003 = vst.msk [vmem:[#allocation2 + $0x98] sm:$0xff] %vm1983, %v1970
        %2004 = vst.msk [vmem:[#allocation2 + $0xa0] sm:$0xff] %vm1983, %v1971
        %2005 = vst.msk [vmem:[#allocation2 + $0xa8] sm:$0xff] %vm1983, %v1972
        %2006 = vst.msk [vmem:[#allocation2 + $0xb0] sm:$0xff] %vm1983, %v1973
        %2007 = vst.msk [vmem:[#allocation2 + $0xb8] sm:$0xff] %vm1983, %v1974
        %2008 = vst.msk [vmem:[#allocation2 + $0xc0] sm:$0xff] %vm1983, %v1975
        %2009 = vst.msk [vmem:[#allocation2 + $0xc8] sm:$0xff] %vm1983, %v1976
        %2010 = vst.msk [vmem:[#allocation2 + $0xd0] sm:$0xff] %vm1983, %v1977
        %2011 = vst.msk [vmem:[#allocation2 + $0xd8] sm:$0xff] %vm1983, %v1978
        %2012 = vst.msk [vmem:[#allocation2 + $0xe0] sm:$0xff] %vm1983, %v1979
        %2013 = vst.msk [vmem:[#allocation2 + $0xe8] sm:$0xff] %vm1983, %v1980
        %2014 = vst.msk [vmem:[#allocation2 + $0xf0] sm:$0xff] %vm1983, %v1981
        %2015 = vst.msk [vmem:[#allocation2 + $0xf8] sm:$0xff] %vm1983, %v1982
        %v2016 = vlaneseq
        %v2017 = vshrl.u32 %v2016, 7
        %v2018 = vsub.s32 3, %v2017
        %v2019 = vrot.slane %v338, %v2018
        %v2020 = vmul.f32 %v1194, %v2019
        %v2021 = vmul.f32 %v1036, %v2019
        %v2022 = vmul.f32 %v1195, %v2019
        %v2023 = vmul.f32 %v1039, %v2019
        %v2024 = vmul.f32 %v1196, %v2019
        %v2025 = vmul.f32 %v1042, %v2019
        %v2026 = vmul.f32 %v1197, %v2019
        %v2027 = vmul.f32 %v1045, %v2019
        %v2028 = vmul.f32 %v1198, %v2019
        %v2029 = vmul.f32 %v1048, %v2019
        %v2030 = vmul.f32 %v1199, %v2019
        %v2031 = vmul.f32 %v1051, %v2019
        %v2032 = vmul.f32 %v1200, %v2019
        %v2033 = vmul.f32 %v1054, %v2019
        %v2034 = vmul.f32 %v1201, %v2019
        %v2035 = vmul.f32 %v1057, %v2019
        %v2036 = vmul.f32 %v1202, %v2019
        %v2037 = vmul.f32 %v1060, %v2019
        %v2038 = vmul.f32 %v1203, %v2019
        %v2039 = vmul.f32 %v1063, %v2019
        %v2040 = vmul.f32 %v1204, %v2019
        %v2041 = vmul.f32 %v1066, %v2019
        %v2042 = vmul.f32 %v1205, %v2019
        %v2043 = vmul.f32 %v1069, %v2019
        %v2044 = vmul.f32 %v1206, %v2019
        %v2045 = vmul.f32 %v1072, %v2019
        %v2046 = vmul.f32 %v1207, %v2019
        %v2047 = vmul.f32 %v1075, %v2019
        %v2048 = vmul.f32 %v1208, %v2019
        %v2049 = vmul.f32 %v1078, %v2019
        %v2050 = vmul.f32 %v1209, %v2019
        %v2051 = vmul.f32 %v1081, %v2019
        %v2052 = vmul.f32 %v1210, %v2019
        %v2053 = vmul.f32 %v1084, %v2019
        %v2054 = vmul.f32 %v1211, %v2019
        %v2055 = vmul.f32 %v1087, %v2019
        %v2056 = vmul.f32 %v1212, %v2019
        %v2057 = vmul.f32 %v1090, %v2019
        %v2058 = vmul.f32 %v1213, %v2019
        %v2059 = vmul.f32 %v1093, %v2019
        %v2060 = vmul.f32 %v1214, %v2019
        %v2061 = vmul.f32 %v1096, %v2019
        %v2062 = vmul.f32 %v1215, %v2019
        %v2063 = vmul.f32 %v1099, %v2019
        %v2064 = vmul.f32 %v1216, %v2019
        %v2065 = vmul.f32 %v1102, %v2019
        %v2066 = vmul.f32 %v1217, %v2019
        %v2067 = vmul.f32 %v1105, %v2019
        %v2068 = vmul.f32 %v1218, %v2019
        %v2069 = vmul.f32 %v1108, %v2019
        %v2070 = vmul.f32 %v1219, %v2019
        %v2071 = vmul.f32 %v1111, %v2019
        %v2072 = vmul.f32 %v1220, %v2019
        %v2073 = vmul.f32 %v1114, %v2019
        %v2074 = vmul.f32 %v1221, %v2019
        %v2075 = vmul.f32 %v1117, %v2019
        %v2076 = vmul.f32 %v1222, %v2019
        %v2077 = vmul.f32 %v1120, %v2019
        %v2078 = vmul.f32 %v1223, %v2019
        %v2079 = vmul.f32 %v1123, %v2019
        %v2080 = vmul.f32 %v1224, %v2019
        %v2081 = vmul.f32 %v1126, %v2019
        %v2082 = vmul.f32 %v1225, %v2019
        %v2083 = vmul.f32 %v1129, %v2019
        %v2084 = vlaneseq
        %v2085 = vshrl.u32 %v2084, 7
        %v2086 = vsub.s32 4, %v2085
        %v2087 = vrot.slane %v338, %v2086
        %v2088 = vmul.f32 %v905, %v2087
        %v2089 = vmul.f32 %v906, %v2087
        %v2090 = vmul.f32 %v907, %v2087
        %v2091 = vmul.f32 %v908, %v2087
        %v2092 = vmul.f32 %v909, %v2087
        %v2093 = vmul.f32 %v910, %v2087
        %v2094 = vmul.f32 %v911, %v2087
        %v2095 = vmul.f32 %v912, %v2087
        %v2096 = vmul.f32 %v913, %v2087
        %v2097 = vmul.f32 %v914, %v2087
        %v2098 = vmul.f32 %v915, %v2087
        %v2099 = vmul.f32 %v916, %v2087
        %v2100 = vmul.f32 %v917, %v2087
        %v2101 = vmul.f32 %v918, %v2087
        %v2102 = vmul.f32 %v919, %v2087
        %v2103 = vmul.f32 %v920, %v2087
        %v2104 = vmul.f32 %v921, %v2087
        %v2105 = vmul.f32 %v922, %v2087
        %v2106 = vmul.f32 %v923, %v2087
        %v2107 = vmul.f32 %v924, %v2087
        %v2108 = vmul.f32 %v925, %v2087
        %v2109 = vmul.f32 %v926, %v2087
        %v2110 = vmul.f32 %v927, %v2087
        %v2111 = vmul.f32 %v928, %v2087
        %v2112 = vmul.f32 %v929, %v2087
        %v2113 = vmul.f32 %v930, %v2087
        %v2114 = vmul.f32 %v931, %v2087
        %v2115 = vmul.f32 %v932, %v2087
        %v2116 = vmul.f32 %v933, %v2087
        %v2117 = vmul.f32 %v934, %v2087
        %v2118 = vmul.f32 %v935, %v2087
        %v2119 = vmul.f32 %v936, %v2087
        %v2120 = vmul.f32 %v937, %v2087
        %v2121 = vmul.f32 %v938, %v2087
        %v2122 = vmul.f32 %v939, %v2087
        %v2123 = vmul.f32 %v940, %v2087
        %v2124 = vmul.f32 %v941, %v2087
        %v2125 = vmul.f32 %v942, %v2087
        %v2126 = vmul.f32 %v943, %v2087
        %v2127 = vmul.f32 %v944, %v2087
        %v2128 = vmul.f32 %v945, %v2087
        %v2129 = vmul.f32 %v946, %v2087
        %v2130 = vmul.f32 %v947, %v2087
        %v2131 = vmul.f32 %v948, %v2087
        %v2132 = vmul.f32 %v949, %v2087
        %v2133 = vmul.f32 %v950, %v2087
        %v2134 = vmul.f32 %v951, %v2087
        %v2135 = vmul.f32 %v952, %v2087
        %v2136 = vmul.f32 %v953, %v2087
        %v2137 = vmul.f32 %v954, %v2087
        %v2138 = vmul.f32 %v955, %v2087
        %v2139 = vmul.f32 %v956, %v2087
        %v2140 = vmul.f32 %v957, %v2087
        %v2141 = vmul.f32 %v958, %v2087
        %v2142 = vmul.f32 %v959, %v2087
        %v2143 = vmul.f32 %v960, %v2087
        %v2144 = vmul.f32 %v961, %v2087
        %v2145 = vmul.f32 %v962, %v2087
        %v2146 = vmul.f32 %v963, %v2087
        %v2147 = vmul.f32 %v964, %v2087
        %v2148 = vmul.f32 %v965, %v2087
        %v2149 = vmul.f32 %v966, %v2087
        %v2150 = vmul.f32 %v967, %v2087
        %v2151 = vmul.f32 %v968, %v2087
        %v2152 = vadd.f32 %v2020, %v2088
        %v2153 = vadd.f32 %v2021, %v2089
        %v2154 = vadd.f32 %v2022, %v2090
        %v2155 = vadd.f32 %v2023, %v2091
        %v2156 = vadd.f32 %v2024, %v2092
        %v2157 = vadd.f32 %v2025, %v2093
        %v2158 = vadd.f32 %v2026, %v2094
        %v2159 = vadd.f32 %v2027, %v2095
        %v2160 = vadd.f32 %v2028, %v2096
        %v2161 = vadd.f32 %v2029, %v2097
        %v2162 = vadd.f32 %v2030, %v2098
        %v2163 = vadd.f32 %v2031, %v2099
        %v2164 = vadd.f32 %v2032, %v2100
        %v2165 = vadd.f32 %v2033, %v2101
        %v2166 = vadd.f32 %v2034, %v2102
        %v2167 = vadd.f32 %v2035, %v2103
        %v2168 = vadd.f32 %v2036, %v2104
        %v2169 = vadd.f32 %v2037, %v2105
        %v2170 = vadd.f32 %v2038, %v2106
        %v2171 = vadd.f32 %v2039, %v2107
        %v2172 = vadd.f32 %v2040, %v2108
        %v2173 = vadd.f32 %v2041, %v2109
        %v2174 = vadd.f32 %v2042, %v2110
        %v2175 = vadd.f32 %v2043, %v2111
        %v2176 = vadd.f32 %v2044, %v2112
        %v2177 = vadd.f32 %v2045, %v2113
        %v2178 = vadd.f32 %v2046, %v2114
        %v2179 = vadd.f32 %v2047, %v2115
        %v2180 = vadd.f32 %v2048, %v2116
        %v2181 = vadd.f32 %v2049, %v2117
        %v2182 = vadd.f32 %v2050, %v2118
        %v2183 = vadd.f32 %v2051, %v2119
        %v2184 = vadd.f32 %v2052, %v2120
        %v2185 = vadd.f32 %v2053, %v2121
        %v2186 = vadd.f32 %v2054, %v2122
        %v2187 = vadd.f32 %v2055, %v2123
        %v2188 = vadd.f32 %v2056, %v2124
        %v2189 = vadd.f32 %v2057, %v2125
        %v2190 = vadd.f32 %v2058, %v2126
        %v2191 = vadd.f32 %v2059, %v2127
        %v2192 = vadd.f32 %v2060, %v2128
        %v2193 = vadd.f32 %v2061, %v2129
        %v2194 = vadd.f32 %v2062, %v2130
        %v2195 = vadd.f32 %v2063, %v2131
        %v2196 = vadd.f32 %v2064, %v2132
        %v2197 = vadd.f32 %v2065, %v2133
        %v2198 = vadd.f32 %v2066, %v2134
        %v2199 = vadd.f32 %v2067, %v2135
        %v2200 = vadd.f32 %v2068, %v2136
        %v2201 = vadd.f32 %v2069, %v2137
        %v2202 = vadd.f32 %v2070, %v2138
        %v2203 = vadd.f32 %v2071, %v2139
        %v2204 = vadd.f32 %v2072, %v2140
        %v2205 = vadd.f32 %v2073, %v2141
        %v2206 = vadd.f32 %v2074, %v2142
        %v2207 = vadd.f32 %v2075, %v2143
        %v2208 = vadd.f32 %v2076, %v2144
        %v2209 = vadd.f32 %v2077, %v2145
        %v2210 = vadd.f32 %v2078, %v2146
        %v2211 = vadd.f32 %v2079, %v2147
        %v2212 = vadd.f32 %v2080, %v2148
        %v2213 = vadd.f32 %v2081, %v2149
        %v2214 = vadd.f32 %v2082, %v2150
        %v2215 = vadd.f32 %v2083, %v2151
        %v2216 = vlaneseq
        %v2217 = vshrl.u32 %v2216, 7
        %v2218 = vsub.s32 5, %v2217
        %v2219 = vrot.slane %v338, %v2218
        %v2220 = vmul.f32 %v1229, %v2219
        %v2221 = vmul.f32 %v1387, %v2219
        %v2222 = vmul.f32 %v1232, %v2219
        %v2223 = vmul.f32 %v1388, %v2219
        %v2224 = vmul.f32 %v1235, %v2219
        %v2225 = vmul.f32 %v1389, %v2219
        %v2226 = vmul.f32 %v1238, %v2219
        %v2227 = vmul.f32 %v1390, %v2219
        %v2228 = vmul.f32 %v1241, %v2219
        %v2229 = vmul.f32 %v1391, %v2219
        %v2230 = vmul.f32 %v1244, %v2219
        %v2231 = vmul.f32 %v1392, %v2219
        %v2232 = vmul.f32 %v1247, %v2219
        %v2233 = vmul.f32 %v1393, %v2219
        %v2234 = vmul.f32 %v1250, %v2219
        %v2235 = vmul.f32 %v1394, %v2219
        %v2236 = vmul.f32 %v1253, %v2219
        %v2237 = vmul.f32 %v1395, %v2219
        %v2238 = vmul.f32 %v1256, %v2219
        %v2239 = vmul.f32 %v1396, %v2219
        %v2240 = vmul.f32 %v1259, %v2219
        %v2241 = vmul.f32 %v1397, %v2219
        %v2242 = vmul.f32 %v1262, %v2219
        %v2243 = vmul.f32 %v1398, %v2219
        %v2244 = vmul.f32 %v1265, %v2219
        %v2245 = vmul.f32 %v1399, %v2219
        %v2246 = vmul.f32 %v1268, %v2219
        %v2247 = vmul.f32 %v1400, %v2219
        %v2248 = vmul.f32 %v1271, %v2219
        %v2249 = vmul.f32 %v1401, %v2219
        %v2250 = vmul.f32 %v1274, %v2219
        %v2251 = vmul.f32 %v1402, %v2219
        %v2252 = vmul.f32 %v1277, %v2219
        %v2253 = vmul.f32 %v1403, %v2219
        %v2254 = vmul.f32 %v1280, %v2219
        %v2255 = vmul.f32 %v1404, %v2219
        %v2256 = vmul.f32 %v1283, %v2219
        %v2257 = vmul.f32 %v1405, %v2219
        %v2258 = vmul.f32 %v1286, %v2219
        %v2259 = vmul.f32 %v1406, %v2219
        %v2260 = vmul.f32 %v1289, %v2219
        %v2261 = vmul.f32 %v1407, %v2219
        %v2262 = vmul.f32 %v1292, %v2219
        %v2263 = vmul.f32 %v1408, %v2219
        %v2264 = vmul.f32 %v1295, %v2219
        %v2265 = vmul.f32 %v1409, %v2219
        %v2266 = vmul.f32 %v1298, %v2219
        %v2267 = vmul.f32 %v1410, %v2219
        %v2268 = vmul.f32 %v1301, %v2219
        %v2269 = vmul.f32 %v1411, %v2219
        %v2270 = vmul.f32 %v1304, %v2219
        %v2271 = vmul.f32 %v1412, %v2219
        %v2272 = vmul.f32 %v1307, %v2219
        %v2273 = vmul.f32 %v1413, %v2219
        %v2274 = vmul.f32 %v1310, %v2219
        %v2275 = vmul.f32 %v1414, %v2219
        %v2276 = vmul.f32 %v1313, %v2219
        %v2277 = vmul.f32 %v1415, %v2219
        %v2278 = vmul.f32 %v1316, %v2219
        %v2279 = vmul.f32 %v1416, %v2219
        %v2280 = vmul.f32 %v1319, %v2219
        %v2281 = vmul.f32 %v1417, %v2219
        %v2282 = vmul.f32 %v1322, %v2219
        %v2283 = vmul.f32 %v1418, %v2219
        %v2284 = vadd.f32 %v2152, %v2220
        %v2285 = vadd.f32 %v2153, %v2221
        %v2286 = vadd.f32 %v2154, %v2222
        %v2287 = vadd.f32 %v2155, %v2223
        %v2288 = vadd.f32 %v2156, %v2224
        %v2289 = vadd.f32 %v2157, %v2225
        %v2290 = vadd.f32 %v2158, %v2226
        %v2291 = vadd.f32 %v2159, %v2227
        %v2292 = vadd.f32 %v2160, %v2228
        %v2293 = vadd.f32 %v2161, %v2229
        %v2294 = vadd.f32 %v2162, %v2230
        %v2295 = vadd.f32 %v2163, %v2231
        %v2296 = vadd.f32 %v2164, %v2232
        %v2297 = vadd.f32 %v2165, %v2233
        %v2298 = vadd.f32 %v2166, %v2234
        %v2299 = vadd.f32 %v2167, %v2235
        %v2300 = vadd.f32 %v2168, %v2236
        %v2301 = vadd.f32 %v2169, %v2237
        %v2302 = vadd.f32 %v2170, %v2238
        %v2303 = vadd.f32 %v2171, %v2239
        %v2304 = vadd.f32 %v2172, %v2240
        %v2305 = vadd.f32 %v2173, %v2241
        %v2306 = vadd.f32 %v2174, %v2242
        %v2307 = vadd.f32 %v2175, %v2243
        %v2308 = vadd.f32 %v2176, %v2244
        %v2309 = vadd.f32 %v2177, %v2245
        %v2310 = vadd.f32 %v2178, %v2246
        %v2311 = vadd.f32 %v2179, %v2247
        %v2312 = vadd.f32 %v2180, %v2248
        %v2313 = vadd.f32 %v2181, %v2249
        %v2314 = vadd.f32 %v2182, %v2250
        %v2315 = vadd.f32 %v2183, %v2251
        %v2316 = vadd.f32 %v2184, %v2252
        %v2317 = vadd.f32 %v2185, %v2253
        %v2318 = vadd.f32 %v2186, %v2254
        %v2319 = vadd.f32 %v2187, %v2255
        %v2320 = vadd.f32 %v2188, %v2256
        %v2321 = vadd.f32 %v2189, %v2257
        %v2322 = vadd.f32 %v2190, %v2258
        %v2323 = vadd.f32 %v2191, %v2259
        %v2324 = vadd.f32 %v2192, %v2260
        %v2325 = vadd.f32 %v2193, %v2261
        %v2326 = vadd.f32 %v2194, %v2262
        %v2327 = vadd.f32 %v2195, %v2263
        %v2328 = vadd.f32 %v2196, %v2264
        %v2329 = vadd.f32 %v2197, %v2265
        %v2330 = vadd.f32 %v2198, %v2266
        %v2331 = vadd.f32 %v2199, %v2267
        %v2332 = vadd.f32 %v2200, %v2268
        %v2333 = vadd.f32 %v2201, %v2269
        %v2334 = vadd.f32 %v2202, %v2270
        %v2335 = vadd.f32 %v2203, %v2271
        %v2336 = vadd.f32 %v2204, %v2272
        %v2337 = vadd.f32 %v2205, %v2273
        %v2338 = vadd.f32 %v2206, %v2274
        %v2339 = vadd.f32 %v2207, %v2275
        %v2340 = vadd.f32 %v2208, %v2276
        %v2341 = vadd.f32 %v2209, %v2277
        %v2342 = vadd.f32 %v2210, %v2278
        %v2343 = vadd.f32 %v2211, %v2279
        %v2344 = vadd.f32 %v2212, %v2280
        %v2345 = vadd.f32 %v2213, %v2281
        %v2346 = vadd.f32 %v2214, %v2282
        %v2347 = vadd.f32 %v2215, %v2283
        %v2348 = vlaneseq
        %v2349 = vshrl.u32 %v2348, 7
        %v2350 = vsub.s32 4, %v2349
        %v2351 = vrot.slane %v340, %v2350
        %v2352 = vmul.f32 %v2284, %v2351
        %v2353 = vmul.f32 %v2285, %v2351
        %v2354 = vmul.f32 %v2286, %v2351
        %v2355 = vmul.f32 %v2287, %v2351
        %v2356 = vmul.f32 %v2288, %v2351
        %v2357 = vmul.f32 %v2289, %v2351
        %v2358 = vmul.f32 %v2290, %v2351
        %v2359 = vmul.f32 %v2291, %v2351
        %v2360 = vmul.f32 %v2292, %v2351
        %v2361 = vmul.f32 %v2293, %v2351
        %v2362 = vmul.f32 %v2294, %v2351
        %v2363 = vmul.f32 %v2295, %v2351
        %v2364 = vmul.f32 %v2296, %v2351
        %v2365 = vmul.f32 %v2297, %v2351
        %v2366 = vmul.f32 %v2298, %v2351
        %v2367 = vmul.f32 %v2299, %v2351
        %v2368 = vmul.f32 %v2300, %v2351
        %v2369 = vmul.f32 %v2301, %v2351
        %v2370 = vmul.f32 %v2302, %v2351
        %v2371 = vmul.f32 %v2303, %v2351
        %v2372 = vmul.f32 %v2304, %v2351
        %v2373 = vmul.f32 %v2305, %v2351
        %v2374 = vmul.f32 %v2306, %v2351
        %v2375 = vmul.f32 %v2307, %v2351
        %v2376 = vmul.f32 %v2308, %v2351
        %v2377 = vmul.f32 %v2309, %v2351
        %v2378 = vmul.f32 %v2310, %v2351
        %v2379 = vmul.f32 %v2311, %v2351
        %v2380 = vmul.f32 %v2312, %v2351
        %v2381 = vmul.f32 %v2313, %v2351
        %v2382 = vmul.f32 %v2314, %v2351
        %v2383 = vmul.f32 %v2315, %v2351
        %v2384 = vmul.f32 %v2316, %v2351
        %v2385 = vmul.f32 %v2317, %v2351
        %v2386 = vmul.f32 %v2318, %v2351
        %v2387 = vmul.f32 %v2319, %v2351
        %v2388 = vmul.f32 %v2320, %v2351
        %v2389 = vmul.f32 %v2321, %v2351
        %v2390 = vmul.f32 %v2322, %v2351
        %v2391 = vmul.f32 %v2323, %v2351
        %v2392 = vmul.f32 %v2324, %v2351
        %v2393 = vmul.f32 %v2325, %v2351
        %v2394 = vmul.f32 %v2326, %v2351
        %v2395 = vmul.f32 %v2327, %v2351
        %v2396 = vmul.f32 %v2328, %v2351
        %v2397 = vmul.f32 %v2329, %v2351
        %v2398 = vmul.f32 %v2330, %v2351
        %v2399 = vmul.f32 %v2331, %v2351
        %v2400 = vmul.f32 %v2332, %v2351
        %v2401 = vmul.f32 %v2333, %v2351
        %v2402 = vmul.f32 %v2334, %v2351
        %v2403 = vmul.f32 %v2335, %v2351
        %v2404 = vmul.f32 %v2336, %v2351
        %v2405 = vmul.f32 %v2337, %v2351
        %v2406 = vmul.f32 %v2338, %v2351
        %v2407 = vmul.f32 %v2339, %v2351
        %v2408 = vmul.f32 %v2340, %v2351
        %v2409 = vmul.f32 %v2341, %v2351
        %v2410 = vmul.f32 %v2342, %v2351
        %v2411 = vmul.f32 %v2343, %v2351
        %v2412 = vmul.f32 %v2344, %v2351
        %v2413 = vmul.f32 %v2345, %v2351
        %v2414 = vmul.f32 %v2346, %v2351
        %v2415 = vmul.f32 %v2347, %v2351
        %v2416 = vlaneseq
        %v2417 = vshrl.u32 %v2416, 7
        %v2418 = vsub.s32 5, %v2417
        %v2419 = vrot.slane %v340, %v2418
        %v2420 = vadd.f32 %v2352, %v2419
        %v2421 = vadd.f32 %v2353, %v2419
        %v2422 = vadd.f32 %v2354, %v2419
        %v2423 = vadd.f32 %v2355, %v2419
        %v2424 = vadd.f32 %v2356, %v2419
        %v2425 = vadd.f32 %v2357, %v2419
        %v2426 = vadd.f32 %v2358, %v2419
        %v2427 = vadd.f32 %v2359, %v2419
        %v2428 = vadd.f32 %v2360, %v2419
        %v2429 = vadd.f32 %v2361, %v2419
        %v2430 = vadd.f32 %v2362, %v2419
        %v2431 = vadd.f32 %v2363, %v2419
        %v2432 = vadd.f32 %v2364, %v2419
        %v2433 = vadd.f32 %v2365, %v2419
        %v2434 = vadd.f32 %v2366, %v2419
        %v2435 = vadd.f32 %v2367, %v2419
        %v2436 = vadd.f32 %v2368, %v2419
        %v2437 = vadd.f32 %v2369, %v2419
        %v2438 = vadd.f32 %v2370, %v2419
        %v2439 = vadd.f32 %v2371, %v2419
        %v2440 = vadd.f32 %v2372, %v2419
        %v2441 = vadd.f32 %v2373, %v2419
        %v2442 = vadd.f32 %v2374, %v2419
        %v2443 = vadd.f32 %v2375, %v2419
        %v2444 = vadd.f32 %v2376, %v2419
        %v2445 = vadd.f32 %v2377, %v2419
        %v2446 = vadd.f32 %v2378, %v2419
        %v2447 = vadd.f32 %v2379, %v2419
        %v2448 = vadd.f32 %v2380, %v2419
        %v2449 = vadd.f32 %v2381, %v2419
        %v2450 = vadd.f32 %v2382, %v2419
        %v2451 = vadd.f32 %v2383, %v2419
        %v2452 = vadd.f32 %v2384, %v2419
        %v2453 = vadd.f32 %v2385, %v2419
        %v2454 = vadd.f32 %v2386, %v2419
        %v2455 = vadd.f32 %v2387, %v2419
        %v2456 = vadd.f32 %v2388, %v2419
        %v2457 = vadd.f32 %v2389, %v2419
        %v2458 = vadd.f32 %v2390, %v2419
        %v2459 = vadd.f32 %v2391, %v2419
        %v2460 = vadd.f32 %v2392, %v2419
        %v2461 = vadd.f32 %v2393, %v2419
        %v2462 = vadd.f32 %v2394, %v2419
        %v2463 = vadd.f32 %v2395, %v2419
        %v2464 = vadd.f32 %v2396, %v2419
        %v2465 = vadd.f32 %v2397, %v2419
        %v2466 = vadd.f32 %v2398, %v2419
        %v2467 = vadd.f32 %v2399, %v2419
        %v2468 = vadd.f32 %v2400, %v2419
        %v2469 = vadd.f32 %v2401, %v2419
        %v2470 = vadd.f32 %v2402, %v2419
        %v2471 = vadd.f32 %v2403, %v2419
        %v2472 = vadd.f32 %v2404, %v2419
        %v2473 = vadd.f32 %v2405, %v2419
        %v2474 = vadd.f32 %v2406, %v2419
        %v2475 = vadd.f32 %v2407, %v2419
        %v2476 = vadd.f32 %v2408, %v2419
        %v2477 = vadd.f32 %v2409, %v2419
        %v2478 = vadd.f32 %v2410, %v2419
        %v2479 = vadd.f32 %v2411, %v2419
        %v2480 = vadd.f32 %v2412, %v2419
        %v2481 = vadd.f32 %v2413, %v2419
        %v2482 = vadd.f32 %v2414, %v2419
        %v2483 = vadd.f32 %v2415, %v2419
        %v2484 = vmax.f32 %v2420, 0.0
        %v2485 = vmax.f32 %v2421, 0.0
        %v2486 = vmax.f32 %v2422, 0.0
        %v2487 = vmax.f32 %v2423, 0.0
        %v2488 = vmax.f32 %v2424, 0.0
        %v2489 = vmax.f32 %v2425, 0.0
        %v2490 = vmax.f32 %v2426, 0.0
        %v2491 = vmax.f32 %v2427, 0.0
        %v2492 = vmax.f32 %v2428, 0.0
        %v2493 = vmax.f32 %v2429, 0.0
        %v2494 = vmax.f32 %v2430, 0.0
        %v2495 = vmax.f32 %v2431, 0.0
        %v2496 = vmax.f32 %v2432, 0.0
        %v2497 = vmax.f32 %v2433, 0.0
        %v2498 = vmax.f32 %v2434, 0.0
        %v2499 = vmax.f32 %v2435, 0.0
        %v2500 = vmax.f32 %v2436, 0.0
        %v2501 = vmax.f32 %v2437, 0.0
        %v2502 = vmax.f32 %v2438, 0.0
        %v2503 = vmax.f32 %v2439, 0.0
        %v2504 = vmax.f32 %v2440, 0.0
        %v2505 = vmax.f32 %v2441, 0.0
        %v2506 = vmax.f32 %v2442, 0.0
        %v2507 = vmax.f32 %v2443, 0.0
        %v2508 = vmax.f32 %v2444, 0.0
        %v2509 = vmax.f32 %v2445, 0.0
        %v2510 = vmax.f32 %v2446, 0.0
        %v2511 = vmax.f32 %v2447, 0.0
        %v2512 = vmax.f32 %v2448, 0.0
        %v2513 = vmax.f32 %v2449, 0.0
        %v2514 = vmax.f32 %v2450, 0.0
        %v2515 = vmax.f32 %v2451, 0.0
        %v2516 = vmax.f32 %v2452, 0.0
        %v2517 = vmax.f32 %v2453, 0.0
        %v2518 = vmax.f32 %v2454, 0.0
        %v2519 = vmax.f32 %v2455, 0.0
        %v2520 = vmax.f32 %v2456, 0.0
        %v2521 = vmax.f32 %v2457, 0.0
        %v2522 = vmax.f32 %v2458, 0.0
        %v2523 = vmax.f32 %v2459, 0.0
        %v2524 = vmax.f32 %v2460, 0.0
        %v2525 = vmax.f32 %v2461, 0.0
        %v2526 = vmax.f32 %v2462, 0.0
        %v2527 = vmax.f32 %v2463, 0.0
        %v2528 = vmax.f32 %v2464, 0.0
        %v2529 = vmax.f32 %v2465, 0.0
        %v2530 = vmax.f32 %v2466, 0.0
        %v2531 = vmax.f32 %v2467, 0.0
        %v2532 = vmax.f32 %v2468, 0.0
        %v2533 = vmax.f32 %v2469, 0.0
        %v2534 = vmax.f32 %v2470, 0.0
        %v2535 = vmax.f32 %v2471, 0.0
        %v2536 = vmax.f32 %v2472, 0.0
        %v2537 = vmax.f32 %v2473, 0.0
        %v2538 = vmax.f32 %v2474, 0.0
        %v2539 = vmax.f32 %v2475, 0.0
        %v2540 = vmax.f32 %v2476, 0.0
        %v2541 = vmax.f32 %v2477, 0.0
        %v2542 = vmax.f32 %v2478, 0.0
        %v2543 = vmax.f32 %v2479, 0.0
        %v2544 = vmax.f32 %v2480, 0.0
        %v2545 = vmax.f32 %v2481, 0.0
        %v2546 = vmax.f32 %v2482, 0.0
        %v2547 = vmax.f32 %v2483, 0.0
        %v2548 = vpack.c.bf16 %v2485, %v2484
        %v2549 = vpack.c.bf16 %v2487, %v2486
        %v2550 = vpack.c.bf16 %v2489, %v2488
        %v2551 = vpack.c.bf16 %v2491, %v2490
        %v2552 = vpack.c.bf16 %v2493, %v2492
        %v2553 = vpack.c.bf16 %v2495, %v2494
        %v2554 = vpack.c.bf16 %v2497, %v2496
        %v2555 = vpack.c.bf16 %v2499, %v2498
        %v2556 = vpack.c.bf16 %v2501, %v2500
        %v2557 = vpack.c.bf16 %v2503, %v2502
        %v2558 = vpack.c.bf16 %v2505, %v2504
        %v2559 = vpack.c.bf16 %v2507, %v2506
        %v2560 = vpack.c.bf16 %v2509, %v2508
        %v2561 = vpack.c.bf16 %v2511, %v2510
        %v2562 = vpack.c.bf16 %v2513, %v2512
        %v2563 = vpack.c.bf16 %v2515, %v2514
        %v2564 = vpack.c.bf16 %v2517, %v2516
        %v2565 = vpack.c.bf16 %v2519, %v2518
        %v2566 = vpack.c.bf16 %v2521, %v2520
        %v2567 = vpack.c.bf16 %v2523, %v2522
        %v2568 = vpack.c.bf16 %v2525, %v2524
        %v2569 = vpack.c.bf16 %v2527, %v2526
        %v2570 = vpack.c.bf16 %v2529, %v2528
        %v2571 = vpack.c.bf16 %v2531, %v2530
        %v2572 = vpack.c.bf16 %v2533, %v2532
        %v2573 = vpack.c.bf16 %v2535, %v2534
        %v2574 = vpack.c.bf16 %v2537, %v2536
        %v2575 = vpack.c.bf16 %v2539, %v2538
        %v2576 = vpack.c.bf16 %v2541, %v2540
        %v2577 = vpack.c.bf16 %v2543, %v2542
        %v2578 = vpack.c.bf16 %v2545, %v2544
        %v2579 = vpack.c.bf16 %v2547, %v2546
        %2612 = vrot.lane.b32.xlu0 %v2548, 4
        %v2613 = vpop.permute.xlu0 %2612
        %2614 = vrot.lane.b32.xlu0 %v2549, 4
        %v2615 = vpop.permute.xlu0 %2614
        %2616 = vrot.lane.b32.xlu0 %v2550, 4
        %v2617 = vpop.permute.xlu0 %2616
        %2618 = vrot.lane.b32.xlu0 %v2551, 4
        %v2619 = vpop.permute.xlu0 %2618
        %2620 = vrot.lane.b32.xlu0 %v2552, 4
        %v2621 = vpop.permute.xlu0 %2620
        %2622 = vrot.lane.b32.xlu0 %v2553, 4
        %v2623 = vpop.permute.xlu0 %2622
        %2624 = vrot.lane.b32.xlu0 %v2554, 4
        %v2625 = vpop.permute.xlu0 %2624
        %2626 = vrot.lane.b32.xlu0 %v2555, 4
        %v2627 = vpop.permute.xlu0 %2626
        %2628 = vrot.lane.b32.xlu0 %v2556, 4
        %v2629 = vpop.permute.xlu0 %2628
        %2630 = vrot.lane.b32.xlu0 %v2557, 4
        %v2631 = vpop.permute.xlu0 %2630
        %2632 = vrot.lane.b32.xlu0 %v2558, 4
        %v2633 = vpop.permute.xlu0 %2632
        %2634 = vrot.lane.b32.xlu0 %v2559, 4
        %v2635 = vpop.permute.xlu0 %2634
        %2636 = vrot.lane.b32.xlu0 %v2560, 4
        %v2637 = vpop.permute.xlu0 %2636
        %2638 = vrot.lane.b32.xlu0 %v2561, 4
        %v2639 = vpop.permute.xlu0 %2638
        %2640 = vrot.lane.b32.xlu0 %v2562, 4
        %v2641 = vpop.permute.xlu0 %2640
        %2642 = vrot.lane.b32.xlu0 %v2563, 4
        %v2643 = vpop.permute.xlu0 %2642
        %2644 = vrot.lane.b32.xlu0 %v2564, 4
        %v2645 = vpop.permute.xlu0 %2644
        %2646 = vrot.lane.b32.xlu0 %v2565, 4
        %v2647 = vpop.permute.xlu0 %2646
        %2648 = vrot.lane.b32.xlu0 %v2566, 4
        %v2649 = vpop.permute.xlu0 %2648
        %2650 = vrot.lane.b32.xlu0 %v2567, 4
        %v2651 = vpop.permute.xlu0 %2650
        %2652 = vrot.lane.b32.xlu0 %v2568, 4
        %v2653 = vpop.permute.xlu0 %2652
        %2654 = vrot.lane.b32.xlu0 %v2569, 4
        %v2655 = vpop.permute.xlu0 %2654
        %2656 = vrot.lane.b32.xlu0 %v2570, 4
        %v2657 = vpop.permute.xlu0 %2656
        %2658 = vrot.lane.b32.xlu0 %v2571, 4
        %v2659 = vpop.permute.xlu0 %2658
        %2660 = vrot.lane.b32.xlu0 %v2572, 4
        %v2661 = vpop.permute.xlu0 %2660
        %2662 = vrot.lane.b32.xlu0 %v2573, 4
        %v2663 = vpop.permute.xlu0 %2662
        %2664 = vrot.lane.b32.xlu0 %v2574, 4
        %v2665 = vpop.permute.xlu0 %2664
        %2666 = vrot.lane.b32.xlu0 %v2575, 4
        %v2667 = vpop.permute.xlu0 %2666
        %2668 = vrot.lane.b32.xlu0 %v2576, 4
        %v2669 = vpop.permute.xlu0 %2668
        %2670 = vrot.lane.b32.xlu0 %v2577, 4
        %v2671 = vpop.permute.xlu0 %2670
        %2672 = vrot.lane.b32.xlu0 %v2578, 4
        %v2673 = vpop.permute.xlu0 %2672
        %2674 = vrot.lane.b32.xlu0 %v2579, 4
        %v2675 = vpop.permute.xlu0 %2674
        %vm2708 = vcmask 64544
        %2709 = vst.msk [vmem:[#allocation2] sm:$0xff] %vm2708, %v2613
        %2710 = vst.msk [vmem:[#allocation2 + $0x8] sm:$0xff] %vm2708, %v2615
        %2711 = vst.msk [vmem:[#allocation2 + $0x10] sm:$0xff] %vm2708, %v2617
        %2712 = vst.msk [vmem:[#allocation2 + $0x18] sm:$0xff] %vm2708, %v2619
        %2713 = vst.msk [vmem:[#allocation2 + $0x20] sm:$0xff] %vm2708, %v2621
        %2714 = vst.msk [vmem:[#allocation2 + $0x28] sm:$0xff] %vm2708, %v2623
        %2715 = vst.msk [vmem:[#allocation2 + $0x30] sm:$0xff] %vm2708, %v2625
        %2716 = vst.msk [vmem:[#allocation2 + $0x38] sm:$0xff] %vm2708, %v2627
        %2717 = vst.msk [vmem:[#allocation2 + $0x40] sm:$0xff] %vm2708, %v2629
        %2718 = vst.msk [vmem:[#allocation2 + $0x48] sm:$0xff] %vm2708, %v2631
        %2719 = vst.msk [vmem:[#allocation2 + $0x50] sm:$0xff] %vm2708, %v2633
        %2720 = vst.msk [vmem:[#allocation2 + $0x58] sm:$0xff] %vm2708, %v2635
        %2721 = vst.msk [vmem:[#allocation2 + $0x60] sm:$0xff] %vm2708, %v2637
        %2722 = vst.msk [vmem:[#allocation2 + $0x68] sm:$0xff] %vm2708, %v2639
        %2723 = vst.msk [vmem:[#allocation2 + $0x70] sm:$0xff] %vm2708, %v2641
        %2724 = vst.msk [vmem:[#allocation2 + $0x78] sm:$0xff] %vm2708, %v2643
        %2725 = vst.msk [vmem:[#allocation2 + $0x80] sm:$0xff] %vm2708, %v2645
        %2726 = vst.msk [vmem:[#allocation2 + $0x88] sm:$0xff] %vm2708, %v2647
        %2727 = vst.msk [vmem:[#allocation2 + $0x90] sm:$0xff] %vm2708, %v2649
        %2728 = vst.msk [vmem:[#allocation2 + $0x98] sm:$0xff] %vm2708, %v2651
        %2729 = vst.msk [vmem:[#allocation2 + $0xa0] sm:$0xff] %vm2708, %v2653
        %2730 = vst.msk [vmem:[#allocation2 + $0xa8] sm:$0xff] %vm2708, %v2655
        %2731 = vst.msk [vmem:[#allocation2 + $0xb0] sm:$0xff] %vm2708, %v2657
        %2732 = vst.msk [vmem:[#allocation2 + $0xb8] sm:$0xff] %vm2708, %v2659
        %2733 = vst.msk [vmem:[#allocation2 + $0xc0] sm:$0xff] %vm2708, %v2661
        %2734 = vst.msk [vmem:[#allocation2 + $0xc8] sm:$0xff] %vm2708, %v2663
        %2735 = vst.msk [vmem:[#allocation2 + $0xd0] sm:$0xff] %vm2708, %v2665
        %2736 = vst.msk [vmem:[#allocation2 + $0xd8] sm:$0xff] %vm2708, %v2667
        %2737 = vst.msk [vmem:[#allocation2 + $0xe0] sm:$0xff] %vm2708, %v2669
        %2738 = vst.msk [vmem:[#allocation2 + $0xe8] sm:$0xff] %vm2708, %v2671
        %2739 = vst.msk [vmem:[#allocation2 + $0xf0] sm:$0xff] %vm2708, %v2673
        %2740 = vst.msk [vmem:[#allocation2 + $0xf8] sm:$0xff] %vm2708, %v2675
        %v2741 = vlaneseq
        %v2742 = vshrl.u32 %v2741, 7
        %v2743 = vsub.s32 6, %v2742
        %v2744 = vrot.slane %v338, %v2743
        %v2745 = vmul.f32 %v2744, 0.0
        %v2746 = vmul.f32 %v905, %v2744
        %v2747 = vmul.f32 %v906, %v2744
        %v2748 = vmul.f32 %v907, %v2744
        %v2749 = vmul.f32 %v908, %v2744
        %v2750 = vmul.f32 %v909, %v2744
        %v2751 = vmul.f32 %v910, %v2744
        %v2752 = vmul.f32 %v911, %v2744
        %v2753 = vmul.f32 %v912, %v2744
        %v2754 = vmul.f32 %v913, %v2744
        %v2755 = vmul.f32 %v914, %v2744
        %v2756 = vmul.f32 %v915, %v2744
        %v2757 = vmul.f32 %v916, %v2744
        %v2758 = vmul.f32 %v917, %v2744
        %v2759 = vmul.f32 %v918, %v2744
        %v2760 = vmul.f32 %v919, %v2744
        %v2761 = vmul.f32 %v920, %v2744
        %v2762 = vmul.f32 %v921, %v2744
        %v2763 = vmul.f32 %v922, %v2744
        %v2764 = vmul.f32 %v923, %v2744
        %v2765 = vmul.f32 %v924, %v2744
        %v2766 = vmul.f32 %v925, %v2744
        %v2767 = vmul.f32 %v926, %v2744
        %v2768 = vmul.f32 %v927, %v2744
        %v2769 = vmul.f32 %v928, %v2744
        %v2770 = vmul.f32 %v929, %v2744
        %v2771 = vmul.f32 %v930, %v2744
        %v2772 = vmul.f32 %v931, %v2744
        %v2773 = vmul.f32 %v932, %v2744
        %v2774 = vmul.f32 %v933, %v2744
        %v2775 = vmul.f32 %v934, %v2744
        %v2776 = vmul.f32 %v937, %v2744
        %v2777 = vmul.f32 %v938, %v2744
        %v2778 = vmul.f32 %v939, %v2744
        %v2779 = vmul.f32 %v940, %v2744
        %v2780 = vmul.f32 %v941, %v2744
        %v2781 = vmul.f32 %v942, %v2744
        %v2782 = vmul.f32 %v943, %v2744
        %v2783 = vmul.f32 %v944, %v2744
        %v2784 = vmul.f32 %v945, %v2744
        %v2785 = vmul.f32 %v946, %v2744
        %v2786 = vmul.f32 %v947, %v2744
        %v2787 = vmul.f32 %v948, %v2744
        %v2788 = vmul.f32 %v949, %v2744
        %v2789 = vmul.f32 %v950, %v2744
        %v2790 = vmul.f32 %v951, %v2744
        %v2791 = vmul.f32 %v952, %v2744
        %v2792 = vmul.f32 %v953, %v2744
        %v2793 = vmul.f32 %v954, %v2744
        %v2794 = vmul.f32 %v955, %v2744
        %v2795 = vmul.f32 %v956, %v2744
        %v2796 = vmul.f32 %v957, %v2744
        %v2797 = vmul.f32 %v958, %v2744
        %v2798 = vmul.f32 %v959, %v2744
        %v2799 = vmul.f32 %v960, %v2744
        %v2800 = vmul.f32 %v961, %v2744
        %v2801 = vmul.f32 %v962, %v2744
        %v2802 = vmul.f32 %v963, %v2744
        %v2803 = vmul.f32 %v964, %v2744
        %v2804 = vmul.f32 %v965, %v2744
        %v2805 = vmul.f32 %v966, %v2744
        %v2806 = vlaneseq
        %v2807 = vshrl.u32 %v2806, 7
        %v2808 = vsub.s32 7, %v2807
        %v2809 = vrot.slane %v338, %v2808
        %v2810 = vmul.f32 %v905, %v2809
        %v2811 = vmul.f32 %v906, %v2809
        %v2812 = vmul.f32 %v907, %v2809
        %v2813 = vmul.f32 %v908, %v2809
        %v2814 = vmul.f32 %v909, %v2809
        %v2815 = vmul.f32 %v910, %v2809
        %v2816 = vmul.f32 %v911, %v2809
        %v2817 = vmul.f32 %v912, %v2809
        %v2818 = vmul.f32 %v913, %v2809
        %v2819 = vmul.f32 %v914, %v2809
        %v2820 = vmul.f32 %v915, %v2809
        %v2821 = vmul.f32 %v916, %v2809
        %v2822 = vmul.f32 %v917, %v2809
        %v2823 = vmul.f32 %v918, %v2809
        %v2824 = vmul.f32 %v919, %v2809
        %v2825 = vmul.f32 %v920, %v2809
        %v2826 = vmul.f32 %v921, %v2809
        %v2827 = vmul.f32 %v922, %v2809
        %v2828 = vmul.f32 %v923, %v2809
        %v2829 = vmul.f32 %v924, %v2809
        %v2830 = vmul.f32 %v925, %v2809
        %v2831 = vmul.f32 %v926, %v2809
        %v2832 = vmul.f32 %v927, %v2809
        %v2833 = vmul.f32 %v928, %v2809
        %v2834 = vmul.f32 %v929, %v2809
        %v2835 = vmul.f32 %v930, %v2809
        %v2836 = vmul.f32 %v931, %v2809
        %v2837 = vmul.f32 %v932, %v2809
        %v2838 = vmul.f32 %v933, %v2809
        %v2839 = vmul.f32 %v934, %v2809
        %v2840 = vmul.f32 %v935, %v2809
        %v2841 = vmul.f32 %v936, %v2809
        %v2842 = vmul.f32 %v937, %v2809
        %v2843 = vmul.f32 %v938, %v2809
        %v2844 = vmul.f32 %v939, %v2809
        %v2845 = vmul.f32 %v940, %v2809
        %v2846 = vmul.f32 %v941, %v2809
        %v2847 = vmul.f32 %v942, %v2809
        %v2848 = vmul.f32 %v943, %v2809
        %v2849 = vmul.f32 %v944, %v2809
        %v2850 = vmul.f32 %v945, %v2809
        %v2851 = vmul.f32 %v946, %v2809
        %v2852 = vmul.f32 %v947, %v2809
        %v2853 = vmul.f32 %v948, %v2809
        %v2854 = vmul.f32 %v949, %v2809
        %v2855 = vmul.f32 %v950, %v2809
        %v2856 = vmul.f32 %v951, %v2809
        %v2857 = vmul.f32 %v952, %v2809
        %v2858 = vmul.f32 %v953, %v2809
        %v2859 = vmul.f32 %v954, %v2809
        %v2860 = vmul.f32 %v955, %v2809
        %v2861 = vmul.f32 %v956, %v2809
        %v2862 = vmul.f32 %v957, %v2809
        %v2863 = vmul.f32 %v958, %v2809
        %v2864 = vmul.f32 %v959, %v2809
        %v2865 = vmul.f32 %v960, %v2809
        %v2866 = vmul.f32 %v961, %v2809
        %v2867 = vmul.f32 %v962, %v2809
        %v2868 = vmul.f32 %v963, %v2809
        %v2869 = vmul.f32 %v964, %v2809
        %v2870 = vmul.f32 %v965, %v2809
        %v2871 = vmul.f32 %v966, %v2809
        %v2872 = vmul.f32 %v967, %v2809
        %v2873 = vmul.f32 %v968, %v2809
        %v2874 = vadd.f32 %v2745, %v2810
        %v2875 = vadd.f32 %v2745, %v2811
        %v2876 = vadd.f32 %v2746, %v2812
        %v2877 = vadd.f32 %v2747, %v2813
        %v2878 = vadd.f32 %v2748, %v2814
        %v2879 = vadd.f32 %v2749, %v2815
        %v2880 = vadd.f32 %v2750, %v2816
        %v2881 = vadd.f32 %v2751, %v2817
        %v2882 = vadd.f32 %v2752, %v2818
        %v2883 = vadd.f32 %v2753, %v2819
        %v2884 = vadd.f32 %v2754, %v2820
        %v2885 = vadd.f32 %v2755, %v2821
        %v2886 = vadd.f32 %v2756, %v2822
        %v2887 = vadd.f32 %v2757, %v2823
        %v2888 = vadd.f32 %v2758, %v2824
        %v2889 = vadd.f32 %v2759, %v2825
        %v2890 = vadd.f32 %v2760, %v2826
        %v2891 = vadd.f32 %v2761, %v2827
        %v2892 = vadd.f32 %v2762, %v2828
        %v2893 = vadd.f32 %v2763, %v2829
        %v2894 = vadd.f32 %v2764, %v2830
        %v2895 = vadd.f32 %v2765, %v2831
        %v2896 = vadd.f32 %v2766, %v2832
        %v2897 = vadd.f32 %v2767, %v2833
        %v2898 = vadd.f32 %v2768, %v2834
        %v2899 = vadd.f32 %v2769, %v2835
        %v2900 = vadd.f32 %v2770, %v2836
        %v2901 = vadd.f32 %v2771, %v2837
        %v2902 = vadd.f32 %v2772, %v2838
        %v2903 = vadd.f32 %v2773, %v2839
        %v2904 = vadd.f32 %v2774, %v2840
        %v2905 = vadd.f32 %v2775, %v2841
        %v2906 = vadd.f32 %v2745, %v2842
        %v2907 = vadd.f32 %v2745, %v2843
        %v2908 = vadd.f32 %v2776, %v2844
        %v2909 = vadd.f32 %v2777, %v2845
        %v2910 = vadd.f32 %v2778, %v2846
        %v2911 = vadd.f32 %v2779, %v2847
        %v2912 = vadd.f32 %v2780, %v2848
        %v2913 = vadd.f32 %v2781, %v2849
        %v2914 = vadd.f32 %v2782, %v2850
        %v2915 = vadd.f32 %v2783, %v2851
        %v2916 = vadd.f32 %v2784, %v2852
        %v2917 = vadd.f32 %v2785, %v2853
        %v2918 = vadd.f32 %v2786, %v2854
        %v2919 = vadd.f32 %v2787, %v2855
        %v2920 = vadd.f32 %v2788, %v2856
        %v2921 = vadd.f32 %v2789, %v2857
        %v2922 = vadd.f32 %v2790, %v2858
        %v2923 = vadd.f32 %v2791, %v2859
        %v2924 = vadd.f32 %v2792, %v2860
        %v2925 = vadd.f32 %v2793, %v2861
        %v2926 = vadd.f32 %v2794, %v2862
        %v2927 = vadd.f32 %v2795, %v2863
        %v2928 = vadd.f32 %v2796, %v2864
        %v2929 = vadd.f32 %v2797, %v2865
        %v2930 = vadd.f32 %v2798, %v2866
        %v2931 = vadd.f32 %v2799, %v2867
        %v2932 = vadd.f32 %v2800, %v2868
        %v2933 = vadd.f32 %v2801, %v2869
        %v2934 = vadd.f32 %v2802, %v2870
        %v2935 = vadd.f32 %v2803, %v2871
        %v2936 = vadd.f32 %v2804, %v2872
        %v2937 = vadd.f32 %v2805, %v2873
        %v2938 = vlaneseq
        %v2939 = vshrl.u32 %v2938, 7
        %v2940 = vsub.s32 0, %v2939
        %v2941 = vrot.slane %v339, %v2940
        %v2942 = vmul.f32 %v907, %v2941
        %v2943 = vmul.f32 %v908, %v2941
        %v2944 = vmul.f32 %v909, %v2941
        %v2945 = vmul.f32 %v910, %v2941
        %v2946 = vmul.f32 %v911, %v2941
        %v2947 = vmul.f32 %v912, %v2941
        %v2948 = vmul.f32 %v913, %v2941
        %v2949 = vmul.f32 %v914, %v2941
        %v2950 = vmul.f32 %v915, %v2941
        %v2951 = vmul.f32 %v916, %v2941
        %v2952 = vmul.f32 %v917, %v2941
        %v2953 = vmul.f32 %v918, %v2941
        %v2954 = vmul.f32 %v919, %v2941
        %v2955 = vmul.f32 %v920, %v2941
        %v2956 = vmul.f32 %v921, %v2941
        %v2957 = vmul.f32 %v922, %v2941
        %v2958 = vmul.f32 %v923, %v2941
        %v2959 = vmul.f32 %v924, %v2941
        %v2960 = vmul.f32 %v925, %v2941
        %v2961 = vmul.f32 %v926, %v2941
        %v2962 = vmul.f32 %v927, %v2941
        %v2963 = vmul.f32 %v928, %v2941
        %v2964 = vmul.f32 %v929, %v2941
        %v2965 = vmul.f32 %v930, %v2941
        %v2966 = vmul.f32 %v931, %v2941
        %v2967 = vmul.f32 %v932, %v2941
        %v2968 = vmul.f32 %v933, %v2941
        %v2969 = vmul.f32 %v934, %v2941
        %v2970 = vmul.f32 %v935, %v2941
        %v2971 = vmul.f32 %v936, %v2941
        %v2972 = vmul.f32 %v2941, 0.0
        %v2973 = vmul.f32 %v939, %v2941
        %v2974 = vmul.f32 %v940, %v2941
        %v2975 = vmul.f32 %v941, %v2941
        %v2976 = vmul.f32 %v942, %v2941
        %v2977 = vmul.f32 %v943, %v2941
        %v2978 = vmul.f32 %v944, %v2941
        %v2979 = vmul.f32 %v945, %v2941
        %v2980 = vmul.f32 %v946, %v2941
        %v2981 = vmul.f32 %v947, %v2941
        %v2982 = vmul.f32 %v948, %v2941
        %v2983 = vmul.f32 %v949, %v2941
        %v2984 = vmul.f32 %v950, %v2941
        %v2985 = vmul.f32 %v951, %v2941
        %v2986 = vmul.f32 %v952, %v2941
        %v2987 = vmul.f32 %v953, %v2941
        %v2988 = vmul.f32 %v954, %v2941
        %v2989 = vmul.f32 %v955, %v2941
        %v2990 = vmul.f32 %v956, %v2941
        %v2991 = vmul.f32 %v957, %v2941
        %v2992 = vmul.f32 %v958, %v2941
        %v2993 = vmul.f32 %v959, %v2941
        %v2994 = vmul.f32 %v960, %v2941
        %v2995 = vmul.f32 %v961, %v2941
        %v2996 = vmul.f32 %v962, %v2941
        %v2997 = vmul.f32 %v963, %v2941
        %v2998 = vmul.f32 %v964, %v2941
        %v2999 = vmul.f32 %v965, %v2941
        %v3000 = vmul.f32 %v966, %v2941
        %v3001 = vmul.f32 %v967, %v2941
        %v3002 = vmul.f32 %v968, %v2941
        %v3003 = vadd.f32 %v2874, %v2942
        %v3004 = vadd.f32 %v2875, %v2943
        %v3005 = vadd.f32 %v2876, %v2944
        %v3006 = vadd.f32 %v2877, %v2945
        %v3007 = vadd.f32 %v2878, %v2946
        %v3008 = vadd.f32 %v2879, %v2947
        %v3009 = vadd.f32 %v2880, %v2948
        %v3010 = vadd.f32 %v2881, %v2949
        %v3011 = vadd.f32 %v2882, %v2950
        %v3012 = vadd.f32 %v2883, %v2951
        %v3013 = vadd.f32 %v2884, %v2952
        %v3014 = vadd.f32 %v2885, %v2953
        %v3015 = vadd.f32 %v2886, %v2954
        %v3016 = vadd.f32 %v2887, %v2955
        %v3017 = vadd.f32 %v2888, %v2956
        %v3018 = vadd.f32 %v2889, %v2957
        %v3019 = vadd.f32 %v2890, %v2958
        %v3020 = vadd.f32 %v2891, %v2959
        %v3021 = vadd.f32 %v2892, %v2960
        %v3022 = vadd.f32 %v2893, %v2961
        %v3023 = vadd.f32 %v2894, %v2962
        %v3024 = vadd.f32 %v2895, %v2963
        %v3025 = vadd.f32 %v2896, %v2964
        %v3026 = vadd.f32 %v2897, %v2965
        %v3027 = vadd.f32 %v2898, %v2966
        %v3028 = vadd.f32 %v2899, %v2967
        %v3029 = vadd.f32 %v2900, %v2968
        %v3030 = vadd.f32 %v2901, %v2969
        %v3031 = vadd.f32 %v2902, %v2970
        %v3032 = vadd.f32 %v2903, %v2971
        %v3033 = vadd.f32 %v2904, %v2972
        %v3034 = vadd.f32 %v2905, %v2972
        %v3035 = vadd.f32 %v2906, %v2973
        %v3036 = vadd.f32 %v2907, %v2974
        %v3037 = vadd.f32 %v2908, %v2975
        %v3038 = vadd.f32 %v2909, %v2976
        %v3039 = vadd.f32 %v2910, %v2977
        %v3040 = vadd.f32 %v2911, %v2978
        %v3041 = vadd.f32 %v2912, %v2979
        %v3042 = vadd.f32 %v2913, %v2980
        %v3043 = vadd.f32 %v2914, %v2981
        %v3044 = vadd.f32 %v2915, %v2982
        %v3045 = vadd.f32 %v2916, %v2983
        %v3046 = vadd.f32 %v2917, %v2984
        %v3047 = vadd.f32 %v2918, %v2985
        %v3048 = vadd.f32 %v2919, %v2986
        %v3049 = vadd.f32 %v2920, %v2987
        %v3050 = vadd.f32 %v2921, %v2988
        %v3051 = vadd.f32 %v2922, %v2989
        %v3052 = vadd.f32 %v2923, %v2990
        %v3053 = vadd.f32 %v2924, %v2991
        %v3054 = vadd.f32 %v2925, %v2992
        %v3055 = vadd.f32 %v2926, %v2993
        %v3056 = vadd.f32 %v2927, %v2994
        %v3057 = vadd.f32 %v2928, %v2995
        %v3058 = vadd.f32 %v2929, %v2996
        %v3059 = vadd.f32 %v2930, %v2997
        %v3060 = vadd.f32 %v2931, %v2998
        %v3061 = vadd.f32 %v2932, %v2999
        %v3062 = vadd.f32 %v2933, %v3000
        %v3063 = vadd.f32 %v2934, %v3001
        %v3064 = vadd.f32 %v2935, %v3002
        %v3065 = vadd.f32 %v2936, %v2972
        %v3066 = vadd.f32 %v2937, %v2972
        %v3067 = vlaneseq
        %v3068 = vshrl.u32 %v3067, 7
        %v3069 = vsub.s32 6, %v3068
        %v3070 = vrot.slane %v340, %v3069
        %v3071 = vmul.f32 %v3003, %v3070
        %v3072 = vmul.f32 %v3004, %v3070
        %v3073 = vmul.f32 %v3005, %v3070
        %v3074 = vmul.f32 %v3006, %v3070
        %v3075 = vmul.f32 %v3007, %v3070
        %v3076 = vmul.f32 %v3008, %v3070
        %v3077 = vmul.f32 %v3009, %v3070
        %v3078 = vmul.f32 %v3010, %v3070
        %v3079 = vmul.f32 %v3011, %v3070
        %v3080 = vmul.f32 %v3012, %v3070
        %v3081 = vmul.f32 %v3013, %v3070
        %v3082 = vmul.f32 %v3014, %v3070
        %v3083 = vmul.f32 %v3015, %v3070
        %v3084 = vmul.f32 %v3016, %v3070
        %v3085 = vmul.f32 %v3017, %v3070
        %v3086 = vmul.f32 %v3018, %v3070
        %v3087 = vmul.f32 %v3019, %v3070
        %v3088 = vmul.f32 %v3020, %v3070
        %v3089 = vmul.f32 %v3021, %v3070
        %v3090 = vmul.f32 %v3022, %v3070
        %v3091 = vmul.f32 %v3023, %v3070
        %v3092 = vmul.f32 %v3024, %v3070
        %v3093 = vmul.f32 %v3025, %v3070
        %v3094 = vmul.f32 %v3026, %v3070
        %v3095 = vmul.f32 %v3027, %v3070
        %v3096 = vmul.f32 %v3028, %v3070
        %v3097 = vmul.f32 %v3029, %v3070
        %v3098 = vmul.f32 %v3030, %v3070
        %v3099 = vmul.f32 %v3031, %v3070
        %v3100 = vmul.f32 %v3032, %v3070
        %v3101 = vmul.f32 %v3033, %v3070
        %v3102 = vmul.f32 %v3034, %v3070
        %v3103 = vmul.f32 %v3035, %v3070
        %v3104 = vmul.f32 %v3036, %v3070
        %v3105 = vmul.f32 %v3037, %v3070
        %v3106 = vmul.f32 %v3038, %v3070
        %v3107 = vmul.f32 %v3039, %v3070
        %v3108 = vmul.f32 %v3040, %v3070
        %v3109 = vmul.f32 %v3041, %v3070
        %v3110 = vmul.f32 %v3042, %v3070
        %v3111 = vmul.f32 %v3043, %v3070
        %v3112 = vmul.f32 %v3044, %v3070
        %v3113 = vmul.f32 %v3045, %v3070
        %v3114 = vmul.f32 %v3046, %v3070
        %v3115 = vmul.f32 %v3047, %v3070
        %v3116 = vmul.f32 %v3048, %v3070
        %v3117 = vmul.f32 %v3049, %v3070
        %v3118 = vmul.f32 %v3050, %v3070
        %v3119 = vmul.f32 %v3051, %v3070
        %v3120 = vmul.f32 %v3052, %v3070
        %v3121 = vmul.f32 %v3053, %v3070
        %v3122 = vmul.f32 %v3054, %v3070
        %v3123 = vmul.f32 %v3055, %v3070
        %v3124 = vmul.f32 %v3056, %v3070
        %v3125 = vmul.f32 %v3057, %v3070
        %v3126 = vmul.f32 %v3058, %v3070
        %v3127 = vmul.f32 %v3059, %v3070
        %v3128 = vmul.f32 %v3060, %v3070
        %v3129 = vmul.f32 %v3061, %v3070
        %v3130 = vmul.f32 %v3062, %v3070
        %v3131 = vmul.f32 %v3063, %v3070
        %v3132 = vmul.f32 %v3064, %v3070
        %v3133 = vmul.f32 %v3065, %v3070
        %v3134 = vmul.f32 %v3066, %v3070
        %v3135 = vlaneseq
        %v3136 = vshrl.u32 %v3135, 7
        %v3137 = vsub.s32 7, %v3136
        %v3138 = vrot.slane %v340, %v3137
        %v3139 = vadd.f32 %v3071, %v3138
        %v3140 = vadd.f32 %v3072, %v3138
        %v3141 = vadd.f32 %v3073, %v3138
        %v3142 = vadd.f32 %v3074, %v3138
        %v3143 = vadd.f32 %v3075, %v3138
        %v3144 = vadd.f32 %v3076, %v3138
        %v3145 = vadd.f32 %v3077, %v3138
        %v3146 = vadd.f32 %v3078, %v3138
        %v3147 = vadd.f32 %v3079, %v3138
        %v3148 = vadd.f32 %v3080, %v3138
        %v3149 = vadd.f32 %v3081, %v3138
        %v3150 = vadd.f32 %v3082, %v3138
        %v3151 = vadd.f32 %v3083, %v3138
        %v3152 = vadd.f32 %v3084, %v3138
        %v3153 = vadd.f32 %v3085, %v3138
        %v3154 = vadd.f32 %v3086, %v3138
        %v3155 = vadd.f32 %v3087, %v3138
        %v3156 = vadd.f32 %v3088, %v3138
        %v3157 = vadd.f32 %v3089, %v3138
        %v3158 = vadd.f32 %v3090, %v3138
        %v3159 = vadd.f32 %v3091, %v3138
        %v3160 = vadd.f32 %v3092, %v3138
        %v3161 = vadd.f32 %v3093, %v3138
        %v3162 = vadd.f32 %v3094, %v3138
        %v3163 = vadd.f32 %v3095, %v3138
        %v3164 = vadd.f32 %v3096, %v3138
        %v3165 = vadd.f32 %v3097, %v3138
        %v3166 = vadd.f32 %v3098, %v3138
        %v3167 = vadd.f32 %v3099, %v3138
        %v3168 = vadd.f32 %v3100, %v3138
        %v3169 = vadd.f32 %v3101, %v3138
        %v3170 = vadd.f32 %v3102, %v3138
        %v3171 = vadd.f32 %v3103, %v3138
        %v3172 = vadd.f32 %v3104, %v3138
        %v3173 = vadd.f32 %v3105, %v3138
        %v3174 = vadd.f32 %v3106, %v3138
        %v3175 = vadd.f32 %v3107, %v3138
        %v3176 = vadd.f32 %v3108, %v3138
        %v3177 = vadd.f32 %v3109, %v3138
        %v3178 = vadd.f32 %v3110, %v3138
        %v3179 = vadd.f32 %v3111, %v3138
        %v3180 = vadd.f32 %v3112, %v3138
        %v3181 = vadd.f32 %v3113, %v3138
        %v3182 = vadd.f32 %v3114, %v3138
        %v3183 = vadd.f32 %v3115, %v3138
        %v3184 = vadd.f32 %v3116, %v3138
        %v3185 = vadd.f32 %v3117, %v3138
        %v3186 = vadd.f32 %v3118, %v3138
        %v3187 = vadd.f32 %v3119, %v3138
        %v3188 = vadd.f32 %v3120, %v3138
        %v3189 = vadd.f32 %v3121, %v3138
        %v3190 = vadd.f32 %v3122, %v3138
        %v3191 = vadd.f32 %v3123, %v3138
        %v3192 = vadd.f32 %v3124, %v3138
        %v3193 = vadd.f32 %v3125, %v3138
        %v3194 = vadd.f32 %v3126, %v3138
        %v3195 = vadd.f32 %v3127, %v3138
        %v3196 = vadd.f32 %v3128, %v3138
        %v3197 = vadd.f32 %v3129, %v3138
        %v3198 = vadd.f32 %v3130, %v3138
        %v3199 = vadd.f32 %v3131, %v3138
        %v3200 = vadd.f32 %v3132, %v3138
        %v3201 = vadd.f32 %v3133, %v3138
        %v3202 = vadd.f32 %v3134, %v3138
        %v3203 = vmax.f32 %v3139, 0.0
        %v3204 = vmax.f32 %v3140, 0.0
        %v3205 = vmax.f32 %v3141, 0.0
        %v3206 = vmax.f32 %v3142, 0.0
        %v3207 = vmax.f32 %v3143, 0.0
        %v3208 = vmax.f32 %v3144, 0.0
        %v3209 = vmax.f32 %v3145, 0.0
        %v3210 = vmax.f32 %v3146, 0.0
        %v3211 = vmax.f32 %v3147, 0.0
        %v3212 = vmax.f32 %v3148, 0.0
        %v3213 = vmax.f32 %v3149, 0.0
        %v3214 = vmax.f32 %v3150, 0.0
        %v3215 = vmax.f32 %v3151, 0.0
        %v3216 = vmax.f32 %v3152, 0.0
        %v3217 = vmax.f32 %v3153, 0.0
        %v3218 = vmax.f32 %v3154, 0.0
        %v3219 = vmax.f32 %v3155, 0.0
        %v3220 = vmax.f32 %v3156, 0.0
        %v3221 = vmax.f32 %v3157, 0.0
        %v3222 = vmax.f32 %v3158, 0.0
        %v3223 = vmax.f32 %v3159, 0.0
        %v3224 = vmax.f32 %v3160, 0.0
        %v3225 = vmax.f32 %v3161, 0.0
        %v3226 = vmax.f32 %v3162, 0.0
        %v3227 = vmax.f32 %v3163, 0.0
        %v3228 = vmax.f32 %v3164, 0.0
        %v3229 = vmax.f32 %v3165, 0.0
        %v3230 = vmax.f32 %v3166, 0.0
        %v3231 = vmax.f32 %v3167, 0.0
        %v3232 = vmax.f32 %v3168, 0.0
        %v3233 = vmax.f32 %v3169, 0.0
        %v3234 = vmax.f32 %v3170, 0.0
        %v3235 = vmax.f32 %v3171, 0.0
        %v3236 = vmax.f32 %v3172, 0.0
        %v3237 = vmax.f32 %v3173, 0.0
        %v3238 = vmax.f32 %v3174, 0.0
        %v3239 = vmax.f32 %v3175, 0.0
        %v3240 = vmax.f32 %v3176, 0.0
        %v3241 = vmax.f32 %v3177, 0.0
        %v3242 = vmax.f32 %v3178, 0.0
        %v3243 = vmax.f32 %v3179, 0.0
        %v3244 = vmax.f32 %v3180, 0.0
        %v3245 = vmax.f32 %v3181, 0.0
        %v3246 = vmax.f32 %v3182, 0.0
        %v3247 = vmax.f32 %v3183, 0.0
        %v3248 = vmax.f32 %v3184, 0.0
        %v3249 = vmax.f32 %v3185, 0.0
        %v3250 = vmax.f32 %v3186, 0.0
        %v3251 = vmax.f32 %v3187, 0.0
        %v3252 = vmax.f32 %v3188, 0.0
        %v3253 = vmax.f32 %v3189, 0.0
        %v3254 = vmax.f32 %v3190, 0.0
        %v3255 = vmax.f32 %v3191, 0.0
        %v3256 = vmax.f32 %v3192, 0.0
        %v3257 = vmax.f32 %v3193, 0.0
        %v3258 = vmax.f32 %v3194, 0.0
        %v3259 = vmax.f32 %v3195, 0.0
        %v3260 = vmax.f32 %v3196, 0.0
        %v3261 = vmax.f32 %v3197, 0.0
        %v3262 = vmax.f32 %v3198, 0.0
        %v3263 = vmax.f32 %v3199, 0.0
        %v3264 = vmax.f32 %v3200, 0.0
        %v3265 = vmax.f32 %v3201, 0.0
        %v3266 = vmax.f32 %v3202, 0.0
        %v3267 = vpack.c.bf16 %v3204, %v3203
        %v3268 = vpack.c.bf16 %v3206, %v3205
        %v3269 = vpack.c.bf16 %v3208, %v3207
        %v3270 = vpack.c.bf16 %v3210, %v3209
        %v3271 = vpack.c.bf16 %v3212, %v3211
        %v3272 = vpack.c.bf16 %v3214, %v3213
        %v3273 = vpack.c.bf16 %v3216, %v3215
        %v3274 = vpack.c.bf16 %v3218, %v3217
        %v3275 = vpack.c.bf16 %v3220, %v3219
        %v3276 = vpack.c.bf16 %v3222, %v3221
        %v3277 = vpack.c.bf16 %v3224, %v3223
        %v3278 = vpack.c.bf16 %v3226, %v3225
        %v3279 = vpack.c.bf16 %v3228, %v3227
        %v3280 = vpack.c.bf16 %v3230, %v3229
        %v3281 = vpack.c.bf16 %v3232, %v3231
        %v3282 = vpack.c.bf16 %v3234, %v3233
        %v3283 = vpack.c.bf16 %v3236, %v3235
        %v3284 = vpack.c.bf16 %v3238, %v3237
        %v3285 = vpack.c.bf16 %v3240, %v3239
        %v3286 = vpack.c.bf16 %v3242, %v3241
        %v3287 = vpack.c.bf16 %v3244, %v3243
        %v3288 = vpack.c.bf16 %v3246, %v3245
        %v3289 = vpack.c.bf16 %v3248, %v3247
        %v3290 = vpack.c.bf16 %v3250, %v3249
        %v3291 = vpack.c.bf16 %v3252, %v3251
        %v3292 = vpack.c.bf16 %v3254, %v3253
        %v3293 = vpack.c.bf16 %v3256, %v3255
        %v3294 = vpack.c.bf16 %v3258, %v3257
        %v3295 = vpack.c.bf16 %v3260, %v3259
        %v3296 = vpack.c.bf16 %v3262, %v3261
        %v3297 = vpack.c.bf16 %v3264, %v3263
        %v3298 = vpack.c.bf16 %v3266, %v3265
        %3331 = vrot.lane.b32.xlu0 %v3267, 8
        %v3332 = vpop.permute.xlu0 %3331
        %3333 = vrot.lane.b32.xlu0 %v3268, 8
        %v3334 = vpop.permute.xlu0 %3333
        %3335 = vrot.lane.b32.xlu0 %v3269, 8
        %v3336 = vpop.permute.xlu0 %3335
        %3337 = vrot.lane.b32.xlu0 %v3270, 8
        %v3338 = vpop.permute.xlu0 %3337
        %3339 = vrot.lane.b32.xlu0 %v3271, 8
        %v3340 = vpop.permute.xlu0 %3339
        %3341 = vrot.lane.b32.xlu0 %v3272, 8
        %v3342 = vpop.permute.xlu0 %3341
        %3343 = vrot.lane.b32.xlu0 %v3273, 8
        %v3344 = vpop.permute.xlu0 %3343
        %3345 = vrot.lane.b32.xlu0 %v3274, 8
        %v3346 = vpop.permute.xlu0 %3345
        %3347 = vrot.lane.b32.xlu0 %v3275, 8
        %v3348 = vpop.permute.xlu0 %3347
        %3349 = vrot.lane.b32.xlu0 %v3276, 8
        %v3350 = vpop.permute.xlu0 %3349
        %3351 = vrot.lane.b32.xlu0 %v3277, 8
        %v3352 = vpop.permute.xlu0 %3351
        %3353 = vrot.lane.b32.xlu0 %v3278, 8
        %v3354 = vpop.permute.xlu0 %3353
        %3355 = vrot.lane.b32.xlu0 %v3279, 8
        %v3356 = vpop.permute.xlu0 %3355
        %3357 = vrot.lane.b32.xlu0 %v3280, 8
        %v3358 = vpop.permute.xlu0 %3357
        %3359 = vrot.lane.b32.xlu0 %v3281, 8
        %v3360 = vpop.permute.xlu0 %3359
        %3361 = vrot.lane.b32.xlu0 %v3282, 8
        %v3362 = vpop.permute.xlu0 %3361
        %3363 = vrot.lane.b32.xlu0 %v3283, 8
        %v3364 = vpop.permute.xlu0 %3363
        %3365 = vrot.lane.b32.xlu0 %v3284, 8
        %v3366 = vpop.permute.xlu0 %3365
        %3367 = vrot.lane.b32.xlu0 %v3285, 8
        %v3368 = vpop.permute.xlu0 %3367
        %3369 = vrot.lane.b32.xlu0 %v3286, 8
        %v3370 = vpop.permute.xlu0 %3369
        %3371 = vrot.lane.b32.xlu0 %v3287, 8
        %v3372 = vpop.permute.xlu0 %3371
        %3373 = vrot.lane.b32.xlu0 %v3288, 8
        %v3374 = vpop.permute.xlu0 %3373
        %3375 = vrot.lane.b32.xlu0 %v3289, 8
        %v3376 = vpop.permute.xlu0 %3375
        %3377 = vrot.lane.b32.xlu0 %v3290, 8
        %v3378 = vpop.permute.xlu0 %3377
        %3379 = vrot.lane.b32.xlu0 %v3291, 8
        %v3380 = vpop.permute.xlu0 %3379
        %3381 = vrot.lane.b32.xlu0 %v3292, 8
        %v3382 = vpop.permute.xlu0 %3381
        %3383 = vrot.lane.b32.xlu0 %v3293, 8
        %v3384 = vpop.permute.xlu0 %3383
        %3385 = vrot.lane.b32.xlu0 %v3294, 8
        %v3386 = vpop.permute.xlu0 %3385
        %3387 = vrot.lane.b32.xlu0 %v3295, 8
        %v3388 = vpop.permute.xlu0 %3387
        %3389 = vrot.lane.b32.xlu0 %v3296, 8
        %v3390 = vpop.permute.xlu0 %3389
        %3391 = vrot.lane.b32.xlu0 %v3297, 8
        %v3392 = vpop.permute.xlu0 %3391
        %3393 = vrot.lane.b32.xlu0 %v3298, 8
        %v3394 = vpop.permute.xlu0 %3393
        %vm3427 = vcmask 97344
        %3428 = vst.msk [vmem:[#allocation2] sm:$0xff] %vm3427, %v3332
        %3429 = vst.msk [vmem:[#allocation2 + $0x8] sm:$0xff] %vm3427, %v3334
        %3430 = vst.msk [vmem:[#allocation2 + $0x10] sm:$0xff] %vm3427, %v3336
        %3431 = vst.msk [vmem:[#allocation2 + $0x18] sm:$0xff] %vm3427, %v3338
        %3432 = vst.msk [vmem:[#allocation2 + $0x20] sm:$0xff] %vm3427, %v3340
        %3433 = vst.msk [vmem:[#allocation2 + $0x28] sm:$0xff] %vm3427, %v3342
        %3434 = vst.msk [vmem:[#allocation2 + $0x30] sm:$0xff] %vm3427, %v3344
        %3435 = vst.msk [vmem:[#allocation2 + $0x38] sm:$0xff] %vm3427, %v3346
        %3436 = vst.msk [vmem:[#allocation2 + $0x40] sm:$0xff] %vm3427, %v3348
        %3437 = vst.msk [vmem:[#allocation2 + $0x48] sm:$0xff] %vm3427, %v3350
        %3438 = vst.msk [vmem:[#allocation2 + $0x50] sm:$0xff] %vm3427, %v3352
        %3439 = vst.msk [vmem:[#allocation2 + $0x58] sm:$0xff] %vm3427, %v3354
        %3440 = vst.msk [vmem:[#allocation2 + $0x60] sm:$0xff] %vm3427, %v3356
        %3441 = vst.msk [vmem:[#allocation2 + $0x68] sm:$0xff] %vm3427, %v3358
        %3442 = vst.msk [vmem:[#allocation2 + $0x70] sm:$0xff] %vm3427, %v3360
        %3443 = vst.msk [vmem:[#allocation2 + $0x78] sm:$0xff] %vm3427, %v3362
        %3444 = vst.msk [vmem:[#allocation2 + $0x80] sm:$0xff] %vm3427, %v3364
        %3445 = vst.msk [vmem:[#allocation2 + $0x88] sm:$0xff] %vm3427, %v3366
        %3446 = vst.msk [vmem:[#allocation2 + $0x90] sm:$0xff] %vm3427, %v3368
        %3447 = vst.msk [vmem:[#allocation2 + $0x98] sm:$0xff] %vm3427, %v3370
        %3448 = vst.msk [vmem:[#allocation2 + $0xa0] sm:$0xff] %vm3427, %v3372
        %3449 = vst.msk [vmem:[#allocation2 + $0xa8] sm:$0xff] %vm3427, %v3374
        %3450 = vst.msk [vmem:[#allocation2 + $0xb0] sm:$0xff] %vm3427, %v3376
        %3451 = vst.msk [vmem:[#allocation2 + $0xb8] sm:$0xff] %vm3427, %v3378
        %3452 = vst.msk [vmem:[#allocation2 + $0xc0] sm:$0xff] %vm3427, %v3380
        %3453 = vst.msk [vmem:[#allocation2 + $0xc8] sm:$0xff] %vm3427, %v3382
        %3454 = vst.msk [vmem:[#allocation2 + $0xd0] sm:$0xff] %vm3427, %v3384
        %3455 = vst.msk [vmem:[#allocation2 + $0xd8] sm:$0xff] %vm3427, %v3386
        %3456 = vst.msk [vmem:[#allocation2 + $0xe0] sm:$0xff] %vm3427, %v3388
        %3457 = vst.msk [vmem:[#allocation2 + $0xe8] sm:$0xff] %vm3427, %v3390
        %3458 = vst.msk [vmem:[#allocation2 + $0xf0] sm:$0xff] %vm3427, %v3392
        %3459 = vst.msk [vmem:[#allocation2 + $0xf8] sm:$0xff] %vm3427, %v3394
        %v3460 = vlaneseq
        %v3461 = vshrl.u32 %v3460, 7
        %v3462 = vsub.s32 1, %v3461
        %v3463 = vrot.slane %v339, %v3462
        %v3464 = vmul.f32 %v3463, 0.0
        %v3465 = vmul.f32 %v905, %v3463
        %v3466 = vmul.f32 %v906, %v3463
        %v3467 = vmul.f32 %v907, %v3463
        %v3468 = vmul.f32 %v908, %v3463
        %v3469 = vmul.f32 %v909, %v3463
        %v3470 = vmul.f32 %v910, %v3463
        %v3471 = vmul.f32 %v911, %v3463
        %v3472 = vmul.f32 %v912, %v3463
        %v3473 = vmul.f32 %v913, %v3463
        %v3474 = vmul.f32 %v914, %v3463
        %v3475 = vmul.f32 %v915, %v3463
        %v3476 = vmul.f32 %v916, %v3463
        %v3477 = vmul.f32 %v917, %v3463
        %v3478 = vmul.f32 %v918, %v3463
        %v3479 = vmul.f32 %v919, %v3463
        %v3480 = vmul.f32 %v920, %v3463
        %v3481 = vmul.f32 %v921, %v3463
        %v3482 = vmul.f32 %v922, %v3463
        %v3483 = vmul.f32 %v923, %v3463
        %v3484 = vmul.f32 %v924, %v3463
        %v3485 = vmul.f32 %v925, %v3463
        %v3486 = vmul.f32 %v926, %v3463
        %v3487 = vmul.f32 %v927, %v3463
        %v3488 = vmul.f32 %v928, %v3463
        %v3489 = vmul.f32 %v929, %v3463
        %v3490 = vmul.f32 %v930, %v3463
        %v3491 = vmul.f32 %v931, %v3463
        %v3492 = vmul.f32 %v932, %v3463
        %v3493 = vmul.f32 %v933, %v3463
        %v3494 = vmul.f32 %v934, %v3463
        %v3495 = vmul.f32 %v937, %v3463
        %v3496 = vmul.f32 %v938, %v3463
        %v3497 = vmul.f32 %v939, %v3463
        %v3498 = vmul.f32 %v940, %v3463
        %v3499 = vmul.f32 %v941, %v3463
        %v3500 = vmul.f32 %v942, %v3463
        %v3501 = vmul.f32 %v943, %v3463
        %v3502 = vmul.f32 %v944, %v3463
        %v3503 = vmul.f32 %v945, %v3463
        %v3504 = vmul.f32 %v946, %v3463
        %v3505 = vmul.f32 %v947, %v3463
        %v3506 = vmul.f32 %v948, %v3463
        %v3507 = vmul.f32 %v949, %v3463
        %v3508 = vmul.f32 %v950, %v3463
        %v3509 = vmul.f32 %v951, %v3463
        %v3510 = vmul.f32 %v952, %v3463
        %v3511 = vmul.f32 %v953, %v3463
        %v3512 = vmul.f32 %v954, %v3463
        %v3513 = vmul.f32 %v955, %v3463
        %v3514 = vmul.f32 %v956, %v3463
        %v3515 = vmul.f32 %v957, %v3463
        %v3516 = vmul.f32 %v958, %v3463
        %v3517 = vmul.f32 %v959, %v3463
        %v3518 = vmul.f32 %v960, %v3463
        %v3519 = vmul.f32 %v961, %v3463
        %v3520 = vmul.f32 %v962, %v3463
        %v3521 = vmul.f32 %v963, %v3463
        %v3522 = vmul.f32 %v964, %v3463
        %v3523 = vmul.f32 %v965, %v3463
        %v3524 = vmul.f32 %v966, %v3463
        %v3525 = vlaneseq
        %v3526 = vshrl.u32 %v3525, 7
        %v3527 = vsub.s32 2, %v3526
        %v3528 = vrot.slane %v339, %v3527
        %v3529 = vmul.f32 %v905, %v3528
        %v3530 = vmul.f32 %v906, %v3528
        %v3531 = vmul.f32 %v907, %v3528
        %v3532 = vmul.f32 %v908, %v3528
        %v3533 = vmul.f32 %v909, %v3528
        %v3534 = vmul.f32 %v910, %v3528
        %v3535 = vmul.f32 %v911, %v3528
        %v3536 = vmul.f32 %v912, %v3528
        %v3537 = vmul.f32 %v913, %v3528
        %v3538 = vmul.f32 %v914, %v3528
        %v3539 = vmul.f32 %v915, %v3528
        %v3540 = vmul.f32 %v916, %v3528
        %v3541 = vmul.f32 %v917, %v3528
        %v3542 = vmul.f32 %v918, %v3528
        %v3543 = vmul.f32 %v919, %v3528
        %v3544 = vmul.f32 %v920, %v3528
        %v3545 = vmul.f32 %v921, %v3528
        %v3546 = vmul.f32 %v922, %v3528
        %v3547 = vmul.f32 %v923, %v3528
        %v3548 = vmul.f32 %v924, %v3528
        %v3549 = vmul.f32 %v925, %v3528
        %v3550 = vmul.f32 %v926, %v3528
        %v3551 = vmul.f32 %v927, %v3528
        %v3552 = vmul.f32 %v928, %v3528
        %v3553 = vmul.f32 %v929, %v3528
        %v3554 = vmul.f32 %v930, %v3528
        %v3555 = vmul.f32 %v931, %v3528
        %v3556 = vmul.f32 %v932, %v3528
        %v3557 = vmul.f32 %v933, %v3528
        %v3558 = vmul.f32 %v934, %v3528
        %v3559 = vmul.f32 %v935, %v3528
        %v3560 = vmul.f32 %v936, %v3528
        %v3561 = vmul.f32 %v937, %v3528
        %v3562 = vmul.f32 %v938, %v3528
        %v3563 = vmul.f32 %v939, %v3528
        %v3564 = vmul.f32 %v940, %v3528
        %v3565 = vmul.f32 %v941, %v3528
        %v3566 = vmul.f32 %v942, %v3528
        %v3567 = vmul.f32 %v943, %v3528
        %v3568 = vmul.f32 %v944, %v3528
        %v3569 = vmul.f32 %v945, %v3528
        %v3570 = vmul.f32 %v946, %v3528
        %v3571 = vmul.f32 %v947, %v3528
        %v3572 = vmul.f32 %v948, %v3528
        %v3573 = vmul.f32 %v949, %v3528
        %v3574 = vmul.f32 %v950, %v3528
        %v3575 = vmul.f32 %v951, %v3528
        %v3576 = vmul.f32 %v952, %v3528
        %v3577 = vmul.f32 %v953, %v3528
        %v3578 = vmul.f32 %v954, %v3528
        %v3579 = vmul.f32 %v955, %v3528
        %v3580 = vmul.f32 %v956, %v3528
        %v3581 = vmul.f32 %v957, %v3528
        %v3582 = vmul.f32 %v958, %v3528
        %v3583 = vmul.f32 %v959, %v3528
        %v3584 = vmul.f32 %v960, %v3528
        %v3585 = vmul.f32 %v961, %v3528
        %v3586 = vmul.f32 %v962, %v3528
        %v3587 = vmul.f32 %v963, %v3528
        %v3588 = vmul.f32 %v964, %v3528
        %v3589 = vmul.f32 %v965, %v3528
        %v3590 = vmul.f32 %v966, %v3528
        %v3591 = vmul.f32 %v967, %v3528
        %v3592 = vmul.f32 %v968, %v3528
        %v3593 = vadd.f32 %v3464, %v3529
        %v3594 = vadd.f32 %v3464, %v3530
        %v3595 = vadd.f32 %v3465, %v3531
        %v3596 = vadd.f32 %v3466, %v3532
        %v3597 = vadd.f32 %v3467, %v3533
        %v3598 = vadd.f32 %v3468, %v3534
        %v3599 = vadd.f32 %v3469, %v3535
        %v3600 = vadd.f32 %v3470, %v3536
        %v3601 = vadd.f32 %v3471, %v3537
        %v3602 = vadd.f32 %v3472, %v3538
        %v3603 = vadd.f32 %v3473, %v3539
        %v3604 = vadd.f32 %v3474, %v3540
        %v3605 = vadd.f32 %v3475, %v3541
        %v3606 = vadd.f32 %v3476, %v3542
        %v3607 = vadd.f32 %v3477, %v3543
        %v3608 = vadd.f32 %v3478, %v3544
        %v3609 = vadd.f32 %v3479, %v3545
        %v3610 = vadd.f32 %v3480, %v3546
        %v3611 = vadd.f32 %v3481, %v3547
        %v3612 = vadd.f32 %v3482, %v3548
        %v3613 = vadd.f32 %v3483, %v3549
        %v3614 = vadd.f32 %v3484, %v3550
        %v3615 = vadd.f32 %v3485, %v3551
        %v3616 = vadd.f32 %v3486, %v3552
        %v3617 = vadd.f32 %v3487, %v3553
        %v3618 = vadd.f32 %v3488, %v3554
        %v3619 = vadd.f32 %v3489, %v3555
        %v3620 = vadd.f32 %v3490, %v3556
        %v3621 = vadd.f32 %v3491, %v3557
        %v3622 = vadd.f32 %v3492, %v3558
        %v3623 = vadd.f32 %v3493, %v3559
        %v3624 = vadd.f32 %v3494, %v3560
        %v3625 = vadd.f32 %v3464, %v3561
        %v3626 = vadd.f32 %v3464, %v3562
        %v3627 = vadd.f32 %v3495, %v3563
        %v3628 = vadd.f32 %v3496, %v3564
        %v3629 = vadd.f32 %v3497, %v3565
        %v3630 = vadd.f32 %v3498, %v3566
        %v3631 = vadd.f32 %v3499, %v3567
        %v3632 = vadd.f32 %v3500, %v3568
        %v3633 = vadd.f32 %v3501, %v3569
        %v3634 = vadd.f32 %v3502, %v3570
        %v3635 = vadd.f32 %v3503, %v3571
        %v3636 = vadd.f32 %v3504, %v3572
        %v3637 = vadd.f32 %v3505, %v3573
        %v3638 = vadd.f32 %v3506, %v3574
        %v3639 = vadd.f32 %v3507, %v3575
        %v3640 = vadd.f32 %v3508, %v3576
        %v3641 = vadd.f32 %v3509, %v3577
        %v3642 = vadd.f32 %v3510, %v3578
        %v3643 = vadd.f32 %v3511, %v3579
        %v3644 = vadd.f32 %v3512, %v3580
        %v3645 = vadd.f32 %v3513, %v3581
        %v3646 = vadd.f32 %v3514, %v3582
        %v3647 = vadd.f32 %v3515, %v3583
        %v3648 = vadd.f32 %v3516, %v3584
        %v3649 = vadd.f32 %v3517, %v3585
        %v3650 = vadd.f32 %v3518, %v3586
        %v3651 = vadd.f32 %v3519, %v3587
        %v3652 = vadd.f32 %v3520, %v3588
        %v3653 = vadd.f32 %v3521, %v3589
        %v3654 = vadd.f32 %v3522, %v3590
        %v3655 = vadd.f32 %v3523, %v3591
        %v3656 = vadd.f32 %v3524, %v3592
        %v3657 = vlaneseq
        %v3658 = vshrl.u32 %v3657, 7
        %v3659 = vsub.s32 3, %v3658
        %v3660 = vrot.slane %v339, %v3659
        %v3661 = vmul.f32 %v907, %v3660
        %v3662 = vmul.f32 %v908, %v3660
        %v3663 = vmul.f32 %v909, %v3660
        %v3664 = vmul.f32 %v910, %v3660
        %v3665 = vmul.f32 %v911, %v3660
        %v3666 = vmul.f32 %v912, %v3660
        %v3667 = vmul.f32 %v913, %v3660
        %v3668 = vmul.f32 %v914, %v3660
        %v3669 = vmul.f32 %v915, %v3660
        %v3670 = vmul.f32 %v916, %v3660
        %v3671 = vmul.f32 %v917, %v3660
        %v3672 = vmul.f32 %v918, %v3660
        %v3673 = vmul.f32 %v919, %v3660
        %v3674 = vmul.f32 %v920, %v3660
        %v3675 = vmul.f32 %v921, %v3660
        %v3676 = vmul.f32 %v922, %v3660
        %v3677 = vmul.f32 %v923, %v3660
        %v3678 = vmul.f32 %v924, %v3660
        %v3679 = vmul.f32 %v925, %v3660
        %v3680 = vmul.f32 %v926, %v3660
        %v3681 = vmul.f32 %v927, %v3660
        %v3682 = vmul.f32 %v928, %v3660
        %v3683 = vmul.f32 %v929, %v3660
        %v3684 = vmul.f32 %v930, %v3660
        %v3685 = vmul.f32 %v931, %v3660
        %v3686 = vmul.f32 %v932, %v3660
        %v3687 = vmul.f32 %v933, %v3660
        %v3688 = vmul.f32 %v934, %v3660
        %v3689 = vmul.f32 %v935, %v3660
        %v3690 = vmul.f32 %v936, %v3660
        %v3691 = vmul.f32 %v3660, 0.0
        %v3692 = vmul.f32 %v939, %v3660
        %v3693 = vmul.f32 %v940, %v3660
        %v3694 = vmul.f32 %v941, %v3660
        %v3695 = vmul.f32 %v942, %v3660
        %v3696 = vmul.f32 %v943, %v3660
        %v3697 = vmul.f32 %v944, %v3660
        %v3698 = vmul.f32 %v945, %v3660
        %v3699 = vmul.f32 %v946, %v3660
        %v3700 = vmul.f32 %v947, %v3660
        %v3701 = vmul.f32 %v948, %v3660
        %v3702 = vmul.f32 %v949, %v3660
        %v3703 = vmul.f32 %v950, %v3660
        %v3704 = vmul.f32 %v951, %v3660
        %v3705 = vmul.f32 %v952, %v3660
        %v3706 = vmul.f32 %v953, %v3660
        %v3707 = vmul.f32 %v954, %v3660
        %v3708 = vmul.f32 %v955, %v3660
        %v3709 = vmul.f32 %v956, %v3660
        %v3710 = vmul.f32 %v957, %v3660
        %v3711 = vmul.f32 %v958, %v3660
        %v3712 = vmul.f32 %v959, %v3660
        %v3713 = vmul.f32 %v960, %v3660
        %v3714 = vmul.f32 %v961, %v3660
        %v3715 = vmul.f32 %v962, %v3660
        %v3716 = vmul.f32 %v963, %v3660
        %v3717 = vmul.f32 %v964, %v3660
        %v3718 = vmul.f32 %v965, %v3660
        %v3719 = vmul.f32 %v966, %v3660
        %v3720 = vmul.f32 %v967, %v3660
        %v3721 = vmul.f32 %v968, %v3660
        %v3722 = vadd.f32 %v3593, %v3661
        %v3723 = vadd.f32 %v3594, %v3662
        %v3724 = vadd.f32 %v3595, %v3663
        %v3725 = vadd.f32 %v3596, %v3664
        %v3726 = vadd.f32 %v3597, %v3665
        %v3727 = vadd.f32 %v3598, %v3666
        %v3728 = vadd.f32 %v3599, %v3667
        %v3729 = vadd.f32 %v3600, %v3668
        %v3730 = vadd.f32 %v3601, %v3669
        %v3731 = vadd.f32 %v3602, %v3670
        %v3732 = vadd.f32 %v3603, %v3671
        %v3733 = vadd.f32 %v3604, %v3672
        %v3734 = vadd.f32 %v3605, %v3673
        %v3735 = vadd.f32 %v3606, %v3674
        %v3736 = vadd.f32 %v3607, %v3675
        %v3737 = vadd.f32 %v3608, %v3676
        %v3738 = vadd.f32 %v3609, %v3677
        %v3739 = vadd.f32 %v3610, %v3678
        %v3740 = vadd.f32 %v3611, %v3679
        %v3741 = vadd.f32 %v3612, %v3680
        %v3742 = vadd.f32 %v3613, %v3681
        %v3743 = vadd.f32 %v3614, %v3682
        %v3744 = vadd.f32 %v3615, %v3683
        %v3745 = vadd.f32 %v3616, %v3684
        %v3746 = vadd.f32 %v3617, %v3685
        %v3747 = vadd.f32 %v3618, %v3686
        %v3748 = vadd.f32 %v3619, %v3687
        %v3749 = vadd.f32 %v3620, %v3688
        %v3750 = vadd.f32 %v3621, %v3689
        %v3751 = vadd.f32 %v3622, %v3690
        %v3752 = vadd.f32 %v3623, %v3691
        %v3753 = vadd.f32 %v3624, %v3691
        %v3754 = vadd.f32 %v3625, %v3692
        %v3755 = vadd.f32 %v3626, %v3693
        %v3756 = vadd.f32 %v3627, %v3694
        %v3757 = vadd.f32 %v3628, %v3695
        %v3758 = vadd.f32 %v3629, %v3696
        %v3759 = vadd.f32 %v3630, %v3697
        %v3760 = vadd.f32 %v3631, %v3698
        %v3761 = vadd.f32 %v3632, %v3699
        %v3762 = vadd.f32 %v3633, %v3700
        %v3763 = vadd.f32 %v3634, %v3701
        %v3764 = vadd.f32 %v3635, %v3702
        %v3765 = vadd.f32 %v3636, %v3703
        %v3766 = vadd.f32 %v3637, %v3704
        %v3767 = vadd.f32 %v3638, %v3705
        %v3768 = vadd.f32 %v3639, %v3706
        %v3769 = vadd.f32 %v3640, %v3707
        %v3770 = vadd.f32 %v3641, %v3708
        %v3771 = vadd.f32 %v3642, %v3709
        %v3772 = vadd.f32 %v3643, %v3710
        %v3773 = vadd.f32 %v3644, %v3711
        %v3774 = vadd.f32 %v3645, %v3712
        %v3775 = vadd.f32 %v3646, %v3713
        %v3776 = vadd.f32 %v3647, %v3714
        %v3777 = vadd.f32 %v3648, %v3715
        %v3778 = vadd.f32 %v3649, %v3716
        %v3779 = vadd.f32 %v3650, %v3717
        %v3780 = vadd.f32 %v3651, %v3718
        %v3781 = vadd.f32 %v3652, %v3719
        %v3782 = vadd.f32 %v3653, %v3720
        %v3783 = vadd.f32 %v3654, %v3721
        %v3784 = vadd.f32 %v3655, %v3691
        %v3785 = vadd.f32 %v3656, %v3691
        %v3786 = vlaneseq
        %v3787 = vshrl.u32 %v3786, 7
        %v3788 = vsub.s32 0, %v3787
        %v3789 = vrot.slane %v341, %v3788
        %v3790 = vmul.f32 %v3722, %v3789
        %v3791 = vmul.f32 %v3723, %v3789
        %v3792 = vmul.f32 %v3724, %v3789
        %v3793 = vmul.f32 %v3725, %v3789
        %v3794 = vmul.f32 %v3726, %v3789
        %v3795 = vmul.f32 %v3727, %v3789
        %v3796 = vmul.f32 %v3728, %v3789
        %v3797 = vmul.f32 %v3729, %v3789
        %v3798 = vmul.f32 %v3730, %v3789
        %v3799 = vmul.f32 %v3731, %v3789
        %v3800 = vmul.f32 %v3732, %v3789
        %v3801 = vmul.f32 %v3733, %v3789
        %v3802 = vmul.f32 %v3734, %v3789
        %v3803 = vmul.f32 %v3735, %v3789
        %v3804 = vmul.f32 %v3736, %v3789
        %v3805 = vmul.f32 %v3737, %v3789
        %v3806 = vmul.f32 %v3738, %v3789
        %v3807 = vmul.f32 %v3739, %v3789
        %v3808 = vmul.f32 %v3740, %v3789
        %v3809 = vmul.f32 %v3741, %v3789
        %v3810 = vmul.f32 %v3742, %v3789
        %v3811 = vmul.f32 %v3743, %v3789
        %v3812 = vmul.f32 %v3744, %v3789
        %v3813 = vmul.f32 %v3745, %v3789
        %v3814 = vmul.f32 %v3746, %v3789
        %v3815 = vmul.f32 %v3747, %v3789
        %v3816 = vmul.f32 %v3748, %v3789
        %v3817 = vmul.f32 %v3749, %v3789
        %v3818 = vmul.f32 %v3750, %v3789
        %v3819 = vmul.f32 %v3751, %v3789
        %v3820 = vmul.f32 %v3752, %v3789
        %v3821 = vmul.f32 %v3753, %v3789
        %v3822 = vmul.f32 %v3754, %v3789
        %v3823 = vmul.f32 %v3755, %v3789
        %v3824 = vmul.f32 %v3756, %v3789
        %v3825 = vmul.f32 %v3757, %v3789
        %v3826 = vmul.f32 %v3758, %v3789
        %v3827 = vmul.f32 %v3759, %v3789
        %v3828 = vmul.f32 %v3760, %v3789
        %v3829 = vmul.f32 %v3761, %v3789
        %v3830 = vmul.f32 %v3762, %v3789
        %v3831 = vmul.f32 %v3763, %v3789
        %v3832 = vmul.f32 %v3764, %v3789
        %v3833 = vmul.f32 %v3765, %v3789
        %v3834 = vmul.f32 %v3766, %v3789
        %v3835 = vmul.f32 %v3767, %v3789
        %v3836 = vmul.f32 %v3768, %v3789
        %v3837 = vmul.f32 %v3769, %v3789
        %v3838 = vmul.f32 %v3770, %v3789
        %v3839 = vmul.f32 %v3771, %v3789
        %v3840 = vmul.f32 %v3772, %v3789
        %v3841 = vmul.f32 %v3773, %v3789
        %v3842 = vmul.f32 %v3774, %v3789
        %v3843 = vmul.f32 %v3775, %v3789
        %v3844 = vmul.f32 %v3776, %v3789
        %v3845 = vmul.f32 %v3777, %v3789
        %v3846 = vmul.f32 %v3778, %v3789
        %v3847 = vmul.f32 %v3779, %v3789
        %v3848 = vmul.f32 %v3780, %v3789
        %v3849 = vmul.f32 %v3781, %v3789
        %v3850 = vmul.f32 %v3782, %v3789
        %v3851 = vmul.f32 %v3783, %v3789
        %v3852 = vmul.f32 %v3784, %v3789
        %v3853 = vmul.f32 %v3785, %v3789
        %v3854 = vlaneseq
        %v3855 = vshrl.u32 %v3854, 7
        %v3856 = vsub.s32 1, %v3855
        %v3857 = vrot.slane %v341, %v3856
        %v3858 = vadd.f32 %v3790, %v3857
        %v3859 = vadd.f32 %v3791, %v3857
        %v3860 = vadd.f32 %v3792, %v3857
        %v3861 = vadd.f32 %v3793, %v3857
        %v3862 = vadd.f32 %v3794, %v3857
        %v3863 = vadd.f32 %v3795, %v3857
        %v3864 = vadd.f32 %v3796, %v3857
        %v3865 = vadd.f32 %v3797, %v3857
        %v3866 = vadd.f32 %v3798, %v3857
        %v3867 = vadd.f32 %v3799, %v3857
        %v3868 = vadd.f32 %v3800, %v3857
        %v3869 = vadd.f32 %v3801, %v3857
        %v3870 = vadd.f32 %v3802, %v3857
        %v3871 = vadd.f32 %v3803, %v3857
        %v3872 = vadd.f32 %v3804, %v3857
        %v3873 = vadd.f32 %v3805, %v3857
        %v3874 = vadd.f32 %v3806, %v3857
        %v3875 = vadd.f32 %v3807, %v3857
        %v3876 = vadd.f32 %v3808, %v3857
        %v3877 = vadd.f32 %v3809, %v3857
        %v3878 = vadd.f32 %v3810, %v3857
        %v3879 = vadd.f32 %v3811, %v3857
        %v3880 = vadd.f32 %v3812, %v3857
        %v3881 = vadd.f32 %v3813, %v3857
        %v3882 = vadd.f32 %v3814, %v3857
        %v3883 = vadd.f32 %v3815, %v3857
        %v3884 = vadd.f32 %v3816, %v3857
        %v3885 = vadd.f32 %v3817, %v3857
        %v3886 = vadd.f32 %v3818, %v3857
        %v3887 = vadd.f32 %v3819, %v3857
        %v3888 = vadd.f32 %v3820, %v3857
        %v3889 = vadd.f32 %v3821, %v3857
        %v3890 = vadd.f32 %v3822, %v3857
        %v3891 = vadd.f32 %v3823, %v3857
        %v3892 = vadd.f32 %v3824, %v3857
        %v3893 = vadd.f32 %v3825, %v3857
        %v3894 = vadd.f32 %v3826, %v3857
        %v3895 = vadd.f32 %v3827, %v3857
        %v3896 = vadd.f32 %v3828, %v3857
        %v3897 = vadd.f32 %v3829, %v3857
        %v3898 = vadd.f32 %v3830, %v3857
        %v3899 = vadd.f32 %v3831, %v3857
        %v3900 = vadd.f32 %v3832, %v3857
        %v3901 = vadd.f32 %v3833, %v3857
        %v3902 = vadd.f32 %v3834, %v3857
        %v3903 = vadd.f32 %v3835, %v3857
        %v3904 = vadd.f32 %v3836, %v3857
        %v3905 = vadd.f32 %v3837, %v3857
        %v3906 = vadd.f32 %v3838, %v3857
        %v3907 = vadd.f32 %v3839, %v3857
        %v3908 = vadd.f32 %v3840, %v3857
        %v3909 = vadd.f32 %v3841, %v3857
        %v3910 = vadd.f32 %v3842, %v3857
        %v3911 = vadd.f32 %v3843, %v3857
        %v3912 = vadd.f32 %v3844, %v3857
        %v3913 = vadd.f32 %v3845, %v3857
        %v3914 = vadd.f32 %v3846, %v3857
        %v3915 = vadd.f32 %v3847, %v3857
        %v3916 = vadd.f32 %v3848, %v3857
        %v3917 = vadd.f32 %v3849, %v3857
        %v3918 = vadd.f32 %v3850, %v3857
        %v3919 = vadd.f32 %v3851, %v3857
        %v3920 = vadd.f32 %v3852, %v3857
        %v3921 = vadd.f32 %v3853, %v3857
        %v3922 = vmax.f32 %v3858, 0.0
        %v3923 = vmax.f32 %v3859, 0.0
        %v3924 = vmax.f32 %v3860, 0.0
        %v3925 = vmax.f32 %v3861, 0.0
        %v3926 = vmax.f32 %v3862, 0.0
        %v3927 = vmax.f32 %v3863, 0.0
        %v3928 = vmax.f32 %v3864, 0.0
        %v3929 = vmax.f32 %v3865, 0.0
        %v3930 = vmax.f32 %v3866, 0.0
        %v3931 = vmax.f32 %v3867, 0.0
        %v3932 = vmax.f32 %v3868, 0.0
        %v3933 = vmax.f32 %v3869, 0.0
        %v3934 = vmax.f32 %v3870, 0.0
        %v3935 = vmax.f32 %v3871, 0.0
        %v3936 = vmax.f32 %v3872, 0.0
        %v3937 = vmax.f32 %v3873, 0.0
        %v3938 = vmax.f32 %v3874, 0.0
        %v3939 = vmax.f32 %v3875, 0.0
        %v3940 = vmax.f32 %v3876, 0.0
        %v3941 = vmax.f32 %v3877, 0.0
        %v3942 = vmax.f32 %v3878, 0.0
        %v3943 = vmax.f32 %v3879, 0.0
        %v3944 = vmax.f32 %v3880, 0.0
        %v3945 = vmax.f32 %v3881, 0.0
        %v3946 = vmax.f32 %v3882, 0.0
        %v3947 = vmax.f32 %v3883, 0.0
        %v3948 = vmax.f32 %v3884, 0.0
        %v3949 = vmax.f32 %v3885, 0.0
        %v3950 = vmax.f32 %v3886, 0.0
        %v3951 = vmax.f32 %v3887, 0.0
        %v3952 = vmax.f32 %v3888, 0.0
        %v3953 = vmax.f32 %v3889, 0.0
        %v3954 = vmax.f32 %v3890, 0.0
        %v3955 = vmax.f32 %v3891, 0.0
        %v3956 = vmax.f32 %v3892, 0.0
        %v3957 = vmax.f32 %v3893, 0.0
        %v3958 = vmax.f32 %v3894, 0.0
        %v3959 = vmax.f32 %v3895, 0.0
        %v3960 = vmax.f32 %v3896, 0.0
        %v3961 = vmax.f32 %v3897, 0.0
        %v3962 = vmax.f32 %v3898, 0.0
        %v3963 = vmax.f32 %v3899, 0.0
        %v3964 = vmax.f32 %v3900, 0.0
        %v3965 = vmax.f32 %v3901, 0.0
        %v3966 = vmax.f32 %v3902, 0.0
        %v3967 = vmax.f32 %v3903, 0.0
        %v3968 = vmax.f32 %v3904, 0.0
        %v3969 = vmax.f32 %v3905, 0.0
        %v3970 = vmax.f32 %v3906, 0.0
        %v3971 = vmax.f32 %v3907, 0.0
        %v3972 = vmax.f32 %v3908, 0.0
        %v3973 = vmax.f32 %v3909, 0.0
        %v3974 = vmax.f32 %v3910, 0.0
        %v3975 = vmax.f32 %v3911, 0.0
        %v3976 = vmax.f32 %v3912, 0.0
        %v3977 = vmax.f32 %v3913, 0.0
        %v3978 = vmax.f32 %v3914, 0.0
        %v3979 = vmax.f32 %v3915, 0.0
        %v3980 = vmax.f32 %v3916, 0.0
        %v3981 = vmax.f32 %v3917, 0.0
        %v3982 = vmax.f32 %v3918, 0.0
        %v3983 = vmax.f32 %v3919, 0.0
        %v3984 = vmax.f32 %v3920, 0.0
        %v3985 = vmax.f32 %v3921, 0.0
        %v3986 = vpack.c.bf16 %v3923, %v3922
        %v3987 = vpack.c.bf16 %v3925, %v3924
        %v3988 = vpack.c.bf16 %v3927, %v3926
        %v3989 = vpack.c.bf16 %v3929, %v3928
        %v3990 = vpack.c.bf16 %v3931, %v3930
        %v3991 = vpack.c.bf16 %v3933, %v3932
        %v3992 = vpack.c.bf16 %v3935, %v3934
        %v3993 = vpack.c.bf16 %v3937, %v3936
        %v3994 = vpack.c.bf16 %v3939, %v3938
        %v3995 = vpack.c.bf16 %v3941, %v3940
        %v3996 = vpack.c.bf16 %v3943, %v3942
        %v3997 = vpack.c.bf16 %v3945, %v3944
        %v3998 = vpack.c.bf16 %v3947, %v3946
        %v3999 = vpack.c.bf16 %v3949, %v3948
        %v4000 = vpack.c.bf16 %v3951, %v3950
        %v4001 = vpack.c.bf16 %v3953, %v3952
        %v4002 = vpack.c.bf16 %v3955, %v3954
        %v4003 = vpack.c.bf16 %v3957, %v3956
        %v4004 = vpack.c.bf16 %v3959, %v3958
        %v4005 = vpack.c.bf16 %v3961, %v3960
        %v4006 = vpack.c.bf16 %v3963, %v3962
        %v4007 = vpack.c.bf16 %v3965, %v3964
        %v4008 = vpack.c.bf16 %v3967, %v3966
        %v4009 = vpack.c.bf16 %v3969, %v3968
        %v4010 = vpack.c.bf16 %v3971, %v3970
        %v4011 = vpack.c.bf16 %v3973, %v3972
        %v4012 = vpack.c.bf16 %v3975, %v3974
        %v4013 = vpack.c.bf16 %v3977, %v3976
        %v4014 = vpack.c.bf16 %v3979, %v3978
        %v4015 = vpack.c.bf16 %v3981, %v3980
        %v4016 = vpack.c.bf16 %v3983, %v3982
        %v4017 = vpack.c.bf16 %v3985, %v3984
        %4050 = vrot.lane.b32.xlu0 %v3986, 12
        %v4051 = vpop.permute.xlu0 %4050
        %4052 = vrot.lane.b32.xlu0 %v3987, 12
        %v4053 = vpop.permute.xlu0 %4052
        %4054 = vrot.lane.b32.xlu0 %v3988, 12
        %v4055 = vpop.permute.xlu0 %4054
        %4056 = vrot.lane.b32.xlu0 %v3989, 12
        %v4057 = vpop.permute.xlu0 %4056
        %4058 = vrot.lane.b32.xlu0 %v3990, 12
        %v4059 = vpop.permute.xlu0 %4058
        %4060 = vrot.lane.b32.xlu0 %v3991, 12
        %v4061 = vpop.permute.xlu0 %4060
        %4062 = vrot.lane.b32.xlu0 %v3992, 12
        %v4063 = vpop.permute.xlu0 %4062
        %4064 = vrot.lane.b32.xlu0 %v3993, 12
        %v4065 = vpop.permute.xlu0 %4064
        %4066 = vrot.lane.b32.xlu0 %v3994, 12
        %v4067 = vpop.permute.xlu0 %4066
        %4068 = vrot.lane.b32.xlu0 %v3995, 12
        %v4069 = vpop.permute.xlu0 %4068
        %4070 = vrot.lane.b32.xlu0 %v3996, 12
        %v4071 = vpop.permute.xlu0 %4070
        %4072 = vrot.lane.b32.xlu0 %v3997, 12
        %v4073 = vpop.permute.xlu0 %4072
        %4074 = vrot.lane.b32.xlu0 %v3998, 12
        %v4075 = vpop.permute.xlu0 %4074
        %4076 = vrot.lane.b32.xlu0 %v3999, 12
        %v4077 = vpop.permute.xlu0 %4076
        %4078 = vrot.lane.b32.xlu0 %v4000, 12
        %v4079 = vpop.permute.xlu0 %4078
        %4080 = vrot.lane.b32.xlu0 %v4001, 12
        %v4081 = vpop.permute.xlu0 %4080
        %4082 = vrot.lane.b32.xlu0 %v4002, 12
        %v4083 = vpop.permute.xlu0 %4082
        %4084 = vrot.lane.b32.xlu0 %v4003, 12
        %v4085 = vpop.permute.xlu0 %4084
        %4086 = vrot.lane.b32.xlu0 %v4004, 12
        %v4087 = vpop.permute.xlu0 %4086
        %4088 = vrot.lane.b32.xlu0 %v4005, 12
        %v4089 = vpop.permute.xlu0 %4088
        %4090 = vrot.lane.b32.xlu0 %v4006, 12
        %v4091 = vpop.permute.xlu0 %4090
        %4092 = vrot.lane.b32.xlu0 %v4007, 12
        %v4093 = vpop.permute.xlu0 %4092
        %4094 = vrot.lane.b32.xlu0 %v4008, 12
        %v4095 = vpop.permute.xlu0 %4094
        %4096 = vrot.lane.b32.xlu0 %v4009, 12
        %v4097 = vpop.permute.xlu0 %4096
        %4098 = vrot.lane.b32.xlu0 %v4010, 12
        %v4099 = vpop.permute.xlu0 %4098
        %4100 = vrot.lane.b32.xlu0 %v4011, 12
        %v4101 = vpop.permute.xlu0 %4100
        %4102 = vrot.lane.b32.xlu0 %v4012, 12
        %v4103 = vpop.permute.xlu0 %4102
        %4104 = vrot.lane.b32.xlu0 %v4013, 12
        %v4105 = vpop.permute.xlu0 %4104
        %4106 = vrot.lane.b32.xlu0 %v4014, 12
        %v4107 = vpop.permute.xlu0 %4106
        %4108 = vrot.lane.b32.xlu0 %v4015, 12
        %v4109 = vpop.permute.xlu0 %4108
        %4110 = vrot.lane.b32.xlu0 %v4016, 12
        %v4111 = vpop.permute.xlu0 %4110
        %4112 = vrot.lane.b32.xlu0 %v4017, 12
        %v4113 = vpop.permute.xlu0 %4112
        %vm4146 = vcmask 130144
        %4147 = vst.msk [vmem:[#allocation2] sm:$0xff] %vm4146, %v4051
        %4148 = vst.msk [vmem:[#allocation2 + $0x8] sm:$0xff] %vm4146, %v4053
        %4149 = vst.msk [vmem:[#allocation2 + $0x10] sm:$0xff] %vm4146, %v4055
        %4150 = vst.msk [vmem:[#allocation2 + $0x18] sm:$0xff] %vm4146, %v4057
        %4151 = vst.msk [vmem:[#allocation2 + $0x20] sm:$0xff] %vm4146, %v4059
        %4152 = vst.msk [vmem:[#allocation2 + $0x28] sm:$0xff] %vm4146, %v4061
        %4153 = vst.msk [vmem:[#allocation2 + $0x30] sm:$0xff] %vm4146, %v4063
        %4154 = vst.msk [vmem:[#allocation2 + $0x38] sm:$0xff] %vm4146, %v4065
        %4155 = vst.msk [vmem:[#allocation2 + $0x40] sm:$0xff] %vm4146, %v4067
        %4156 = vst.msk [vmem:[#allocation2 + $0x48] sm:$0xff] %vm4146, %v4069
        %4157 = vst.msk [vmem:[#allocation2 + $0x50] sm:$0xff] %vm4146, %v4071
        %4158 = vst.msk [vmem:[#allocation2 + $0x58] sm:$0xff] %vm4146, %v4073
        %4159 = vst.msk [vmem:[#allocation2 + $0x60] sm:$0xff] %vm4146, %v4075
        %4160 = vst.msk [vmem:[#allocation2 + $0x68] sm:$0xff] %vm4146, %v4077
        %4161 = vst.msk [vmem:[#allocation2 + $0x70] sm:$0xff] %vm4146, %v4079
        %4162 = vst.msk [vmem:[#allocation2 + $0x78] sm:$0xff] %vm4146, %v4081
        %4163 = vst.msk [vmem:[#allocation2 + $0x80] sm:$0xff] %vm4146, %v4083
        %4164 = vst.msk [vmem:[#allocation2 + $0x88] sm:$0xff] %vm4146, %v4085
        %4165 = vst.msk [vmem:[#allocation2 + $0x90] sm:$0xff] %vm4146, %v4087
        %4166 = vst.msk [vmem:[#allocation2 + $0x98] sm:$0xff] %vm4146, %v4089
        %4167 = vst.msk [vmem:[#allocation2 + $0xa0] sm:$0xff] %vm4146, %v4091
        %4168 = vst.msk [vmem:[#allocation2 + $0xa8] sm:$0xff] %vm4146, %v4093
        %4169 = vst.msk [vmem:[#allocation2 + $0xb0] sm:$0xff] %vm4146, %v4095
        %4170 = vst.msk [vmem:[#allocation2 + $0xb8] sm:$0xff] %vm4146, %v4097
        %4171 = vst.msk [vmem:[#allocation2 + $0xc0] sm:$0xff] %vm4146, %v4099
        %4172 = vst.msk [vmem:[#allocation2 + $0xc8] sm:$0xff] %vm4146, %v4101
        %4173 = vst.msk [vmem:[#allocation2 + $0xd0] sm:$0xff] %vm4146, %v4103
        %4174 = vst.msk [vmem:[#allocation2 + $0xd8] sm:$0xff] %vm4146, %v4105
        %4175 = vst.msk [vmem:[#allocation2 + $0xe0] sm:$0xff] %vm4146, %v4107
        %4176 = vst.msk [vmem:[#allocation2 + $0xe8] sm:$0xff] %vm4146, %v4109
        %4177 = vst.msk [vmem:[#allocation2 + $0xf0] sm:$0xff] %vm4146, %v4111
        %4178 = vst.msk [vmem:[#allocation2 + $0xf8] sm:$0xff] %vm4146, %v4113
        %v4179 = vld [vmem:[#allocation2] sm:$0xff]
        %v4180 = vld [vmem:[#allocation2 + $0x8] sm:$0xff]
        %v4181 = vld [vmem:[#allocation2 + $0x10] sm:$0xff]
        %v4182 = vld [vmem:[#allocation2 + $0x18] sm:$0xff]
        %v4183 = vld [vmem:[#allocation2 + $0x20] sm:$0xff]
        %v4184 = vld [vmem:[#allocation2 + $0x28] sm:$0xff]
        %v4185 = vld [vmem:[#allocation2 + $0x30] sm:$0xff]
        %v4186 = vld [vmem:[#allocation2 + $0x38] sm:$0xff]
        %v4187 = vld [vmem:[#allocation2 + $0x40] sm:$0xff]
        %v4188 = vld [vmem:[#allocation2 + $0x48] sm:$0xff]
        %v4189 = vld [vmem:[#allocation2 + $0x50] sm:$0xff]
        %v4190 = vld [vmem:[#allocation2 + $0x58] sm:$0xff]
        %v4191 = vld [vmem:[#allocation2 + $0x60] sm:$0xff]
        %v4192 = vld [vmem:[#allocation2 + $0x68] sm:$0xff]
        %v4193 = vld [vmem:[#allocation2 + $0x70] sm:$0xff]
        %v4194 = vld [vmem:[#allocation2 + $0x78] sm:$0xff]
        %v4195 = vld [vmem:[#allocation2 + $0x80] sm:$0xff]
        %v4196 = vld [vmem:[#allocation2 + $0x88] sm:$0xff]
        %v4197 = vld [vmem:[#allocation2 + $0x90] sm:$0xff]
        %v4198 = vld [vmem:[#allocation2 + $0x98] sm:$0xff]
        %v4199 = vld [vmem:[#allocation2 + $0xa0] sm:$0xff]
        %v4200 = vld [vmem:[#allocation2 + $0xa8] sm:$0xff]
        %v4201 = vld [vmem:[#allocation2 + $0xb0] sm:$0xff]
        %v4202 = vld [vmem:[#allocation2 + $0xb8] sm:$0xff]
        %v4203 = vld [vmem:[#allocation2 + $0xc0] sm:$0xff]
        %v4204 = vld [vmem:[#allocation2 + $0xc8] sm:$0xff]
        %v4205 = vld [vmem:[#allocation2 + $0xd0] sm:$0xff]
        %v4206 = vld [vmem:[#allocation2 + $0xd8] sm:$0xff]
        %v4207 = vld [vmem:[#allocation2 + $0xe0] sm:$0xff]
        %v4208 = vld [vmem:[#allocation2 + $0xe8] sm:$0xff]
        %v4209 = vld [vmem:[#allocation2 + $0xf0] sm:$0xff]
        %v4210 = vld [vmem:[#allocation2 + $0xf8] sm:$0xff]
        %v4211 = vld [vmem:[%s4] sm:$0xf]
        %v4212 = vld [vmem:[%s4 + $0x4] sm:$0xf]
        %v4215 = vunpack.c.l.b16 %v4211
        %v4216 = vunpack.c.l.b16 %v4212
        %v4217 = vpack.c.b16 %v4216, %v4215
        %v4220 = vsel %vm383, %v4179, 0
        %v4223 = vsel %vm383, %v4180, 0
        %v4226 = vsel %vm383, %v4181, 0
        %v4229 = vsel %vm383, %v4182, 0
        %v4232 = vsel %vm383, %v4183, 0
        %v4235 = vsel %vm383, %v4184, 0
        %v4238 = vsel %vm383, %v4185, 0
        %v4241 = vsel %vm383, %v4186, 0
        %v4244 = vsel %vm383, %v4187, 0
        %v4247 = vsel %vm383, %v4188, 0
        %v4250 = vsel %vm383, %v4189, 0
        %v4253 = vsel %vm383, %v4190, 0
        %v4256 = vsel %vm383, %v4191, 0
        %v4259 = vsel %vm383, %v4192, 0
        %v4262 = vsel %vm383, %v4193, 0
        %v4265 = vsel %vm383, %v4194, 0
        %v4268 = vsel %vm383, %v4195, 0
        %v4271 = vsel %vm383, %v4196, 0
        %v4274 = vsel %vm383, %v4197, 0
        %v4277 = vsel %vm383, %v4198, 0
        %v4280 = vsel %vm383, %v4199, 0
        %v4283 = vsel %vm383, %v4200, 0
        %v4286 = vsel %vm383, %v4201, 0
        %v4289 = vsel %vm383, %v4202, 0
        %v4292 = vsel %vm383, %v4203, 0
        %v4295 = vsel %vm383, %v4204, 0
        %v4298 = vsel %vm383, %v4205, 0
        %v4301 = vsel %vm383, %v4206, 0
        %v4304 = vsel %vm383, %v4207, 0
        %v4307 = vsel %vm383, %v4208, 0
        %v4310 = vsel %vm383, %v4209, 0
        %v4313 = vsel %vm383, %v4210, 0
        %4315 = vmatprep.subr.bf16.mxu0 0
        %4316 = vmatpush1.bf16.msra.mxu0 %v4217
        %4317 = vmatprep.subr.bf16.mxu0 0
        %4318 = vmatpush1.bf16.msra.mxu0 0
        %4319 = vmatprep.subr.bf16.mxu0 0
        %4320 = vmatpush1.bf16.msra.mxu0 0
        %4321 = vmatprep.subr.bf16.mxu0 0
        %4322 = vmatpush1.bf16.msra.mxu0 0
        %4323 = vmatprep.subr.bf16.mxu0 0
        %4324 = vmatpush1.bf16.msra.mxu0 0
        %4325 = vmatprep.subr.bf16.mxu0 0
        %4326 = vmatpush1.bf16.msra.mxu0 0
        %4327 = vmatprep.subr.bf16.mxu0 0
        %4328 = vmatpush1.bf16.msra.mxu0 0
        %4329 = vmatprep.subr.bf16.mxu0 0
        %4330 = vmatpush1.bf16.msra.mxu0 0
        %4331 = vmatprep.subr.bf16.mxu0 0
        %4332 = vmatpush1.bf16.msra.mxu0 0
        %4333 = vmatprep.subr.bf16.mxu0 0
        %4334 = vmatpush1.bf16.msra.mxu0 0
        %4335 = vmatprep.subr.bf16.mxu0 0
        %4336 = vmatpush1.bf16.msra.mxu0 0
        %4337 = vmatprep.subr.bf16.mxu0 0
        %4338 = vmatpush1.bf16.msra.mxu0 0
        %4339 = vmatprep.subr.bf16.mxu0 0
        %4340 = vmatpush1.bf16.msra.mxu0 0
        %4341 = vmatprep.subr.bf16.mxu0 0
        %4342 = vmatpush1.bf16.msra.mxu0 0
        %4343 = vmatprep.subr.bf16.mxu0 0
        %4344 = vmatpush1.bf16.msra.mxu0 0
        %4345 = vmatprep.subr.bf16.mxu0 0
        %4346 = vmatpush1.bf16.msra.mxu0 0
        %4347 = vmatprep.mubr.bf16.mxu0 0
        %4348 = vmatmul.mubr.bf16.gmra.mrb[0].mxu0 %v4220
        %v4349 = vpop.f32.mrb[0].mxu0
        %v4350 = vadd.f32 0.0, %v4349
        %v4351 = vpop.f32.mrb[0].mxu0
        %v4352 = vpop.f32.mrb[0].mxu0
        %v4353 = vadd.f32 0.0, %v4352
        %v4354 = vpop.f32.mrb[0].mxu0
        %4355 = vmatprep.mubr.bf16.mxu0 0
        %4356 = vmatmul.mubr.bf16.gmra.mrb[0].mxu0 %v4223
        %v4357 = vpop.f32.mrb[0].mxu0
        %v4358 = vadd.f32 0.0, %v4357
        %v4359 = vpop.f32.mrb[0].mxu0
        %v4360 = vpop.f32.mrb[0].mxu0
        %v4361 = vadd.f32 0.0, %v4360
        %v4362 = vpop.f32.mrb[0].mxu0
        %4363 = vmatprep.mubr.bf16.mxu0 0
        %4364 = vmatmul.mubr.bf16.gmra.mrb[0].mxu0 %v4226
        %v4365 = vpop.f32.mrb[0].mxu0
        %v4366 = vadd.f32 0.0, %v4365
        %v4367 = vpop.f32.mrb[0].mxu0
        %v4368 = vpop.f32.mrb[0].mxu0
        %v4369 = vadd.f32 0.0, %v4368
        %v4370 = vpop.f32.mrb[0].mxu0
        %4371 = vmatprep.mubr.bf16.mxu0 0
        %4372 = vmatmul.mubr.bf16.gmra.mrb[0].mxu0 %v4229
        %v4373 = vpop.f32.mrb[0].mxu0
        %v4374 = vadd.f32 0.0, %v4373
        %v4375 = vpop.f32.mrb[0].mxu0
        %v4376 = vpop.f32.mrb[0].mxu0
        %v4377 = vadd.f32 0.0, %v4376
        %v4378 = vpop.f32.mrb[0].mxu0
        %4379 = vmatprep.mubr.bf16.mxu0 0
        %4380 = vmatmul.mubr.bf16.gmra.mrb[0].mxu0 %v4232
        %v4381 = vpop.f32.mrb[0].mxu0
        %v4382 = vadd.f32 0.0, %v4381
        %v4383 = vpop.f32.mrb[0].mxu0
        %v4384 = vpop.f32.mrb[0].mxu0
        %v4385 = vadd.f32 0.0, %v4384
        %v4386 = vpop.f32.mrb[0].mxu0
        %4387 = vmatprep.mubr.bf16.mxu0 0
        %4388 = vmatmul.mubr.bf16.gmra.mrb[0].mxu0 %v4235
        %v4389 = vpop.f32.mrb[0].mxu0
        %v4390 = vadd.f32 0.0, %v4389
        %v4391 = vpop.f32.mrb[0].mxu0
        %v4392 = vpop.f32.mrb[0].mxu0
        %v4393 = vadd.f32 0.0, %v4392
        %v4394 = vpop.f32.mrb[0].mxu0
        %4395 = vmatprep.mubr.bf16.mxu0 0
        %4396 = vmatmul.mubr.bf16.gmra.mrb[0].mxu0 %v4238
        %v4397 = vpop.f32.mrb[0].mxu0
        %v4398 = vadd.f32 0.0, %v4397
        %v4399 = vpop.f32.mrb[0].mxu0
        %v4400 = vpop.f32.mrb[0].mxu0
        %v4401 = vadd.f32 0.0, %v4400
        %v4402 = vpop.f32.mrb[0].mxu0
        %4403 = vmatprep.mubr.bf16.mxu0 0
        %4404 = vmatmul.mubr.bf16.gmra.mrb[0].mxu0 %v4241
        %v4405 = vpop.f32.mrb[0].mxu0
        %v4406 = vadd.f32 0.0, %v4405
        %v4407 = vpop.f32.mrb[0].mxu0
        %v4408 = vpop.f32.mrb[0].mxu0
        %v4409 = vadd.f32 0.0, %v4408
        %v4410 = vpop.f32.mrb[0].mxu0
        %4411 = vmatprep.mubr.bf16.mxu0 0
        %4412 = vmatmul.mubr.bf16.gmra.mrb[0].mxu0 %v4244
        %v4413 = vpop.f32.mrb[0].mxu0
        %v4414 = vadd.f32 0.0, %v4413
        %v4415 = vpop.f32.mrb[0].mxu0
        %v4416 = vpop.f32.mrb[0].mxu0
        %v4417 = vadd.f32 0.0, %v4416
        %v4418 = vpop.f32.mrb[0].mxu0
        %4419 = vmatprep.mubr.bf16.mxu0 0
        %4420 = vmatmul.mubr.bf16.gmra.mrb[0].mxu0 %v4247
        %v4421 = vpop.f32.mrb[0].mxu0
        %v4422 = vadd.f32 0.0, %v4421
        %v4423 = vpop.f32.mrb[0].mxu0
        %v4424 = vpop.f32.mrb[0].mxu0
        %v4425 = vadd.f32 0.0, %v4424
        %v4426 = vpop.f32.mrb[0].mxu0
        %4427 = vmatprep.mubr.bf16.mxu0 0
        %4428 = vmatmul.mubr.bf16.gmra.mrb[0].mxu0 %v4250
        %v4429 = vpop.f32.mrb[0].mxu0
        %v4430 = vadd.f32 0.0, %v4429
        %v4431 = vpop.f32.mrb[0].mxu0
        %v4432 = vpop.f32.mrb[0].mxu0
        %v4433 = vadd.f32 0.0, %v4432
        %v4434 = vpop.f32.mrb[0].mxu0
        %4435 = vmatprep.mubr.bf16.mxu0 0
        %4436 = vmatmul.mubr.bf16.gmra.mrb[0].mxu0 %v4253
        %v4437 = vpop.f32.mrb[0].mxu0
        %v4438 = vadd.f32 0.0, %v4437
        %v4439 = vpop.f32.mrb[0].mxu0
        %v4440 = vpop.f32.mrb[0].mxu0
        %v4441 = vadd.f32 0.0, %v4440
        %v4442 = vpop.f32.mrb[0].mxu0
        %4443 = vmatprep.mubr.bf16.mxu0 0
        %4444 = vmatmul.mubr.bf16.gmra.mrb[0].mxu0 %v4256
        %v4445 = vpop.f32.mrb[0].mxu0
        %v4446 = vadd.f32 0.0, %v4445
        %v4447 = vpop.f32.mrb[0].mxu0
        %v4448 = vpop.f32.mrb[0].mxu0
        %v4449 = vadd.f32 0.0, %v4448
        %v4450 = vpop.f32.mrb[0].mxu0
        %4451 = vmatprep.mubr.bf16.mxu0 0
        %4452 = vmatmul.mubr.bf16.gmra.mrb[0].mxu0 %v4259
        %v4453 = vpop.f32.mrb[0].mxu0
        %v4454 = vadd.f32 0.0, %v4453
        %v4455 = vpop.f32.mrb[0].mxu0
        %v4456 = vpop.f32.mrb[0].mxu0
        %v4457 = vadd.f32 0.0, %v4456
        %v4458 = vpop.f32.mrb[0].mxu0
        %4459 = vmatprep.mubr.bf16.mxu0 0
        %4460 = vmatmul.mubr.bf16.gmra.mrb[0].mxu0 %v4262
        %v4461 = vpop.f32.mrb[0].mxu0
        %v4462 = vadd.f32 0.0, %v4461
        %v4463 = vpop.f32.mrb[0].mxu0
        %v4464 = vpop.f32.mrb[0].mxu0
        %v4465 = vadd.f32 0.0, %v4464
        %v4466 = vpop.f32.mrb[0].mxu0
        %4467 = vmatprep.mubr.bf16.mxu0 0
        %4468 = vmatmul.mubr.bf16.gmra.mrb[0].mxu0 %v4265
        %v4469 = vpop.f32.mrb[0].mxu0
        %v4470 = vadd.f32 0.0, %v4469
        %v4471 = vpop.f32.mrb[0].mxu0
        %v4472 = vpop.f32.mrb[0].mxu0
        %v4473 = vadd.f32 0.0, %v4472
        %v4474 = vpop.f32.mrb[0].mxu0
        %4475 = vmatprep.mubr.bf16.mxu0 0
        %4476 = vmatmul.mubr.bf16.gmra.mrb[0].mxu0 %v4268
        %v4477 = vpop.f32.mrb[0].mxu0
        %v4478 = vadd.f32 0.0, %v4477
        %v4479 = vpop.f32.mrb[0].mxu0
        %v4480 = vpop.f32.mrb[0].mxu0
        %v4481 = vadd.f32 0.0, %v4480
        %v4482 = vpop.f32.mrb[0].mxu0
        %4483 = vmatprep.mubr.bf16.mxu0 0
        %4484 = vmatmul.mubr.bf16.gmra.mrb[0].mxu0 %v4271
        %v4485 = vpop.f32.mrb[0].mxu0
        %v4486 = vadd.f32 0.0, %v4485
        %v4487 = vpop.f32.mrb[0].mxu0
        %v4488 = vpop.f32.mrb[0].mxu0
        %v4489 = vadd.f32 0.0, %v4488
        %v4490 = vpop.f32.mrb[0].mxu0
        %4491 = vmatprep.mubr.bf16.mxu0 0
        %4492 = vmatmul.mubr.bf16.gmra.mrb[0].mxu0 %v4274
        %v4493 = vpop.f32.mrb[0].mxu0
        %v4494 = vadd.f32 0.0, %v4493
        %v4495 = vpop.f32.mrb[0].mxu0
        %v4496 = vpop.f32.mrb[0].mxu0
        %v4497 = vadd.f32 0.0, %v4496
        %v4498 = vpop.f32.mrb[0].mxu0
        %4499 = vmatprep.mubr.bf16.mxu0 0
        %4500 = vmatmul.mubr.bf16.gmra.mrb[0].mxu0 %v4277
        %v4501 = vpop.f32.mrb[0].mxu0
        %v4502 = vadd.f32 0.0, %v4501
        %v4503 = vpop.f32.mrb[0].mxu0
        %v4504 = vpop.f32.mrb[0].mxu0
        %v4505 = vadd.f32 0.0, %v4504
        %v4506 = vpop.f32.mrb[0].mxu0
        %4507 = vmatprep.mubr.bf16.mxu0 0
        %4508 = vmatmul.mubr.bf16.gmra.mrb[0].mxu0 %v4280
        %v4509 = vpop.f32.mrb[0].mxu0
        %v4510 = vadd.f32 0.0, %v4509
        %v4511 = vpop.f32.mrb[0].mxu0
        %v4512 = vpop.f32.mrb[0].mxu0
        %v4513 = vadd.f32 0.0, %v4512
        %v4514 = vpop.f32.mrb[0].mxu0
        %4515 = vmatprep.mubr.bf16.mxu0 0
        %4516 = vmatmul.mubr.bf16.gmra.mrb[0].mxu0 %v4283
        %v4517 = vpop.f32.mrb[0].mxu0
        %v4518 = vadd.f32 0.0, %v4517
        %v4519 = vpop.f32.mrb[0].mxu0
        %v4520 = vpop.f32.mrb[0].mxu0
        %v4521 = vadd.f32 0.0, %v4520
        %v4522 = vpop.f32.mrb[0].mxu0
        %4523 = vmatprep.mubr.bf16.mxu0 0
        %4524 = vmatmul.mubr.bf16.gmra.mrb[0].mxu0 %v4286
        %v4525 = vpop.f32.mrb[0].mxu0
        %v4526 = vadd.f32 0.0, %v4525
        %v4527 = vpop.f32.mrb[0].mxu0
        %v4528 = vpop.f32.mrb[0].mxu0
        %v4529 = vadd.f32 0.0, %v4528
        %v4530 = vpop.f32.mrb[0].mxu0
        %4531 = vmatprep.mubr.bf16.mxu0 0
        %4532 = vmatmul.mubr.bf16.gmra.mrb[0].mxu0 %v4289
        %v4533 = vpop.f32.mrb[0].mxu0
        %v4534 = vadd.f32 0.0, %v4533
        %v4535 = vpop.f32.mrb[0].mxu0
        %v4536 = vpop.f32.mrb[0].mxu0
        %v4537 = vadd.f32 0.0, %v4536
        %v4538 = vpop.f32.mrb[0].mxu0
        %4539 = vmatprep.mubr.bf16.mxu0 0
        %4540 = vmatmul.mubr.bf16.gmra.mrb[0].mxu0 %v4292
        %v4541 = vpop.f32.mrb[0].mxu0
        %v4542 = vadd.f32 0.0, %v4541
        %v4543 = vpop.f32.mrb[0].mxu0
        %v4544 = vpop.f32.mrb[0].mxu0
        %v4545 = vadd.f32 0.0, %v4544
        %v4546 = vpop.f32.mrb[0].mxu0
        %4547 = vmatprep.mubr.bf16.mxu0 0
        %4548 = vmatmul.mubr.bf16.gmra.mrb[0].mxu0 %v4295
        %v4549 = vpop.f32.mrb[0].mxu0
        %v4550 = vadd.f32 0.0, %v4549
        %v4551 = vpop.f32.mrb[0].mxu0
        %v4552 = vpop.f32.mrb[0].mxu0
        %v4553 = vadd.f32 0.0, %v4552
        %v4554 = vpop.f32.mrb[0].mxu0
        %4555 = vmatprep.mubr.bf16.mxu0 0
        %4556 = vmatmul.mubr.bf16.gmra.mrb[0].mxu0 %v4298
        %v4557 = vpop.f32.mrb[0].mxu0
        %v4558 = vadd.f32 0.0, %v4557
        %v4559 = vpop.f32.mrb[0].mxu0
        %v4560 = vpop.f32.mrb[0].mxu0
        %v4561 = vadd.f32 0.0, %v4560
        %v4562 = vpop.f32.mrb[0].mxu0
        %4563 = vmatprep.mubr.bf16.mxu0 0
        %4564 = vmatmul.mubr.bf16.gmra.mrb[0].mxu0 %v4301
        %v4565 = vpop.f32.mrb[0].mxu0
        %v4566 = vadd.f32 0.0, %v4565
        %v4567 = vpop.f32.mrb[0].mxu0
        %v4568 = vpop.f32.mrb[0].mxu0
        %v4569 = vadd.f32 0.0, %v4568
        %v4570 = vpop.f32.mrb[0].mxu0
        %4571 = vmatprep.mubr.bf16.mxu0 0
        %4572 = vmatmul.mubr.bf16.gmra.mrb[0].mxu0 %v4304
        %v4573 = vpop.f32.mrb[0].mxu0
        %v4574 = vadd.f32 0.0, %v4573
        %v4575 = vpop.f32.mrb[0].mxu0
        %v4576 = vpop.f32.mrb[0].mxu0
        %v4577 = vadd.f32 0.0, %v4576
        %v4578 = vpop.f32.mrb[0].mxu0
        %4579 = vmatprep.mubr.bf16.mxu0 0
        %4580 = vmatmul.mubr.bf16.gmra.mrb[0].mxu0 %v4307
        %v4581 = vpop.f32.mrb[0].mxu0
        %v4582 = vadd.f32 0.0, %v4581
        %v4583 = vpop.f32.mrb[0].mxu0
        %v4584 = vpop.f32.mrb[0].mxu0
        %v4585 = vadd.f32 0.0, %v4584
        %v4586 = vpop.f32.mrb[0].mxu0
        %4587 = vmatprep.mubr.bf16.mxu0 0
        %4588 = vmatmul.mubr.bf16.gmra.mrb[0].mxu0 %v4310
        %v4589 = vpop.f32.mrb[0].mxu0
        %v4590 = vadd.f32 0.0, %v4589
        %v4591 = vpop.f32.mrb[0].mxu0
        %v4592 = vpop.f32.mrb[0].mxu0
        %v4593 = vadd.f32 0.0, %v4592
        %v4594 = vpop.f32.mrb[0].mxu0
        %4595 = vmatprep.mubr.bf16.mxu0 0
        %4596 = vmatmul.mubr.bf16.gmra.mrb[0].mxu0 %v4313
        %v4597 = vpop.f32.mrb[0].mxu0
        %v4598 = vadd.f32 0.0, %v4597
        %v4599 = vpop.f32.mrb[0].mxu0
        %v4600 = vpop.f32.mrb[0].mxu0
        %v4601 = vadd.f32 0.0, %v4600
        %v4602 = vpop.f32.mrb[0].mxu0
        %4603 = vdwg.mxu0
        %v4604 = vlaneseq
        %v4605 = vshrl.u32 %v4604, 7
        %v4606 = vsub.s32 0, %v4605
        %v4607 = vrot.slane %v342, %v4606
        %v4608 = vmul.f32 %v4350, %v4607
        %v4609 = vmul.f32 %v4353, %v4607
        %v4610 = vmul.f32 %v4358, %v4607
        %v4611 = vmul.f32 %v4361, %v4607
        %v4612 = vmul.f32 %v4366, %v4607
        %v4613 = vmul.f32 %v4369, %v4607
        %v4614 = vmul.f32 %v4374, %v4607
        %v4615 = vmul.f32 %v4377, %v4607
        %v4616 = vmul.f32 %v4382, %v4607
        %v4617 = vmul.f32 %v4385, %v4607
        %v4618 = vmul.f32 %v4390, %v4607
        %v4619 = vmul.f32 %v4393, %v4607
        %v4620 = vmul.f32 %v4398, %v4607
        %v4621 = vmul.f32 %v4401, %v4607
        %v4622 = vmul.f32 %v4406, %v4607
        %v4623 = vmul.f32 %v4409, %v4607
        %v4624 = vmul.f32 %v4414, %v4607
        %v4625 = vmul.f32 %v4417, %v4607
        %v4626 = vmul.f32 %v4422, %v4607
        %v4627 = vmul.f32 %v4425, %v4607
        %v4628 = vmul.f32 %v4430, %v4607
        %v4629 = vmul.f32 %v4433, %v4607
        %v4630 = vmul.f32 %v4438, %v4607
        %v4631 = vmul.f32 %v4441, %v4607
        %v4632 = vmul.f32 %v4446, %v4607
        %v4633 = vmul.f32 %v4449, %v4607
        %v4634 = vmul.f32 %v4454, %v4607
        %v4635 = vmul.f32 %v4457, %v4607
        %v4636 = vmul.f32 %v4462, %v4607
        %v4637 = vmul.f32 %v4465, %v4607
        %v4638 = vmul.f32 %v4470, %v4607
        %v4639 = vmul.f32 %v4473, %v4607
        %v4640 = vmul.f32 %v4478, %v4607
        %v4641 = vmul.f32 %v4481, %v4607
        %v4642 = vmul.f32 %v4486, %v4607
        %v4643 = vmul.f32 %v4489, %v4607
        %v4644 = vmul.f32 %v4494, %v4607
        %v4645 = vmul.f32 %v4497, %v4607
        %v4646 = vmul.f32 %v4502, %v4607
        %v4647 = vmul.f32 %v4505, %v4607
        %v4648 = vmul.f32 %v4510, %v4607
        %v4649 = vmul.f32 %v4513, %v4607
        %v4650 = vmul.f32 %v4518, %v4607
        %v4651 = vmul.f32 %v4521, %v4607
        %v4652 = vmul.f32 %v4526, %v4607
        %v4653 = vmul.f32 %v4529, %v4607
        %v4654 = vmul.f32 %v4534, %v4607
        %v4655 = vmul.f32 %v4537, %v4607
        %v4656 = vmul.f32 %v4542, %v4607
        %v4657 = vmul.f32 %v4545, %v4607
        %v4658 = vmul.f32 %v4550, %v4607
        %v4659 = vmul.f32 %v4553, %v4607
        %v4660 = vmul.f32 %v4558, %v4607
        %v4661 = vmul.f32 %v4561, %v4607
        %v4662 = vmul.f32 %v4566, %v4607
        %v4663 = vmul.f32 %v4569, %v4607
        %v4664 = vmul.f32 %v4574, %v4607
        %v4665 = vmul.f32 %v4577, %v4607
        %v4666 = vmul.f32 %v4582, %v4607
        %v4667 = vmul.f32 %v4585, %v4607
        %v4668 = vmul.f32 %v4590, %v4607
        %v4669 = vmul.f32 %v4593, %v4607
        %v4670 = vmul.f32 %v4598, %v4607
        %v4671 = vmul.f32 %v4601, %v4607
        %v4672 = vlaneseq
        %v4673 = vshrl.u32 %v4672, 7
        %v4674 = vsub.s32 1, %v4673
        %v4675 = vrot.slane %v342, %v4674
        %v4676 = vadd.f32 %v4608, %v4675
        %v4677 = vadd.f32 %v4609, %v4675
        %v4678 = vadd.f32 %v4610, %v4675
        %v4679 = vadd.f32 %v4611, %v4675
        %v4680 = vadd.f32 %v4612, %v4675
        %v4681 = vadd.f32 %v4613, %v4675
        %v4682 = vadd.f32 %v4614, %v4675
        %v4683 = vadd.f32 %v4615, %v4675
        %v4684 = vadd.f32 %v4616, %v4675
        %v4685 = vadd.f32 %v4617, %v4675
        %v4686 = vadd.f32 %v4618, %v4675
        %v4687 = vadd.f32 %v4619, %v4675
        %v4688 = vadd.f32 %v4620, %v4675
        %v4689 = vadd.f32 %v4621, %v4675
        %v4690 = vadd.f32 %v4622, %v4675
        %v4691 = vadd.f32 %v4623, %v4675
        %v4692 = vadd.f32 %v4624, %v4675
        %v4693 = vadd.f32 %v4625, %v4675
        %v4694 = vadd.f32 %v4626, %v4675
        %v4695 = vadd.f32 %v4627, %v4675
        %v4696 = vadd.f32 %v4628, %v4675
        %v4697 = vadd.f32 %v4629, %v4675
        %v4698 = vadd.f32 %v4630, %v4675
        %v4699 = vadd.f32 %v4631, %v4675
        %v4700 = vadd.f32 %v4632, %v4675
        %v4701 = vadd.f32 %v4633, %v4675
        %v4702 = vadd.f32 %v4634, %v4675
        %v4703 = vadd.f32 %v4635, %v4675
        %v4704 = vadd.f32 %v4636, %v4675
        %v4705 = vadd.f32 %v4637, %v4675
        %v4706 = vadd.f32 %v4638, %v4675
        %v4707 = vadd.f32 %v4639, %v4675
        %v4708 = vadd.f32 %v4640, %v4675
        %v4709 = vadd.f32 %v4641, %v4675
        %v4710 = vadd.f32 %v4642, %v4675
        %v4711 = vadd.f32 %v4643, %v4675
        %v4712 = vadd.f32 %v4644, %v4675
        %v4713 = vadd.f32 %v4645, %v4675
        %v4714 = vadd.f32 %v4646, %v4675
        %v4715 = vadd.f32 %v4647, %v4675
        %v4716 = vadd.f32 %v4648, %v4675
        %v4717 = vadd.f32 %v4649, %v4675
        %v4718 = vadd.f32 %v4650, %v4675
        %v4719 = vadd.f32 %v4651, %v4675
        %v4720 = vadd.f32 %v4652, %v4675
        %v4721 = vadd.f32 %v4653, %v4675
        %v4722 = vadd.f32 %v4654, %v4675
        %v4723 = vadd.f32 %v4655, %v4675
        %v4724 = vadd.f32 %v4656, %v4675
        %v4725 = vadd.f32 %v4657, %v4675
        %v4726 = vadd.f32 %v4658, %v4675
        %v4727 = vadd.f32 %v4659, %v4675
        %v4728 = vadd.f32 %v4660, %v4675
        %v4729 = vadd.f32 %v4661, %v4675
        %v4730 = vadd.f32 %v4662, %v4675
        %v4731 = vadd.f32 %v4663, %v4675
        %v4732 = vadd.f32 %v4664, %v4675
        %v4733 = vadd.f32 %v4665, %v4675
        %v4734 = vadd.f32 %v4666, %v4675
        %v4735 = vadd.f32 %v4667, %v4675
        %v4736 = vadd.f32 %v4668, %v4675
        %v4737 = vadd.f32 %v4669, %v4675
        %v4738 = vadd.f32 %v4670, %v4675
        %v4739 = vadd.f32 %v4671, %v4675
        %v4740 = vadd.f32 %v4676, %v274
        %v4741 = vadd.f32 %v4677, %v275
        %v4742 = vadd.f32 %v4678, %v276
        %v4743 = vadd.f32 %v4679, %v277
        %v4744 = vadd.f32 %v4680, %v278
        %v4745 = vadd.f32 %v4681, %v279
        %v4746 = vadd.f32 %v4682, %v280
        %v4747 = vadd.f32 %v4683, %v281
        %v4748 = vadd.f32 %v4684, %v282
        %v4749 = vadd.f32 %v4685, %v283
        %v4750 = vadd.f32 %v4686, %v284
        %v4751 = vadd.f32 %v4687, %v285
        %v4752 = vadd.f32 %v4688, %v286
        %v4753 = vadd.f32 %v4689, %v287
        %v4754 = vadd.f32 %v4690, %v288
        %v4755 = vadd.f32 %v4691, %v289
        %v4756 = vadd.f32 %v4692, %v290
        %v4757 = vadd.f32 %v4693, %v291
        %v4758 = vadd.f32 %v4694, %v292
        %v4759 = vadd.f32 %v4695, %v293
        %v4760 = vadd.f32 %v4696, %v294
        %v4761 = vadd.f32 %v4697, %v295
        %v4762 = vadd.f32 %v4698, %v296
        %v4763 = vadd.f32 %v4699, %v297
        %v4764 = vadd.f32 %v4700, %v298
        %v4765 = vadd.f32 %v4701, %v299
        %v4766 = vadd.f32 %v4702, %v300
        %v4767 = vadd.f32 %v4703, %v301
        %v4768 = vadd.f32 %v4704, %v302
        %v4769 = vadd.f32 %v4705, %v303
        %v4770 = vadd.f32 %v4706, %v304
        %v4771 = vadd.f32 %v4707, %v305
        %v4772 = vadd.f32 %v4708, %v306
        %v4773 = vadd.f32 %v4709, %v307
        %v4774 = vadd.f32 %v4710, %v308
        %v4775 = vadd.f32 %v4711, %v309
        %v4776 = vadd.f32 %v4712, %v310
        %v4777 = vadd.f32 %v4713, %v311
        %v4778 = vadd.f32 %v4714, %v312
        %v4779 = vadd.f32 %v4715, %v313
        %v4780 = vadd.f32 %v4716, %v314
        %v4781 = vadd.f32 %v4717, %v315
        %v4782 = vadd.f32 %v4718, %v316
        %v4783 = vadd.f32 %v4719, %v317
        %v4784 = vadd.f32 %v4720, %v318
        %v4785 = vadd.f32 %v4721, %v319
        %v4786 = vadd.f32 %v4722, %v320
        %v4787 = vadd.f32 %v4723, %v321
        %v4788 = vadd.f32 %v4724, %v322
        %v4789 = vadd.f32 %v4725, %v323
        %v4790 = vadd.f32 %v4726, %v324
        %v4791 = vadd.f32 %v4727, %v325
        %v4792 = vadd.f32 %v4728, %v326
        %v4793 = vadd.f32 %v4729, %v327
        %v4794 = vadd.f32 %v4730, %v328
        %v4795 = vadd.f32 %v4731, %v329
        %v4796 = vadd.f32 %v4732, %v330
        %v4797 = vadd.f32 %v4733, %v331
        %v4798 = vadd.f32 %v4734, %v332
        %v4799 = vadd.f32 %v4735, %v333
        %v4800 = vadd.f32 %v4736, %v334
        %v4801 = vadd.f32 %v4737, %v335
        %v4802 = vadd.f32 %v4738, %v336
        %v4803 = vadd.f32 %v4739, %v337
        %v4804 = vmax.f32 %v4740, 0.0
        %v4805 = vmax.f32 %v4741, 0.0
        %v4806 = vmax.f32 %v4742, 0.0
        %v4807 = vmax.f32 %v4743, 0.0
        %v4808 = vmax.f32 %v4744, 0.0
        %v4809 = vmax.f32 %v4745, 0.0
        %v4810 = vmax.f32 %v4746, 0.0
        %v4811 = vmax.f32 %v4747, 0.0
        %v4812 = vmax.f32 %v4748, 0.0
        %v4813 = vmax.f32 %v4749, 0.0
        %v4814 = vmax.f32 %v4750, 0.0
        %v4815 = vmax.f32 %v4751, 0.0
        %v4816 = vmax.f32 %v4752, 0.0
        %v4817 = vmax.f32 %v4753, 0.0
        %v4818 = vmax.f32 %v4754, 0.0
        %v4819 = vmax.f32 %v4755, 0.0
        %v4820 = vmax.f32 %v4756, 0.0
        %v4821 = vmax.f32 %v4757, 0.0
        %v4822 = vmax.f32 %v4758, 0.0
        %v4823 = vmax.f32 %v4759, 0.0
        %v4824 = vmax.f32 %v4760, 0.0
        %v4825 = vmax.f32 %v4761, 0.0
        %v4826 = vmax.f32 %v4762, 0.0
        %v4827 = vmax.f32 %v4763, 0.0
        %v4828 = vmax.f32 %v4764, 0.0
        %v4829 = vmax.f32 %v4765, 0.0
        %v4830 = vmax.f32 %v4766, 0.0
        %v4831 = vmax.f32 %v4767, 0.0
        %v4832 = vmax.f32 %v4768, 0.0
        %v4833 = vmax.f32 %v4769, 0.0
        %v4834 = vmax.f32 %v4770, 0.0
        %v4835 = vmax.f32 %v4771, 0.0
        %v4836 = vmax.f32 %v4772, 0.0
        %v4837 = vmax.f32 %v4773, 0.0
        %v4838 = vmax.f32 %v4774, 0.0
        %v4839 = vmax.f32 %v4775, 0.0
        %v4840 = vmax.f32 %v4776, 0.0
        %v4841 = vmax.f32 %v4777, 0.0
        %v4842 = vmax.f32 %v4778, 0.0
        %v4843 = vmax.f32 %v4779, 0.0
        %v4844 = vmax.f32 %v4780, 0.0
        %v4845 = vmax.f32 %v4781, 0.0
        %v4846 = vmax.f32 %v4782, 0.0
        %v4847 = vmax.f32 %v4783, 0.0
        %v4848 = vmax.f32 %v4784, 0.0
        %v4849 = vmax.f32 %v4785, 0.0
        %v4850 = vmax.f32 %v4786, 0.0
        %v4851 = vmax.f32 %v4787, 0.0
        %v4852 = vmax.f32 %v4788, 0.0
        %v4853 = vmax.f32 %v4789, 0.0
        %v4854 = vmax.f32 %v4790, 0.0
        %v4855 = vmax.f32 %v4791, 0.0
        %v4856 = vmax.f32 %v4792, 0.0
        %v4857 = vmax.f32 %v4793, 0.0
        %v4858 = vmax.f32 %v4794, 0.0
        %v4859 = vmax.f32 %v4795, 0.0
        %v4860 = vmax.f32 %v4796, 0.0
        %v4861 = vmax.f32 %v4797, 0.0
        %v4862 = vmax.f32 %v4798, 0.0
        %v4863 = vmax.f32 %v4799, 0.0
        %v4864 = vmax.f32 %v4800, 0.0
        %v4865 = vmax.f32 %v4801, 0.0
        %v4866 = vmax.f32 %v4802, 0.0
        %v4867 = vmax.f32 %v4803, 0.0
        %4868 = vst.msk [vmem:[%s270] sm:$0xff] %vm383, %v4804
        %4869 = vst.msk [vmem:[%s270 + $0x8] sm:$0xff] %vm383, %v4805
        %4870 = vst.msk [vmem:[%s270 + $0x10] sm:$0xff] %vm383, %v4806
        %4871 = vst.msk [vmem:[%s270 + $0x18] sm:$0xff] %vm383, %v4807
        %4872 = vst.msk [vmem:[%s270 + $0x20] sm:$0xff] %vm383, %v4808
        %4873 = vst.msk [vmem:[%s270 + $0x28] sm:$0xff] %vm383, %v4809
        %4874 = vst.msk [vmem:[%s270 + $0x30] sm:$0xff] %vm383, %v4810
        %4875 = vst.msk [vmem:[%s270 + $0x38] sm:$0xff] %vm383, %v4811
        %4876 = vst.msk [vmem:[%s270 + $0x40] sm:$0xff] %vm383, %v4812
        %4877 = vst.msk [vmem:[%s270 + $0x48] sm:$0xff] %vm383, %v4813
        %4878 = vst.msk [vmem:[%s270 + $0x50] sm:$0xff] %vm383, %v4814
        %4879 = vst.msk [vmem:[%s270 + $0x58] sm:$0xff] %vm383, %v4815
        %4880 = vst.msk [vmem:[%s270 + $0x60] sm:$0xff] %vm383, %v4816
        %4881 = vst.msk [vmem:[%s270 + $0x68] sm:$0xff] %vm383, %v4817
        %4882 = vst.msk [vmem:[%s270 + $0x70] sm:$0xff] %vm383, %v4818
        %4883 = vst.msk [vmem:[%s270 + $0x78] sm:$0xff] %vm383, %v4819
        %4884 = vst.msk [vmem:[%s270 + $0x80] sm:$0xff] %vm383, %v4820
        %4885 = vst.msk [vmem:[%s270 + $0x88] sm:$0xff] %vm383, %v4821
        %4886 = vst.msk [vmem:[%s270 + $0x90] sm:$0xff] %vm383, %v4822
        %4887 = vst.msk [vmem:[%s270 + $0x98] sm:$0xff] %vm383, %v4823
        %4888 = vst.msk [vmem:[%s270 + $0xa0] sm:$0xff] %vm383, %v4824
        %4889 = vst.msk [vmem:[%s270 + $0xa8] sm:$0xff] %vm383, %v4825
        %4890 = vst.msk [vmem:[%s270 + $0xb0] sm:$0xff] %vm383, %v4826
        %4891 = vst.msk [vmem:[%s270 + $0xb8] sm:$0xff] %vm383, %v4827
        %4892 = vst.msk [vmem:[%s270 + $0xc0] sm:$0xff] %vm383, %v4828
        %4893 = vst.msk [vmem:[%s270 + $0xc8] sm:$0xff] %vm383, %v4829
        %4894 = vst.msk [vmem:[%s270 + $0xd0] sm:$0xff] %vm383, %v4830
        %4895 = vst.msk [vmem:[%s270 + $0xd8] sm:$0xff] %vm383, %v4831
        %4896 = vst.msk [vmem:[%s270 + $0xe0] sm:$0xff] %vm383, %v4832
        %4897 = vst.msk [vmem:[%s270 + $0xe8] sm:$0xff] %vm383, %v4833
        %4898 = vst.msk [vmem:[%s270 + $0xf0] sm:$0xff] %vm383, %v4834
        %4899 = vst.msk [vmem:[%s270 + $0xf8] sm:$0xff] %vm383, %v4835
        %4900 = vst.msk [vmem:[%s270 + $0x100] sm:$0xff] %vm383, %v4836
        %4901 = vst.msk [vmem:[%s270 + $0x108] sm:$0xff] %vm383, %v4837
        %4902 = vst.msk [vmem:[%s270 + $0x110] sm:$0xff] %vm383, %v4838
        %4903 = vst.msk [vmem:[%s270 + $0x118] sm:$0xff] %vm383, %v4839
        %4904 = vst.msk [vmem:[%s270 + $0x120] sm:$0xff] %vm383, %v4840
        %4905 = vst.msk [vmem:[%s270 + $0x128] sm:$0xff] %vm383, %v4841
        %4906 = vst.msk [vmem:[%s270 + $0x130] sm:$0xff] %vm383, %v4842
        %4907 = vst.msk [vmem:[%s270 + $0x138] sm:$0xff] %vm383, %v4843
        %4908 = vst.msk [vmem:[%s270 + $0x140] sm:$0xff] %vm383, %v4844
        %4909 = vst.msk [vmem:[%s270 + $0x148] sm:$0xff] %vm383, %v4845
        %4910 = vst.msk [vmem:[%s270 + $0x150] sm:$0xff] %vm383, %v4846
        %4911 = vst.msk [vmem:[%s270 + $0x158] sm:$0xff] %vm383, %v4847
        %4912 = vst.msk [vmem:[%s270 + $0x160] sm:$0xff] %vm383, %v4848
        %4913 = vst.msk [vmem:[%s270 + $0x168] sm:$0xff] %vm383, %v4849
        %4914 = vst.msk [vmem:[%s270 + $0x170] sm:$0xff] %vm383, %v4850
        %4915 = vst.msk [vmem:[%s270 + $0x178] sm:$0xff] %vm383, %v4851
        %4916 = vst.msk [vmem:[%s270 + $0x180] sm:$0xff] %vm383, %v4852
        %4917 = vst.msk [vmem:[%s270 + $0x188] sm:$0xff] %vm383, %v4853
        %4918 = vst.msk [vmem:[%s270 + $0x190] sm:$0xff] %vm383, %v4854
        %4919 = vst.msk [vmem:[%s270 + $0x198] sm:$0xff] %vm383, %v4855
        %4920 = vst.msk [vmem:[%s270 + $0x1a0] sm:$0xff] %vm383, %v4856
        %4921 = vst.msk [vmem:[%s270 + $0x1a8] sm:$0xff] %vm383, %v4857
        %4922 = vst.msk [vmem:[%s270 + $0x1b0] sm:$0xff] %vm383, %v4858
        %4923 = vst.msk [vmem:[%s270 + $0x1b8] sm:$0xff] %vm383, %v4859
        %4924 = vst.msk [vmem:[%s270 + $0x1c0] sm:$0xff] %vm383, %v4860
        %4925 = vst.msk [vmem:[%s270 + $0x1c8] sm:$0xff] %vm383, %v4861
        %4926 = vst.msk [vmem:[%s270 + $0x1d0] sm:$0xff] %vm383, %v4862
        %4927 = vst.msk [vmem:[%s270 + $0x1d8] sm:$0xff] %vm383, %v4863
        %4928 = vst.msk [vmem:[%s270 + $0x1e0] sm:$0xff] %vm383, %v4864
        %4929 = vst.msk [vmem:[%s270 + $0x1e8] sm:$0xff] %vm383, %v4865
        %4930 = vst.msk [vmem:[%s270 + $0x1f0] sm:$0xff] %vm383, %v4866
        %4931 = vst.msk [vmem:[%s270 + $0x1f8] sm:$0xff] %vm383, %v4867
        %s4932 = sand.u32 %s162, 1
        %s4933 = scalar_lea.sflag [#allocation5], %s4932
        %s4934 = sand.u32 %s162, 1
        %s4935 = smul.addr %s4934, 512
        %s4936 = scalar_lea.vmem [#allocation6], %s4935
        // Predicated region
        $region49: #{tpu_custom_call.1} parent=43 // pred_check
          %p4937 = pneg %p172
        $region50: #{tpu_custom_call.1} parent=43 // pred_check_branch
          %4939 = sbr.rel (%p4937) target = $region52
        $region51: #{tpu_custom_call.1} parent=43 // pred_region
          %s4940 = smul.u32 2, %s23
          %s4942 = ssub.s32 8192, 8192
          %4943 = vsyncadd %s4933, %s4942
          %s4944 = smul.addr %s4940, 32
          %s4945 = smul.addr %s4944, 128
          %s4946 = scalar_lea.hbm %s6, %s4945
          %s4947 = sshll.u32 %s4936, 4
          %s4948 = int_to_ptr.vmem [resolvable:$true] %s4947
          %4953 = dma.vmem_to_hbm [thread:$0]  %s4948, 8192, %s4946, %s4933, 128, 128, 8
        $region52: #{tpu_custom_call.1} parent=43 // pred_fallthru
          _
      $region44: #{tpu_custom_call.1} parent=5 // pred_fallthru
        _
      %p4954 = scmp.le.s32.totalorder 2, %s18
      // Predicated region
      $region53: #{tpu_custom_call.1} parent=5 // pred_check
        %p4955 = pneg %p4954
      $region54: #{tpu_custom_call.1} parent=5 // pred_check_branch
        %4957 = sbr.rel (%p4955) target = $region56
      $region55: #{tpu_custom_call.1} parent=5 // pred_region
        %s4958 = ssub.s32 %s18, 2
        // Predicated region
        $region57: #{tpu_custom_call.1} parent=55 // pred_check
          %p4959 = pneg %p178
        $region58: #{tpu_custom_call.1} parent=55 // pred_check_branch
          %4961 = sbr.rel (%p4959) target = $region60
        $region59: #{tpu_custom_call.1} parent=55 // pred_region
          %s4962 = sand.u32 %s163, 1
          %s4963 = scalar_lea.sflag [#allocation5], %s4962
          %s4964 = sand.u32 %s163, 1
          %s4965 = smul.addr %s4964, 512
          %s4966 = scalar_lea.vmem [#allocation6], %s4965
          %4967 = dma.done %s4963, 8192
        $region60: #{tpu_custom_call.1} parent=55 // pred_fallthru
          _
      $region56: #{tpu_custom_call.1} parent=5 // pred_fallthru
        _
    $region6: #{tpu_custom_call.1} parent=1 // loop_footer
      %s22 = sadd.s32 1, %s18
    $region7: #{tpu_custom_call.1} parent=1 // loop_footer_branch
      %17 = sbr.rel target = $region3
    $region8: #{tpu_custom_call.1} parent=1 // loop_exit
      _
    %4968 = vsyncpa [#allocation4], 1
    %s4969 = scalar_lea.sflag [#allocation4], 1
    %4970 = vsyncpa %s4969, 1
    %4971 = vsyncpa [#allocation5], 1
    %s4972 = scalar_lea.sflag [#allocation5], 1
    %4973 = vsyncpa %s4972, 1

</llo_original>
